<compile_context>
chip_gen: v6e
topology: v6e:2x2x1
jax: 0.10.0
libtpu: 0.0.40
codegen_flags: <defaults>
</compile_context>

<pallas_src>
import math

import jax
import jax.numpy as jnp
from jax.experimental import pallas as pl
from jax.experimental.pallas import tpu as pltpu

# ---------------- config (small synthetic ProtBERT) ----------------
BATCH = 2
SEQ = 8
HIDDEN = 32
NUM_HEADS = 4
HEAD_DIM = HIDDEN // NUM_HEADS
INTERMEDIATE = 64
VOCAB = 30
NUM_LABELS = 3
NUM_LAYERS = 2
LN_EPS = 1e-12

BS = BATCH * SEQ                 # batch folded into the sublane axis
NEG_INF = -1e9                   # cross-batch attention blocking


# ---------------- math helpers (used in-kernel and by the JAX reference) ----
def _layernorm(x, g, b):
    mu = jnp.mean(x, axis=-1, keepdims=True)
    var = jnp.mean((x - mu) ** 2, axis=-1, keepdims=True)
    return (x - mu) * jax.lax.rsqrt(var + LN_EPS) * g + b


def _gelu(x):
    # TODO(synk): HF ProtBERT uses erf-based GELU; tanh approximation kept for robust Mosaic lowering.
    c = math.sqrt(2.0 / math.pi)
    return 0.5 * x * (1.0 + jnp.tanh(c * (x + 0.044715 * x * x * x)))


# ---------------- single fused Pallas kernel: all layers + head -------------
def protbert_fused_kernel(x_emb_ref, bias_ref, pool_ref, wf_ref, bf_ref,
                          wqkv_ref, bqkv_ref, wo_ref, w1_ref, w2_ref,
                          b1_ref, ph_ref, probs_ref, pooled_ref):
    x = x_emb_ref[...]                         # [BS, H]  activation stays in vregs/VMEM
    bias = bias_ref[...]                       # [BS, BS] block-diag batch mask + padding bias

    # Fully unrolled layer loop (toy size; static ref[l] slices are free).
    for l in range(NUM_LAYERS):
        ph = ph_ref[l]                         # [8, H] lane-aligned small params
        bo, g1, be1 = ph[0:1], ph[1:2], ph[2:3]
        b2, g2, be2 = ph[3:4], ph[4:5], ph[5:6]

        # --- self-attention: single lane-dense QKV matmul [BS,H] @ [H,3H] ---
        qkv = jnp.dot(x, wqkv_ref[l],
                      preferred_element_type=jnp.float32) + bqkv_ref[l]   # [BS, 3H]
        # (1/sqrt(HEAD_DIM) already folded into the Q columns at pack time.)

        ctx_heads = []
        for h in range(NUM_HEADS):             # static lane slices of the fused result
            q_h = qkv[:, h * HEAD_DIM:(h + 1) * HEAD_DIM]
            k_h = qkv[:, HIDDEN + h * HEAD_DIM:HIDDEN + (h + 1) * HEAD_DIM]
            v_h = qkv[:, 2 * HIDDEN + h * HEAD_DIM:2 * HIDDEN + (h + 1) * HEAD_DIM]
            s = jnp.einsum('qd,kd->qk', q_h, k_h,
                           preferred_element_type=jnp.float32) + bias     # [BS, BS]
            s = s - jnp.max(s, axis=-1, keepdims=True)
            p = jnp.exp(s)
            p = p * pl.reciprocal(jnp.sum(p, axis=-1, keepdims=True), approx=True)
            ctx_heads.append(jnp.dot(p, v_h, preferred_element_type=jnp.float32))
        ctx = jnp.concatenate(ctx_heads, axis=-1)                         # [BS, H]

        # Output projection: one [BS,H] @ [H,H]; head reduction inside the contraction.
        attn = jnp.dot(ctx, wo_ref[l], preferred_element_type=jnp.float32) + bo
        h1 = _layernorm(x + attn, g1, be1)

        # --- feed-forward ---
        ff = jnp.dot(
            _gelu(jnp.dot(h1, w1_ref[l], preferred_element_type=jnp.float32) + b1_ref[l]),
            w2_ref[l], preferred_element_type=jnp.float32) + b2
        x = _layernorm(h1 + ff, g2, be2)

    # --- classification head (runs once) ---
    pooled = jnp.dot(pool_ref[...], x,
                     preferred_element_type=jnp.float32)                  # mean over seq -> [B, H]
    # nn.Dropout(p=0.2) is identity at inference time.
    logits = jnp.dot(pooled, wf_ref[...],
                     preferred_element_type=jnp.float32) + bf_ref[...]    # [B, num_labels]
    e = jnp.exp(logits - jnp.max(logits, axis=1, keepdims=True))
    probs_ref[...] = e / jnp.sum(e, axis=1, keepdims=True)                # exact softmax (cold path)
    pooled_ref[...] = pooled


# ---------------- plain-JAX glue ---------------------------------------------
def embed(p, input_ids):
    # Embedding lookup is a gather -> kept as tiny plain-JAX glue.
    we = p["word_emb"][input_ids]                      # [B, S, H]
    pe = p["pos_emb"][:SEQ][None]                      # [1, S, H]
    te = p["type_emb"][0][None, None]                  # [1, 1, H]
    x = we + pe + te
    mu = x.mean(-1, keepdims=True)
    var = ((x - mu) ** 2).mean(-1, keepdims=True)
    return (x - mu) / jnp.sqrt(var + LN_EPS) * p["emb_ln_g"] + p["emb_ln_b"]


def build_attention_bias(attention_mask):
    """[BS, BS] additive bias: padding mask within a batch, -1e9 across batches."""
    key_bias = ((1.0 - attention_mask.astype(jnp.float32)) * -10000.0).reshape(-1)   # [BS]
    seg = jnp.arange(BS, dtype=jnp.int32) // SEQ
    same = (seg[:, None] == seg[None, :]).astype(jnp.float32)                         # [BS, BS]
    return same * key_bias[None, :] + (1.0 - same) * NEG_INF


def build_pool_matrix():
    """[B, BS] averaging matrix so mean-pool becomes one small matmul."""
    seg = jnp.arange(BS, dtype=jnp.int32) // SEQ
    onehot = (seg[None, :] == jnp.arange(BATCH, dtype=jnp.int32)[:, None])
    return onehot.astype(jnp.float32) / float(SEQ)


_VMEM_SPEC = pl.BlockSpec(memory_space=pltpu.MemorySpace.VMEM)


@jax.jit
def custom_protbert_forward(packed, input_ids, attention_mask):
    """Returns (softmax_logits [B, num_labels], final_hidden_embedding [B, H])."""
    x_emb = embed(packed, input_ids).reshape(BS, HIDDEN)        # batch folded into sublanes
    attn_bias = build_attention_bias(attention_mask)
    pool_mat = build_pool_matrix()

    probs, pooled = pl.pallas_call(
        protbert_fused_kernel,
        out_shape=(jax.ShapeDtypeStruct((BATCH, NUM_LABELS), jnp.float32),
                   jax.ShapeDtypeStruct((BATCH, HIDDEN), jnp.float32)),
        # grid=() : single invocation, everything resident in VMEM (toy size).
        in_specs=[_VMEM_SPEC] * 12,
        out_specs=(_VMEM_SPEC, _VMEM_SPEC),
    )(x_emb, attn_bias, pool_mat,
      packed["final_w_t"], packed["final_b"],
      packed["wqkv"], packed["bqkv"], packed["wo"],
      packed["w1"], packed["w2"], packed["b1"], packed["smallp_h"])
    return probs, pooled


# ---------------- parameter init (PyTorch layout) + host-side packing --------
def init_params(key):
    keys = iter(jax.random.split(key, 128))

    def nrm(shape):
        return 0.02 * jax.random.normal(next(keys), shape, jnp.float32)

    params = {
        "word_emb": nrm((VOCAB, HIDDEN)),
        "pos_emb": nrm((SEQ, HIDDEN)),
        "type_emb": nrm((2, HIDDEN)),
        "emb_ln_g": jnp.ones((HIDDEN,), jnp.float32),
        "emb_ln_b": jnp.zeros((HIDDEN,), jnp.float32),
        "layers": [],
        # final_proj: nn.Linear(hidden_size, num_labels) -> weight [out, in]
        "final_w": nrm((NUM_LABELS, HIDDEN)),
        "final_b": jnp.zeros((1, NUM_LABELS), jnp.float32),
        # NOTE: self.dense (Linear(H, H)) is defined in __init__ but never used
        # in forward(), so it is intentionally not instantiated here.
    }
    for _ in range(NUM_LAYERS):
        params["layers"].append({
            "wq": nrm((HIDDEN, HIDDEN)), "bq": jnp.zeros((1, HIDDEN), jnp.float32),
            "wk": nrm((HIDDEN, HIDDEN)), "bk": jnp.zeros((1, HIDDEN), jnp.float32),
            "wv": nrm((HIDDEN, HIDDEN)), "bv": jnp.zeros((1, HIDDEN), jnp.float32),
            "wo": nrm((HIDDEN, HIDDEN)), "bo": jnp.zeros((1, HIDDEN), jnp.float32),
            "ln1_g": jnp.ones((1, HIDDEN), jnp.float32),
            "ln1_b": jnp.zeros((1, HIDDEN), jnp.float32),
            "w1": nrm((INTERMEDIATE, HIDDEN)), "b1": jnp.zeros((1, INTERMEDIATE), jnp.float32),
            "w2": nrm((HIDDEN, INTERMEDIATE)), "b2": jnp.zeros((1, HIDDEN), jnp.float32),
            "ln2_g": jnp.ones((1, HIDDEN), jnp.float32),
            "ln2_b": jnp.zeros((1, HIDDEN), jnp.float32),
        })
    return params


def pack_params(params):
    """Pre-transpose / fuse / stack weights once on the host (free at init)."""
    scale = 1.0 / math.sqrt(HEAD_DIM)
    wqkv, bqkv, wo, w1, w2, b1, ph = [], [], [], [], [], [], []
    for lw in params["layers"]:
        # y = x @ W.T : store [in, out]; fuse Q|K|V along the output (lane) axis.
        # 1/sqrt(HEAD_DIM) is folded into the Q weights and bias here.
        wqkv.append(jnp.concatenate(
            [lw["wq"].T * scale, lw["wk"].T, lw["wv"].T], axis=1))          # [H, 3H]
        bqkv.append(jnp.concatenate(
            [lw["bq"] * scale, lw["bk"], lw["bv"]], axis=1))                # [1, 3H]
        wo.append(lw["wo"].T)                                               # [H, H]
        w1.append(lw["w1"].T)                                               # [H, I]
        w2.append(lw["w2"].T)                                               # [I, H]
        b1.append(lw["b1"])                                                 # [1, I] full-lane row
        # H-wide small params: one sublane-padded [8, H] lane-aligned block.
        ph.append(jnp.concatenate(
            [lw["bo"], lw["ln1_g"], lw["ln1_b"],
             lw["b2"], lw["ln2_g"], lw["ln2_b"],
             jnp.zeros((2, HIDDEN), jnp.float32)], axis=0))                 # [8, H]

    return {
        "wqkv": jnp.stack(wqkv), "bqkv": jnp.stack(bqkv), "wo": jnp.stack(wo),
        "w1": jnp.stack(w1), "w2": jnp.stack(w2),
        "b1": jnp.stack(b1), "smallp_h": jnp.stack(ph),
        "final_w_t": params["final_w"].T, "final_b": params["final_b"],
        "word_emb": params["word_emb"], "pos_emb": params["pos_emb"],
        "type_emb": params["type_emb"],
        "emb_ln_g": params["emb_ln_g"], "emb_ln_b": params["emb_ln_b"],
    }


# ---------------- pure-JAX reference (for a sanity check) --------------------
def reference_forward(params, input_ids, attention_mask):
    x = embed(params, input_ids)                                        # [B, S, H]
    bias = ((1.0 - attention_mask.astype(jnp.float32)) * -10000.0)[:, None, :]
    for lw in params["layers"]:
        q = x @ lw["wq"].T + lw["bq"]
        k = x @ lw["wk"].T + lw["bk"]
        v = x @ lw["wv"].T + lw["bv"]
        outs = []
        for h in range(NUM_HEADS):
            sl = slice(h * HEAD_DIM, (h + 1) * HEAD_DIM)
            s = jnp.einsum('bqd,bkd->bqk', q[..., sl], k[..., sl]) / math.sqrt(HEAD_DIM) + bias
            p = jax.nn.softmax(s, axis=-1)
            outs.append(jnp.einsum('bqk,bkd->bqd', p, v[..., sl]))
        ctx = jnp.concatenate(outs, axis=-1)
        attn = ctx @ lw["wo"].T + lw["bo"]
        h1 = _layernorm(x + attn, lw["ln1_g"], lw["ln1_b"])
        ff = _gelu(h1 @ lw["w1"].T + lw["b1"]) @ lw["w2"].T + lw["b2"]
        x = _layernorm(h1 + ff, lw["ln2_g"], lw["ln2_b"])
    pooled = x.mean(axis=1)
    logits = pooled @ params["final_w"].T + params["final_b"]
    return jax.nn.softmax(logits, axis=1), pooled


if __name__ == "__main__":
    key = jax.random.PRNGKey(0)
    pkey, ikey = jax.random.split(key)
    params = init_params(pkey)
    packed = pack_params(params)

    input_ids = jax.random.randint(ikey, (BATCH, SEQ), 0, VOCAB, dtype=jnp.int32)
    attention_mask = jnp.ones((BATCH, SEQ), dtype=jnp.int32)

    softmax_logits, final_hidden_embedding = custom_protbert_forward(
        packed, input_ids, attention_mask)
    jax.block_until_ready((softmax_logits, final_hidden_embedding))

    assert softmax_logits.shape == (BATCH, NUM_LABELS)
    assert final_hidden_embedding.shape == (BATCH, HIDDEN)

    with jax.default_matmul_precision("highest"):
        probs_ref, pooled_ref = reference_forward(params, input_ids, attention_mask)
    assert jnp.allclose(softmax_logits, probs_ref, atol=1e-2, rtol=1e-2)
    assert jnp.allclose(final_hidden_embedding, pooled_ref, atol=1e-2, rtol=1e-2)

    print("KERNEL_OK")
</pallas_src>

<mosaic_0001>
module attributes {stable_mosaic.version = 11 : i64} {
  func.func @protbert_fused_kernel(%arg0: memref<16x32xf32, #tpu.memory_space<vmem>>, %arg1: memref<16x16xf32, #tpu.memory_space<vmem>>, %arg2: memref<2x16xf32, #tpu.memory_space<vmem>>, %arg3: memref<32x3xf32, #tpu.memory_space<vmem>>, %arg4: memref<1x3xf32, #tpu.memory_space<vmem>>, %arg5: memref<2x32x96xf32, #tpu.memory_space<vmem>>, %arg6: memref<2x1x96xf32, #tpu.memory_space<vmem>>, %arg7: memref<2x32x32xf32, #tpu.memory_space<vmem>>, %arg8: memref<2x32x64xf32, #tpu.memory_space<vmem>>, %arg9: memref<2x64x32xf32, #tpu.memory_space<vmem>>, %arg10: memref<2x1x64xf32, #tpu.memory_space<vmem>>, %arg11: memref<2x8x32xf32, #tpu.memory_space<vmem>>, %arg12: memref<2x3xf32, #tpu.memory_space<vmem>>, %arg13: memref<2x32xf32, #tpu.memory_space<vmem>>) attributes {dimension_semantics = [], scalar_prefetch = 0 : i64, scratch_operands = 0 : i64, tpu.core_type = #tpu.core_type<tc>} {
    %c0 = arith.constant 0 : index
    %c0_0 = arith.constant 0 : index
    %0 = vector.load %arg0[%c0, %c0_0] : memref<16x32xf32, #tpu.memory_space<vmem>>, vector<16x32xf32>
    %c0_1 = arith.constant 0 : index
    %c0_2 = arith.constant 0 : index
    %1 = vector.load %arg1[%c0_1, %c0_2] : memref<16x16xf32, #tpu.memory_space<vmem>>, vector<16x16xf32>
    %c0_3 = arith.constant 0 : index
    %c0_4 = arith.constant 0 : index
    %c0_5 = arith.constant 0 : index
    %2 = vector.load %arg11[%c0_3, %c0_4, %c0_5] : memref<2x8x32xf32, #tpu.memory_space<vmem>>, vector<1x8x32xf32>
    %3 = vector.shape_cast %2 : vector<1x8x32xf32> to vector<8x32xf32>
    %4 = vector.extract_strided_slice %3 {offsets = [0, 0], sizes = [1, 32], strides = [1, 1]} : vector<8x32xf32> to vector<1x32xf32>
    %5 = vector.extract_strided_slice %3 {offsets = [1, 0], sizes = [1, 32], strides = [1, 1]} : vector<8x32xf32> to vector<1x32xf32>
    %6 = vector.extract_strided_slice %3 {offsets = [2, 0], sizes = [1, 32], strides = [1, 1]} : vector<8x32xf32> to vector<1x32xf32>
    %7 = vector.extract_strided_slice %3 {offsets = [3, 0], sizes = [1, 32], strides = [1, 1]} : vector<8x32xf32> to vector<1x32xf32>
    %8 = vector.extract_strided_slice %3 {offsets = [4, 0], sizes = [1, 32], strides = [1, 1]} : vector<8x32xf32> to vector<1x32xf32>
    %9 = vector.extract_strided_slice %3 {offsets = [5, 0], sizes = [1, 32], strides = [1, 1]} : vector<8x32xf32> to vector<1x32xf32>
    %c0_6 = arith.constant 0 : index
    %c0_7 = arith.constant 0 : index
    %c0_8 = arith.constant 0 : index
    %10 = vector.load %arg5[%c0_6, %c0_7, %c0_8] : memref<2x32x96xf32, #tpu.memory_space<vmem>>, vector<1x32x96xf32>
    %11 = vector.shape_cast %10 : vector<1x32x96xf32> to vector<32x96xf32>
    %cst = arith.constant dense<0.000000e+00> : vector<16x96xf32>
    %12 = tpu.matmul %0, %11, %cst {dimension_numbers = #tpu.dot_dimension_numbers<[1], [0], [0], [1], [0, 0, 1, 1], [], []>} : vector<16x32xf32>, vector<32x96xf32>, vector<16x96xf32> -> vector<16x96xf32>
    %c0_9 = arith.constant 0 : index
    %c0_10 = arith.constant 0 : index
    %c0_11 = arith.constant 0 : index
    %13 = vector.load %arg6[%c0_9, %c0_10, %c0_11] : memref<2x1x96xf32, #tpu.memory_space<vmem>>, vector<1x1x96xf32>
    %14 = vector.shape_cast %13 : vector<1x1x96xf32> to vector<1x96xf32>
    %15 = vector.broadcast %14 : vector<1x96xf32> to vector<16x96xf32>
    %16 = arith.addf %12, %15 : vector<16x96xf32>
    %17 = vector.extract_strided_slice %16 {offsets = [0, 0], sizes = [16, 8], strides = [1, 1]} : vector<16x96xf32> to vector<16x8xf32>
    %18 = vector.extract_strided_slice %16 {offsets = [0, 32], sizes = [16, 8], strides = [1, 1]} : vector<16x96xf32> to vector<16x8xf32>
    %19 = vector.extract_strided_slice %16 {offsets = [0, 64], sizes = [16, 8], strides = [1, 1]} : vector<16x96xf32> to vector<16x8xf32>
    "tpu.trace_start"() <{level = 10 : i32, message = "qd,kd->qk"}> : () -> ()
    %cst_12 = arith.constant dense<0.000000e+00> : vector<16x16xf32>
    %20 = tpu.matmul %17, %18, %cst_12 {dimension_numbers = #tpu.dot_dimension_numbers<[1], [1], [0], [0], [0, 0, 1, 0], [], []>} : vector<16x8xf32>, vector<16x8xf32>, vector<16x16xf32> -> vector<16x16xf32>
    "tpu.trace_stop"() : () -> ()
    %21 = arith.addf %20, %1 : vector<16x16xf32>
    %cst_13 = arith.constant dense<0xFF800000> : vector<16xf32>
    %22 = vector.multi_reduction <maximumf>, %21, %cst_13 [1] : vector<16x16xf32> to vector<16xf32>
    %23 = vector.shape_cast %22 : vector<16xf32> to vector<16x1xf32>
    %24 = vector.broadcast %23 : vector<16x1xf32> to vector<16x16xf32>
    %25 = arith.subf %21, %24 : vector<16x16xf32>
    %26 = math.exp %25 : vector<16x16xf32>
    %cst_14 = arith.constant dense<0.000000e+00> : vector<16xf32>
    %27 = vector.multi_reduction <add>, %26, %cst_14 [1] : vector<16x16xf32> to vector<16xf32>
    %28 = vector.shape_cast %27 : vector<16xf32> to vector<16x1xf32>
    %29 = tpu.reciprocal %28 {approx = true} : vector<16x1xf32> -> vector<16x1xf32>
    %30 = vector.broadcast %29 : vector<16x1xf32> to vector<16x16xf32>
    %31 = arith.mulf %26, %30 : vector<16x16xf32>
    %cst_15 = arith.constant dense<0.000000e+00> : vector<16x8xf32>
    %32 = tpu.matmul %31, %19, %cst_15 {dimension_numbers = #tpu.dot_dimension_numbers<[1], [0], [0], [1], [0, 0, 1, 1], [], []>} : vector<16x16xf32>, vector<16x8xf32>, vector<16x8xf32> -> vector<16x8xf32>
    %33 = vector.extract_strided_slice %16 {offsets = [0, 8], sizes = [16, 8], strides = [1, 1]} : vector<16x96xf32> to vector<16x8xf32>
    %34 = vector.extract_strided_slice %16 {offsets = [0, 40], sizes = [16, 8], strides = [1, 1]} : vector<16x96xf32> to vector<16x8xf32>
    %35 = vector.extract_strided_slice %16 {offsets = [0, 72], sizes = [16, 8], strides = [1, 1]} : vector<16x96xf32> to vector<16x8xf32>
    "tpu.trace_start"() <{level = 10 : i32, message = "qd,kd->qk"}> : () -> ()
    %cst_16 = arith.constant dense<0.000000e+00> : vector<16x16xf32>
    %36 = tpu.matmul %33, %34, %cst_16 {dimension_numbers = #tpu.dot_dimension_numbers<[1], [1], [0], [0], [0, 0, 1, 0], [], []>} : vector<16x8xf32>, vector<16x8xf32>, vector<16x16xf32> -> vector<16x16xf32>
    "tpu.trace_stop"() : () -> ()
    %37 = arith.addf %36, %1 : vector<16x16xf32>
    %cst_17 = arith.constant dense<0xFF800000> : vector<16xf32>
    %38 = vector.multi_reduction <maximumf>, %37, %cst_17 [1] : vector<16x16xf32> to vector<16xf32>
    %39 = vector.shape_cast %38 : vector<16xf32> to vector<16x1xf32>
    %40 = vector.broadcast %39 : vector<16x1xf32> to vector<16x16xf32>
    %41 = arith.subf %37, %40 : vector<16x16xf32>
    %42 = math.exp %41 : vector<16x16xf32>
    %cst_18 = arith.constant dense<0.000000e+00> : vector<16xf32>
    %43 = vector.multi_reduction <add>, %42, %cst_18 [1] : vector<16x16xf32> to vector<16xf32>
    %44 = vector.shape_cast %43 : vector<16xf32> to vector<16x1xf32>
    %45 = tpu.reciprocal %44 {approx = true} : vector<16x1xf32> -> vector<16x1xf32>
    %46 = vector.broadcast %45 : vector<16x1xf32> to vector<16x16xf32>
    %47 = arith.mulf %42, %46 : vector<16x16xf32>
    %cst_19 = arith.constant dense<0.000000e+00> : vector<16x8xf32>
    %48 = tpu.matmul %47, %35, %cst_19 {dimension_numbers = #tpu.dot_dimension_numbers<[1], [0], [0], [1], [0, 0, 1, 1], [], []>} : vector<16x16xf32>, vector<16x8xf32>, vector<16x8xf32> -> vector<16x8xf32>
    %49 = vector.extract_strided_slice %16 {offsets = [0, 16], sizes = [16, 8], strides = [1, 1]} : vector<16x96xf32> to vector<16x8xf32>
    %50 = vector.extract_strided_slice %16 {offsets = [0, 48], sizes = [16, 8], strides = [1, 1]} : vector<16x96xf32> to vector<16x8xf32>
    %51 = vector.extract_strided_slice %16 {offsets = [0, 80], sizes = [16, 8], strides = [1, 1]} : vector<16x96xf32> to vector<16x8xf32>
    "tpu.trace_start"() <{level = 10 : i32, message = "qd,kd->qk"}> : () -> ()
    %cst_20 = arith.constant dense<0.000000e+00> : vector<16x16xf32>
    %52 = tpu.matmul %49, %50, %cst_20 {dimension_numbers = #tpu.dot_dimension_numbers<[1], [1], [0], [0], [0, 0, 1, 0], [], []>} : vector<16x8xf32>, vector<16x8xf32>, vector<16x16xf32> -> vector<16x16xf32>
    "tpu.trace_stop"() : () -> ()
    %53 = arith.addf %52, %1 : vector<16x16xf32>
    %cst_21 = arith.constant dense<0xFF800000> : vector<16xf32>
    %54 = vector.multi_reduction <maximumf>, %53, %cst_21 [1] : vector<16x16xf32> to vector<16xf32>
    %55 = vector.shape_cast %54 : vector<16xf32> to vector<16x1xf32>
    %56 = vector.broadcast %55 : vector<16x1xf32> to vector<16x16xf32>
    %57 = arith.subf %53, %56 : vector<16x16xf32>
    %58 = math.exp %57 : vector<16x16xf32>
    %cst_22 = arith.constant dense<0.000000e+00> : vector<16xf32>
    %59 = vector.multi_reduction <add>, %58, %cst_22 [1] : vector<16x16xf32> to vector<16xf32>
    %60 = vector.shape_cast %59 : vector<16xf32> to vector<16x1xf32>
    %61 = tpu.reciprocal %60 {approx = true} : vector<16x1xf32> -> vector<16x1xf32>
    %62 = vector.broadcast %61 : vector<16x1xf32> to vector<16x16xf32>
    %63 = arith.mulf %58, %62 : vector<16x16xf32>
    %cst_23 = arith.constant dense<0.000000e+00> : vector<16x8xf32>
    %64 = tpu.matmul %63, %51, %cst_23 {dimension_numbers = #tpu.dot_dimension_numbers<[1], [0], [0], [1], [0, 0, 1, 1], [], []>} : vector<16x16xf32>, vector<16x8xf32>, vector<16x8xf32> -> vector<16x8xf32>
    %65 = vector.extract_strided_slice %16 {offsets = [0, 24], sizes = [16, 8], strides = [1, 1]} : vector<16x96xf32> to vector<16x8xf32>
    %66 = vector.extract_strided_slice %16 {offsets = [0, 56], sizes = [16, 8], strides = [1, 1]} : vector<16x96xf32> to vector<16x8xf32>
    %67 = vector.extract_strided_slice %16 {offsets = [0, 88], sizes = [16, 8], strides = [1, 1]} : vector<16x96xf32> to vector<16x8xf32>
    "tpu.trace_start"() <{level = 10 : i32, message = "qd,kd->qk"}> : () -> ()
    %cst_24 = arith.constant dense<0.000000e+00> : vector<16x16xf32>
    %68 = tpu.matmul %65, %66, %cst_24 {dimension_numbers = #tpu.dot_dimension_numbers<[1], [1], [0], [0], [0, 0, 1, 0], [], []>} : vector<16x8xf32>, vector<16x8xf32>, vector<16x16xf32> -> vector<16x16xf32>
    "tpu.trace_stop"() : () -> ()
    %69 = arith.addf %68, %1 : vector<16x16xf32>
    %cst_25 = arith.constant dense<0xFF800000> : vector<16xf32>
    %70 = vector.multi_reduction <maximumf>, %69, %cst_25 [1] : vector<16x16xf32> to vector<16xf32>
    %71 = vector.shape_cast %70 : vector<16xf32> to vector<16x1xf32>
    %72 = vector.broadcast %71 : vector<16x1xf32> to vector<16x16xf32>
    %73 = arith.subf %69, %72 : vector<16x16xf32>
    %74 = math.exp %73 : vector<16x16xf32>
    %cst_26 = arith.constant dense<0.000000e+00> : vector<16xf32>
    %75 = vector.multi_reduction <add>, %74, %cst_26 [1] : vector<16x16xf32> to vector<16xf32>
    %76 = vector.shape_cast %75 : vector<16xf32> to vector<16x1xf32>
    %77 = tpu.reciprocal %76 {approx = true} : vector<16x1xf32> -> vector<16x1xf32>
    %78 = vector.broadcast %77 : vector<16x1xf32> to vector<16x16xf32>
    %79 = arith.mulf %74, %78 : vector<16x16xf32>
    %cst_27 = arith.constant dense<0.000000e+00> : vector<16x8xf32>
    %80 = tpu.matmul %79, %67, %cst_27 {dimension_numbers = #tpu.dot_dimension_numbers<[1], [0], [0], [1], [0, 0, 1, 1], [], []>} : vector<16x16xf32>, vector<16x8xf32>, vector<16x8xf32> -> vector<16x8xf32>
    %81 = tpu.concatenate %32, %48, %64, %80 in 1 : vector<16x8xf32>, vector<16x8xf32>, vector<16x8xf32>, vector<16x8xf32> -> vector<16x32xf32>
    %c0_28 = arith.constant 0 : index
    %c0_29 = arith.constant 0 : index
    %c0_30 = arith.constant 0 : index
    %82 = vector.load %arg7[%c0_28, %c0_29, %c0_30] : memref<2x32x32xf32, #tpu.memory_space<vmem>>, vector<1x32x32xf32>
    %83 = vector.shape_cast %82 : vector<1x32x32xf32> to vector<32x32xf32>
    %cst_31 = arith.constant dense<0.000000e+00> : vector<16x32xf32>
    %84 = tpu.matmul %81, %83, %cst_31 {dimension_numbers = #tpu.dot_dimension_numbers<[1], [0], [0], [1], [0, 0, 1, 1], [], []>} : vector<16x32xf32>, vector<32x32xf32>, vector<16x32xf32> -> vector<16x32xf32>
    %85 = vector.broadcast %4 : vector<1x32xf32> to vector<16x32xf32>
    %86 = arith.addf %84, %85 : vector<16x32xf32>
    %87 = arith.addf %0, %86 : vector<16x32xf32>
    %cst_32 = arith.constant dense<0.000000e+00> : vector<16xf32>
    %88 = vector.multi_reduction <add>, %87, %cst_32 [1] : vector<16x32xf32> to vector<16xf32>
    %89 = vector.shape_cast %88 : vector<16xf32> to vector<16x1xf32>
    %cst_33 = arith.constant 3.200000e+01 : f32
    %90 = vector.broadcast %cst_33 : f32 to vector<16x1xf32>
    %91 = arith.divf %89, %90 : vector<16x1xf32>
    %92 = vector.broadcast %91 : vector<16x1xf32> to vector<16x32xf32>
    %93 = arith.subf %87, %92 : vector<16x32xf32>
    %94 = arith.mulf %93, %93 : vector<16x32xf32>
    %cst_34 = arith.constant dense<0.000000e+00> : vector<16xf32>
    %95 = vector.multi_reduction <add>, %94, %cst_34 [1] : vector<16x32xf32> to vector<16xf32>
    %96 = vector.shape_cast %95 : vector<16xf32> to vector<16x1xf32>
    %cst_35 = arith.constant 3.200000e+01 : f32
    %97 = vector.broadcast %cst_35 : f32 to vector<16x1xf32>
    %98 = arith.divf %96, %97 : vector<16x1xf32>
    %99 = vector.broadcast %91 : vector<16x1xf32> to vector<16x32xf32>
    %100 = arith.subf %87, %99 : vector<16x32xf32>
    %cst_36 = arith.constant 9.99999996E-13 : f32
    %101 = vector.broadcast %cst_36 : f32 to vector<16x1xf32>
    %102 = arith.addf %98, %101 : vector<16x1xf32>
    %103 = math.rsqrt %102 : vector<16x1xf32>
    %104 = vector.broadcast %103 : vector<16x1xf32> to vector<16x32xf32>
    %105 = arith.mulf %100, %104 : vector<16x32xf32>
    %106 = vector.broadcast %5 : vector<1x32xf32> to vector<16x32xf32>
    %107 = arith.mulf %105, %106 : vector<16x32xf32>
    %108 = vector.broadcast %6 : vector<1x32xf32> to vector<16x32xf32>
    %109 = arith.addf %107, %108 : vector<16x32xf32>
    %c0_37 = arith.constant 0 : index
    %c0_38 = arith.constant 0 : index
    %c0_39 = arith.constant 0 : index
    %110 = vector.load %arg8[%c0_37, %c0_38, %c0_39] : memref<2x32x64xf32, #tpu.memory_space<vmem>>, vector<1x32x64xf32>
    %111 = vector.shape_cast %110 : vector<1x32x64xf32> to vector<32x64xf32>
    %cst_40 = arith.constant dense<0.000000e+00> : vector<16x64xf32>
    %112 = tpu.matmul %109, %111, %cst_40 {dimension_numbers = #tpu.dot_dimension_numbers<[1], [0], [0], [1], [0, 0, 1, 1], [], []>} : vector<16x32xf32>, vector<32x64xf32>, vector<16x64xf32> -> vector<16x64xf32>
    %c0_41 = arith.constant 0 : index
    %c0_42 = arith.constant 0 : index
    %c0_43 = arith.constant 0 : index
    %113 = vector.load %arg10[%c0_41, %c0_42, %c0_43] : memref<2x1x64xf32, #tpu.memory_space<vmem>>, vector<1x1x64xf32>
    %114 = vector.shape_cast %113 : vector<1x1x64xf32> to vector<1x64xf32>
    %115 = vector.broadcast %114 : vector<1x64xf32> to vector<16x64xf32>
    %116 = arith.addf %112, %115 : vector<16x64xf32>
    %cst_44 = arith.constant 5.000000e-01 : f32
    %117 = vector.broadcast %cst_44 : f32 to vector<16x64xf32>
    %118 = arith.mulf %117, %116 : vector<16x64xf32>
    %cst_45 = arith.constant 4.471500e-02 : f32
    %119 = vector.broadcast %cst_45 : f32 to vector<16x64xf32>
    %120 = arith.mulf %119, %116 : vector<16x64xf32>
    %121 = arith.mulf %120, %116 : vector<16x64xf32>
    %122 = arith.mulf %121, %116 : vector<16x64xf32>
    %123 = arith.addf %116, %122 : vector<16x64xf32>
    %cst_46 = arith.constant 0.797884583 : f32
    %124 = vector.broadcast %cst_46 : f32 to vector<16x64xf32>
    %125 = arith.mulf %124, %123 : vector<16x64xf32>
    %126 = math.tanh %125 : vector<16x64xf32>
    %cst_47 = arith.constant 1.000000e+00 : f32
    %127 = vector.broadcast %cst_47 : f32 to vector<16x64xf32>
    %128 = arith.addf %127, %126 : vector<16x64xf32>
    %129 = arith.mulf %118, %128 : vector<16x64xf32>
    %c0_48 = arith.constant 0 : index
    %c0_49 = arith.constant 0 : index
    %c0_50 = arith.constant 0 : index
    %130 = vector.load %arg9[%c0_48, %c0_49, %c0_50] : memref<2x64x32xf32, #tpu.memory_space<vmem>>, vector<1x64x32xf32>
    %131 = vector.shape_cast %130 : vector<1x64x32xf32> to vector<64x32xf32>
    %cst_51 = arith.constant dense<0.000000e+00> : vector<16x32xf32>
    %132 = tpu.matmul %129, %131, %cst_51 {dimension_numbers = #tpu.dot_dimension_numbers<[1], [0], [0], [1], [0, 0, 1, 1], [], []>} : vector<16x64xf32>, vector<64x32xf32>, vector<16x32xf32> -> vector<16x32xf32>
    %133 = vector.broadcast %7 : vector<1x32xf32> to vector<16x32xf32>
    %134 = arith.addf %132, %133 : vector<16x32xf32>
    %135 = arith.addf %109, %134 : vector<16x32xf32>
    %cst_52 = arith.constant dense<0.000000e+00> : vector<16xf32>
    %136 = vector.multi_reduction <add>, %135, %cst_52 [1] : vector<16x32xf32> to vector<16xf32>
    %137 = vector.shape_cast %136 : vector<16xf32> to vector<16x1xf32>
    %cst_53 = arith.constant 3.200000e+01 : f32
    %138 = vector.broadcast %cst_53 : f32 to vector<16x1xf32>
    %139 = arith.divf %137, %138 : vector<16x1xf32>
    %140 = vector.broadcast %139 : vector<16x1xf32> to vector<16x32xf32>
    %141 = arith.subf %135, %140 : vector<16x32xf32>
    %142 = arith.mulf %141, %141 : vector<16x32xf32>
    %cst_54 = arith.constant dense<0.000000e+00> : vector<16xf32>
    %143 = vector.multi_reduction <add>, %142, %cst_54 [1] : vector<16x32xf32> to vector<16xf32>
    %144 = vector.shape_cast %143 : vector<16xf32> to vector<16x1xf32>
    %cst_55 = arith.constant 3.200000e+01 : f32
    %145 = vector.broadcast %cst_55 : f32 to vector<16x1xf32>
    %146 = arith.divf %144, %145 : vector<16x1xf32>
    %147 = vector.broadcast %139 : vector<16x1xf32> to vector<16x32xf32>
    %148 = arith.subf %135, %147 : vector<16x32xf32>
    %cst_56 = arith.constant 9.99999996E-13 : f32
    %149 = vector.broadcast %cst_56 : f32 to vector<16x1xf32>
    %150 = arith.addf %146, %149 : vector<16x1xf32>
    %151 = math.rsqrt %150 : vector<16x1xf32>
    %152 = vector.broadcast %151 : vector<16x1xf32> to vector<16x32xf32>
    %153 = arith.mulf %148, %152 : vector<16x32xf32>
    %154 = vector.broadcast %8 : vector<1x32xf32> to vector<16x32xf32>
    %155 = arith.mulf %153, %154 : vector<16x32xf32>
    %156 = vector.broadcast %9 : vector<1x32xf32> to vector<16x32xf32>
    %157 = arith.addf %155, %156 : vector<16x32xf32>
    %c1 = arith.constant 1 : index
    %c0_57 = arith.constant 0 : index
    %c0_58 = arith.constant 0 : index
    %158 = vector.load %arg11[%c1, %c0_57, %c0_58] : memref<2x8x32xf32, #tpu.memory_space<vmem>>, vector<1x8x32xf32>
    %159 = vector.shape_cast %158 : vector<1x8x32xf32> to vector<8x32xf32>
    %160 = vector.extract_strided_slice %159 {offsets = [0, 0], sizes = [1, 32], strides = [1, 1]} : vector<8x32xf32> to vector<1x32xf32>
    %161 = vector.extract_strided_slice %159 {offsets = [1, 0], sizes = [1, 32], strides = [1, 1]} : vector<8x32xf32> to vector<1x32xf32>
    %162 = vector.extract_strided_slice %159 {offsets = [2, 0], sizes = [1, 32], strides = [1, 1]} : vector<8x32xf32> to vector<1x32xf32>
    %163 = vector.extract_strided_slice %159 {offsets = [3, 0], sizes = [1, 32], strides = [1, 1]} : vector<8x32xf32> to vector<1x32xf32>
    %164 = vector.extract_strided_slice %159 {offsets = [4, 0], sizes = [1, 32], strides = [1, 1]} : vector<8x32xf32> to vector<1x32xf32>
    %165 = vector.extract_strided_slice %159 {offsets = [5, 0], sizes = [1, 32], strides = [1, 1]} : vector<8x32xf32> to vector<1x32xf32>
    %c1_59 = arith.constant 1 : index
    %c0_60 = arith.constant 0 : index
    %c0_61 = arith.constant 0 : index
    %166 = vector.load %arg5[%c1_59, %c0_60, %c0_61] : memref<2x32x96xf32, #tpu.memory_space<vmem>>, vector<1x32x96xf32>
    %167 = vector.shape_cast %166 : vector<1x32x96xf32> to vector<32x96xf32>
    %cst_62 = arith.constant dense<0.000000e+00> : vector<16x96xf32>
    %168 = tpu.matmul %157, %167, %cst_62 {dimension_numbers = #tpu.dot_dimension_numbers<[1], [0], [0], [1], [0, 0, 1, 1], [], []>} : vector<16x32xf32>, vector<32x96xf32>, vector<16x96xf32> -> vector<16x96xf32>
    %c1_63 = arith.constant 1 : index
    %c0_64 = arith.constant 0 : index
    %c0_65 = arith.constant 0 : index
    %169 = vector.load %arg6[%c1_63, %c0_64, %c0_65] : memref<2x1x96xf32, #tpu.memory_space<vmem>>, vector<1x1x96xf32>
    %170 = vector.shape_cast %169 : vector<1x1x96xf32> to vector<1x96xf32>
    %171 = vector.broadcast %170 : vector<1x96xf32> to vector<16x96xf32>
    %172 = arith.addf %168, %171 : vector<16x96xf32>
    %173 = vector.extract_strided_slice %172 {offsets = [0, 0], sizes = [16, 8], strides = [1, 1]} : vector<16x96xf32> to vector<16x8xf32>
    %174 = vector.extract_strided_slice %172 {offsets = [0, 32], sizes = [16, 8], strides = [1, 1]} : vector<16x96xf32> to vector<16x8xf32>
    %175 = vector.extract_strided_slice %172 {offsets = [0, 64], sizes = [16, 8], strides = [1, 1]} : vector<16x96xf32> to vector<16x8xf32>
    "tpu.trace_start"() <{level = 10 : i32, message = "qd,kd->qk"}> : () -> ()
    %cst_66 = arith.constant dense<0.000000e+00> : vector<16x16xf32>
    %176 = tpu.matmul %173, %174, %cst_66 {dimension_numbers = #tpu.dot_dimension_numbers<[1], [1], [0], [0], [0, 0, 1, 0], [], []>} : vector<16x8xf32>, vector<16x8xf32>, vector<16x16xf32> -> vector<16x16xf32>
    "tpu.trace_stop"() : () -> ()
    %177 = arith.addf %176, %1 : vector<16x16xf32>
    %cst_67 = arith.constant dense<0xFF800000> : vector<16xf32>
    %178 = vector.multi_reduction <maximumf>, %177, %cst_67 [1] : vector<16x16xf32> to vector<16xf32>
    %179 = vector.shape_cast %178 : vector<16xf32> to vector<16x1xf32>
    %180 = vector.broadcast %179 : vector<16x1xf32> to vector<16x16xf32>
    %181 = arith.subf %177, %180 : vector<16x16xf32>
    %182 = math.exp %181 : vector<16x16xf32>
    %cst_68 = arith.constant dense<0.000000e+00> : vector<16xf32>
    %183 = vector.multi_reduction <add>, %182, %cst_68 [1] : vector<16x16xf32> to vector<16xf32>
    %184 = vector.shape_cast %183 : vector<16xf32> to vector<16x1xf32>
    %185 = tpu.reciprocal %184 {approx = true} : vector<16x1xf32> -> vector<16x1xf32>
    %186 = vector.broadcast %185 : vector<16x1xf32> to vector<16x16xf32>
    %187 = arith.mulf %182, %186 : vector<16x16xf32>
    %cst_69 = arith.constant dense<0.000000e+00> : vector<16x8xf32>
    %188 = tpu.matmul %187, %175, %cst_69 {dimension_numbers = #tpu.dot_dimension_numbers<[1], [0], [0], [1], [0, 0, 1, 1], [], []>} : vector<16x16xf32>, vector<16x8xf32>, vector<16x8xf32> -> vector<16x8xf32>
    %189 = vector.extract_strided_slice %172 {offsets = [0, 8], sizes = [16, 8], strides = [1, 1]} : vector<16x96xf32> to vector<16x8xf32>
    %190 = vector.extract_strided_slice %172 {offsets = [0, 40], sizes = [16, 8], strides = [1, 1]} : vector<16x96xf32> to vector<16x8xf32>
    %191 = vector.extract_strided_slice %172 {offsets = [0, 72], sizes = [16, 8], strides = [1, 1]} : vector<16x96xf32> to vector<16x8xf32>
    "tpu.trace_start"() <{level = 10 : i32, message = "qd,kd->qk"}> : () -> ()
    %cst_70 = arith.constant dense<0.000000e+00> : vector<16x16xf32>
    %192 = tpu.matmul %189, %190, %cst_70 {dimension_numbers = #tpu.dot_dimension_numbers<[1], [1], [0], [0], [0, 0, 1, 0], [], []>} : vector<16x8xf32>, vector<16x8xf32>, vector<16x16xf32> -> vector<16x16xf32>
    "tpu.trace_stop"() : () -> ()
    %193 = arith.addf %192, %1 : vector<16x16xf32>
    %cst_71 = arith.constant dense<0xFF800000> : vector<16xf32>
    %194 = vector.multi_reduction <maximumf>, %193, %cst_71 [1] : vector<16x16xf32> to vector<16xf32>
    %195 = vector.shape_cast %194 : vector<16xf32> to vector<16x1xf32>
    %196 = vector.broadcast %195 : vector<16x1xf32> to vector<16x16xf32>
    %197 = arith.subf %193, %196 : vector<16x16xf32>
    %198 = math.exp %197 : vector<16x16xf32>
    %cst_72 = arith.constant dense<0.000000e+00> : vector<16xf32>
    %199 = vector.multi_reduction <add>, %198, %cst_72 [1] : vector<16x16xf32> to vector<16xf32>
    %200 = vector.shape_cast %199 : vector<16xf32> to vector<16x1xf32>
    %201 = tpu.reciprocal %200 {approx = true} : vector<16x1xf32> -> vector<16x1xf32>
    %202 = vector.broadcast %201 : vector<16x1xf32> to vector<16x16xf32>
    %203 = arith.mulf %198, %202 : vector<16x16xf32>
    %cst_73 = arith.constant dense<0.000000e+00> : vector<16x8xf32>
    %204 = tpu.matmul %203, %191, %cst_73 {dimension_numbers = #tpu.dot_dimension_numbers<[1], [0], [0], [1], [0, 0, 1, 1], [], []>} : vector<16x16xf32>, vector<16x8xf32>, vector<16x8xf32> -> vector<16x8xf32>
    %205 = vector.extract_strided_slice %172 {offsets = [0, 16], sizes = [16, 8], strides = [1, 1]} : vector<16x96xf32> to vector<16x8xf32>
    %206 = vector.extract_strided_slice %172 {offsets = [0, 48], sizes = [16, 8], strides = [1, 1]} : vector<16x96xf32> to vector<16x8xf32>
    %207 = vector.extract_strided_slice %172 {offsets = [0, 80], sizes = [16, 8], strides = [1, 1]} : vector<16x96xf32> to vector<16x8xf32>
    "tpu.trace_start"() <{level = 10 : i32, message = "qd,kd->qk"}> : () -> ()
    %cst_74 = arith.constant dense<0.000000e+00> : vector<16x16xf32>
    %208 = tpu.matmul %205, %206, %cst_74 {dimension_numbers = #tpu.dot_dimension_numbers<[1], [1], [0], [0], [0, 0, 1, 0], [], []>} : vector<16x8xf32>, vector<16x8xf32>, vector<16x16xf32> -> vector<16x16xf32>
    "tpu.trace_stop"() : () -> ()
    %209 = arith.addf %208, %1 : vector<16x16xf32>
    %cst_75 = arith.constant dense<0xFF800000> : vector<16xf32>
    %210 = vector.multi_reduction <maximumf>, %209, %cst_75 [1] : vector<16x16xf32> to vector<16xf32>
    %211 = vector.shape_cast %210 : vector<16xf32> to vector<16x1xf32>
    %212 = vector.broadcast %211 : vector<16x1xf32> to vector<16x16xf32>
    %213 = arith.subf %209, %212 : vector<16x16xf32>
    %214 = math.exp %213 : vector<16x16xf32>
    %cst_76 = arith.constant dense<0.000000e+00> : vector<16xf32>
    %215 = vector.multi_reduction <add>, %214, %cst_76 [1] : vector<16x16xf32> to vector<16xf32>
    %216 = vector.shape_cast %215 : vector<16xf32> to vector<16x1xf32>
    %217 = tpu.reciprocal %216 {approx = true} : vector<16x1xf32> -> vector<16x1xf32>
    %218 = vector.broadcast %217 : vector<16x1xf32> to vector<16x16xf32>
    %219 = arith.mulf %214, %218 : vector<16x16xf32>
    %cst_77 = arith.constant dense<0.000000e+00> : vector<16x8xf32>
    %220 = tpu.matmul %219, %207, %cst_77 {dimension_numbers = #tpu.dot_dimension_numbers<[1], [0], [0], [1], [0, 0, 1, 1], [], []>} : vector<16x16xf32>, vector<16x8xf32>, vector<16x8xf32> -> vector<16x8xf32>
    %221 = vector.extract_strided_slice %172 {offsets = [0, 24], sizes = [16, 8], strides = [1, 1]} : vector<16x96xf32> to vector<16x8xf32>
    %222 = vector.extract_strided_slice %172 {offsets = [0, 56], sizes = [16, 8], strides = [1, 1]} : vector<16x96xf32> to vector<16x8xf32>
    %223 = vector.extract_strided_slice %172 {offsets = [0, 88], sizes = [16, 8], strides = [1, 1]} : vector<16x96xf32> to vector<16x8xf32>
    "tpu.trace_start"() <{level = 10 : i32, message = "qd,kd->qk"}> : () -> ()
    %cst_78 = arith.constant dense<0.000000e+00> : vector<16x16xf32>
    %224 = tpu.matmul %221, %222, %cst_78 {dimension_numbers = #tpu.dot_dimension_numbers<[1], [1], [0], [0], [0, 0, 1, 0], [], []>} : vector<16x8xf32>, vector<16x8xf32>, vector<16x16xf32> -> vector<16x16xf32>
    "tpu.trace_stop"() : () -> ()
    %225 = arith.addf %224, %1 : vector<16x16xf32>
    %cst_79 = arith.constant dense<0xFF800000> : vector<16xf32>
    %226 = vector.multi_reduction <maximumf>, %225, %cst_79 [1] : vector<16x16xf32> to vector<16xf32>
    %227 = vector.shape_cast %226 : vector<16xf32> to vector<16x1xf32>
    %228 = vector.broadcast %227 : vector<16x1xf32> to vector<16x16xf32>
    %229 = arith.subf %225, %228 : vector<16x16xf32>
    %230 = math.exp %229 : vector<16x16xf32>
    %cst_80 = arith.constant dense<0.000000e+00> : vector<16xf32>
    %231 = vector.multi_reduction <add>, %230, %cst_80 [1] : vector<16x16xf32> to vector<16xf32>
    %232 = vector.shape_cast %231 : vector<16xf32> to vector<16x1xf32>
    %233 = tpu.reciprocal %232 {approx = true} : vector<16x1xf32> -> vector<16x1xf32>
    %234 = vector.broadcast %233 : vector<16x1xf32> to vector<16x16xf32>
    %235 = arith.mulf %230, %234 : vector<16x16xf32>
    %cst_81 = arith.constant dense<0.000000e+00> : vector<16x8xf32>
    %236 = tpu.matmul %235, %223, %cst_81 {dimension_numbers = #tpu.dot_dimension_numbers<[1], [0], [0], [1], [0, 0, 1, 1], [], []>} : vector<16x16xf32>, vector<16x8xf32>, vector<16x8xf32> -> vector<16x8xf32>
    %237 = tpu.concatenate %188, %204, %220, %236 in 1 : vector<16x8xf32>, vector<16x8xf32>, vector<16x8xf32>, vector<16x8xf32> -> vector<16x32xf32>
    %c1_82 = arith.constant 1 : index
    %c0_83 = arith.constant 0 : index
    %c0_84 = arith.constant 0 : index
    %238 = vector.load %arg7[%c1_82, %c0_83, %c0_84] : memref<2x32x32xf32, #tpu.memory_space<vmem>>, vector<1x32x32xf32>
    %239 = vector.shape_cast %238 : vector<1x32x32xf32> to vector<32x32xf32>
    %cst_85 = arith.constant dense<0.000000e+00> : vector<16x32xf32>
    %240 = tpu.matmul %237, %239, %cst_85 {dimension_numbers = #tpu.dot_dimension_numbers<[1], [0], [0], [1], [0, 0, 1, 1], [], []>} : vector<16x32xf32>, vector<32x32xf32>, vector<16x32xf32> -> vector<16x32xf32>
    %241 = vector.broadcast %160 : vector<1x32xf32> to vector<16x32xf32>
    %242 = arith.addf %240, %241 : vector<16x32xf32>
    %243 = arith.addf %157, %242 : vector<16x32xf32>
    %cst_86 = arith.constant dense<0.000000e+00> : vector<16xf32>
    %244 = vector.multi_reduction <add>, %243, %cst_86 [1] : vector<16x32xf32> to vector<16xf32>
    %245 = vector.shape_cast %244 : vector<16xf32> to vector<16x1xf32>
    %cst_87 = arith.constant 3.200000e+01 : f32
    %246 = vector.broadcast %cst_87 : f32 to vector<16x1xf32>
    %247 = arith.divf %245, %246 : vector<16x1xf32>
    %248 = vector.broadcast %247 : vector<16x1xf32> to vector<16x32xf32>
    %249 = arith.subf %243, %248 : vector<16x32xf32>
    %250 = arith.mulf %249, %249 : vector<16x32xf32>
    %cst_88 = arith.constant dense<0.000000e+00> : vector<16xf32>
    %251 = vector.multi_reduction <add>, %250, %cst_88 [1] : vector<16x32xf32> to vector<16xf32>
    %252 = vector.shape_cast %251 : vector<16xf32> to vector<16x1xf32>
    %cst_89 = arith.constant 3.200000e+01 : f32
    %253 = vector.broadcast %cst_89 : f32 to vector<16x1xf32>
    %254 = arith.divf %252, %253 : vector<16x1xf32>
    %255 = vector.broadcast %247 : vector<16x1xf32> to vector<16x32xf32>
    %256 = arith.subf %243, %255 : vector<16x32xf32>
    %cst_90 = arith.constant 9.99999996E-13 : f32
    %257 = vector.broadcast %cst_90 : f32 to vector<16x1xf32>
    %258 = arith.addf %254, %257 : vector<16x1xf32>
    %259 = math.rsqrt %258 : vector<16x1xf32>
    %260 = vector.broadcast %259 : vector<16x1xf32> to vector<16x32xf32>
    %261 = arith.mulf %256, %260 : vector<16x32xf32>
    %262 = vector.broadcast %161 : vector<1x32xf32> to vector<16x32xf32>
    %263 = arith.mulf %261, %262 : vector<16x32xf32>
    %264 = vector.broadcast %162 : vector<1x32xf32> to vector<16x32xf32>
    %265 = arith.addf %263, %264 : vector<16x32xf32>
    %c1_91 = arith.constant 1 : index
    %c0_92 = arith.constant 0 : index
    %c0_93 = arith.constant 0 : index
    %266 = vector.load %arg8[%c1_91, %c0_92, %c0_93] : memref<2x32x64xf32, #tpu.memory_space<vmem>>, vector<1x32x64xf32>
    %267 = vector.shape_cast %266 : vector<1x32x64xf32> to vector<32x64xf32>
    %cst_94 = arith.constant dense<0.000000e+00> : vector<16x64xf32>
    %268 = tpu.matmul %265, %267, %cst_94 {dimension_numbers = #tpu.dot_dimension_numbers<[1], [0], [0], [1], [0, 0, 1, 1], [], []>} : vector<16x32xf32>, vector<32x64xf32>, vector<16x64xf32> -> vector<16x64xf32>
    %c1_95 = arith.constant 1 : index
    %c0_96 = arith.constant 0 : index
    %c0_97 = arith.constant 0 : index
    %269 = vector.load %arg10[%c1_95, %c0_96, %c0_97] : memref<2x1x64xf32, #tpu.memory_space<vmem>>, vector<1x1x64xf32>
    %270 = vector.shape_cast %269 : vector<1x1x64xf32> to vector<1x64xf32>
    %271 = vector.broadcast %270 : vector<1x64xf32> to vector<16x64xf32>
    %272 = arith.addf %268, %271 : vector<16x64xf32>
    %cst_98 = arith.constant 5.000000e-01 : f32
    %273 = vector.broadcast %cst_98 : f32 to vector<16x64xf32>
    %274 = arith.mulf %273, %272 : vector<16x64xf32>
    %cst_99 = arith.constant 4.471500e-02 : f32
    %275 = vector.broadcast %cst_99 : f32 to vector<16x64xf32>
    %276 = arith.mulf %275, %272 : vector<16x64xf32>
    %277 = arith.mulf %276, %272 : vector<16x64xf32>
    %278 = arith.mulf %277, %272 : vector<16x64xf32>
    %279 = arith.addf %272, %278 : vector<16x64xf32>
    %cst_100 = arith.constant 0.797884583 : f32
    %280 = vector.broadcast %cst_100 : f32 to vector<16x64xf32>
    %281 = arith.mulf %280, %279 : vector<16x64xf32>
    %282 = math.tanh %281 : vector<16x64xf32>
    %cst_101 = arith.constant 1.000000e+00 : f32
    %283 = vector.broadcast %cst_101 : f32 to vector<16x64xf32>
    %284 = arith.addf %283, %282 : vector<16x64xf32>
    %285 = arith.mulf %274, %284 : vector<16x64xf32>
    %c1_102 = arith.constant 1 : index
    %c0_103 = arith.constant 0 : index
    %c0_104 = arith.constant 0 : index
    %286 = vector.load %arg9[%c1_102, %c0_103, %c0_104] : memref<2x64x32xf32, #tpu.memory_space<vmem>>, vector<1x64x32xf32>
    %287 = vector.shape_cast %286 : vector<1x64x32xf32> to vector<64x32xf32>
    %cst_105 = arith.constant dense<0.000000e+00> : vector<16x32xf32>
    %288 = tpu.matmul %285, %287, %cst_105 {dimension_numbers = #tpu.dot_dimension_numbers<[1], [0], [0], [1], [0, 0, 1, 1], [], []>} : vector<16x64xf32>, vector<64x32xf32>, vector<16x32xf32> -> vector<16x32xf32>
    %289 = vector.broadcast %163 : vector<1x32xf32> to vector<16x32xf32>
    %290 = arith.addf %288, %289 : vector<16x32xf32>
    %291 = arith.addf %265, %290 : vector<16x32xf32>
    %cst_106 = arith.constant dense<0.000000e+00> : vector<16xf32>
    %292 = vector.multi_reduction <add>, %291, %cst_106 [1] : vector<16x32xf32> to vector<16xf32>
    %293 = vector.shape_cast %292 : vector<16xf32> to vector<16x1xf32>
    %cst_107 = arith.constant 3.200000e+01 : f32
    %294 = vector.broadcast %cst_107 : f32 to vector<16x1xf32>
    %295 = arith.divf %293, %294 : vector<16x1xf32>
    %296 = vector.broadcast %295 : vector<16x1xf32> to vector<16x32xf32>
    %297 = arith.subf %291, %296 : vector<16x32xf32>
    %298 = arith.mulf %297, %297 : vector<16x32xf32>
    %cst_108 = arith.constant dense<0.000000e+00> : vector<16xf32>
    %299 = vector.multi_reduction <add>, %298, %cst_108 [1] : vector<16x32xf32> to vector<16xf32>
    %300 = vector.shape_cast %299 : vector<16xf32> to vector<16x1xf32>
    %cst_109 = arith.constant 3.200000e+01 : f32
    %301 = vector.broadcast %cst_109 : f32 to vector<16x1xf32>
    %302 = arith.divf %300, %301 : vector<16x1xf32>
    %303 = vector.broadcast %295 : vector<16x1xf32> to vector<16x32xf32>
    %304 = arith.subf %291, %303 : vector<16x32xf32>
    %cst_110 = arith.constant 9.99999996E-13 : f32
    %305 = vector.broadcast %cst_110 : f32 to vector<16x1xf32>
    %306 = arith.addf %302, %305 : vector<16x1xf32>
    %307 = math.rsqrt %306 : vector<16x1xf32>
    %308 = vector.broadcast %307 : vector<16x1xf32> to vector<16x32xf32>
    %309 = arith.mulf %304, %308 : vector<16x32xf32>
    %310 = vector.broadcast %164 : vector<1x32xf32> to vector<16x32xf32>
    %311 = arith.mulf %309, %310 : vector<16x32xf32>
    %312 = vector.broadcast %165 : vector<1x32xf32> to vector<16x32xf32>
    %313 = arith.addf %311, %312 : vector<16x32xf32>
    %c0_111 = arith.constant 0 : index
    %c0_112 = arith.constant 0 : index
    %314 = vector.load %arg2[%c0_111, %c0_112] : memref<2x16xf32, #tpu.memory_space<vmem>>, vector<2x16xf32>
    %cst_113 = arith.constant dense<0.000000e+00> : vector<2x32xf32>
    %315 = tpu.matmul %314, %313, %cst_113 {dimension_numbers = #tpu.dot_dimension_numbers<[1], [0], [0], [1], [0, 0, 1, 1], [], []>} : vector<2x16xf32>, vector<16x32xf32>, vector<2x32xf32> -> vector<2x32xf32>
    %c0_114 = arith.constant 0 : index
    %c0_115 = arith.constant 0 : index
    %316 = vector.load %arg3[%c0_114, %c0_115] : memref<32x3xf32, #tpu.memory_space<vmem>>, vector<32x3xf32>
    %cst_116 = arith.constant dense<0.000000e+00> : vector<2x3xf32>
    %317 = tpu.matmul %315, %316, %cst_116 {dimension_numbers = #tpu.dot_dimension_numbers<[1], [0], [0], [1], [0, 0, 1, 1], [], []>} : vector<2x32xf32>, vector<32x3xf32>, vector<2x3xf32> -> vector<2x3xf32>
    %c0_117 = arith.constant 0 : index
    %c0_118 = arith.constant 0 : index
    %318 = vector.load %arg4[%c0_117, %c0_118] : memref<1x3xf32, #tpu.memory_space<vmem>>, vector<1x3xf32>
    %319 = vector.broadcast %318 : vector<1x3xf32> to vector<2x3xf32>
    %320 = arith.addf %317, %319 : vector<2x3xf32>
    %cst_119 = arith.constant dense<0xFF800000> : vector<2xf32>
    %321 = vector.multi_reduction <maximumf>, %320, %cst_119 [1] : vector<2x3xf32> to vector<2xf32>
    %322 = vector.shape_cast %321 : vector<2xf32> to vector<2x1xf32>
    %323 = vector.broadcast %322 : vector<2x1xf32> to vector<2x3xf32>
    %324 = arith.subf %320, %323 : vector<2x3xf32>
    %325 = math.exp %324 : vector<2x3xf32>
    %cst_120 = arith.constant dense<0.000000e+00> : vector<2xf32>
    %326 = vector.multi_reduction <add>, %325, %cst_120 [1] : vector<2x3xf32> to vector<2xf32>
    %327 = vector.shape_cast %326 : vector<2xf32> to vector<2x1xf32>
    %328 = vector.broadcast %327 : vector<2x1xf32> to vector<2x3xf32>
    %329 = arith.divf %325, %328 : vector<2x3xf32>
    %c0_121 = arith.constant 0 : index
    %c0_122 = arith.constant 0 : index
    %330 = vector.load %arg12[%c0_121, %c0_122] : memref<2x3xf32, #tpu.memory_space<vmem>>, vector<2x3xf32>
    tpu.vector_store %arg12[%c0_121, %c0_122], %329 {strides = array<i32>} : memref<2x3xf32, #tpu.memory_space<vmem>>, vector<2x3xf32>,
    %c0_123 = arith.constant 0 : index
    %c0_124 = arith.constant 0 : index
    %331 = vector.load %arg13[%c0_123, %c0_124] : memref<2x32xf32, #tpu.memory_space<vmem>>, vector<2x32xf32>
    tpu.vector_store %arg13[%c0_123, %c0_124], %315 {strides = array<i32>} : memref<2x32xf32, #tpu.memory_space<vmem>>, vector<2x32xf32>,
    return
  }
}

</mosaic_0001>

<llo_original>
// kernel: mul.18
$region0: #{mul.18}
  %s0 = inlined_call_operand.vmem [shape: f32[2,8], index: 0, kind: input, shape index: {}]
  %s1 = inlined_call_operand.vmem [shape: f32[16], index: 1, kind: output, shape index: {}]
  $region1: #{mul.18} parent=0
    #allocation0 [shape = 'u8[4096]{0}', space=vmem, size = 0x1000, scoped, tag = 'scoped mem for output reshape']
    #allocation1 [shape = 'u8[4096]{0}', space=vmem, size = 0x1000, scoped, tag = 'scoped mem for input reshape']
    %s3 = sshll.u32 1, 2
    %s4 = ssub.s32 %s3, 1
    %v5 = vld [vmem:[%s0] sm:%s4]
    %6 = vst [vmem:[#allocation1] sm:%s4] %v5
    %v7 = vld [vmem:[#allocation1] sm:$0x1]
    %vm8 = vcmask 64512
    %9 = vst.msk [vmem:[#allocation0] sm:$0x1] %vm8, %v7
    %s10 = scalar_lea.vmem [#allocation1], 1
    %v11 = vld [vmem:[%s10] sm:$0x1]
    %12 = vrot.lane.b32.xlu0 %v11, 8
    %v13 = vpop.permute.xlu0 %12
    %vm14 = vcmask 130112
    %15 = vst.msk [vmem:[#allocation0] sm:$0x1] %vm14, %v13
    %s17 = sshll.u32 1, 1
    %s18 = ssub.s32 %s17, 1
    %v20 = vld [vmem:[#allocation0] sm:%s18]
    %s21 = sshll.u32 1, 1
    %s22 = ssub.s32 %s21, 1
    %23 = vst [vmem:[%s1] sm:%s22] %v20

// kernel: custom_protbert_forward.1
$region0: #{custom_protbert_forward.1}
  #allocation0 [shape = 'u32[]', space=smem, size = 0x4, offset = 0x4, fixed_abs, tag = 'smem constant byte address 0x4 - core index']
  #allocation1 [shape = 'u32[144,128]{1,0:T(1,128)}', space=vmem, size = 0x12000, scoped, tag = 'internal scratch']
  %s0 = inlined_call_operand.vmem [shape: f32[16,32], index: 0, kind: input, shape index: {}]
  %s1 = inlined_call_operand.vmem [shape: f32[16,16], index: 1, kind: input, shape index: {}]
  %s2 = inlined_call_operand.vmem [shape: f32[2,16], index: 2, kind: input, shape index: {}]
  %s3 = inlined_call_operand.vmem [shape: f32[32,3], index: 3, kind: input, shape index: {}]
  %s4 = inlined_call_operand.vmem [shape: f32[1,3], index: 4, kind: input, shape index: {}]
  %s5 = inlined_call_operand.vmem [shape: f32[2,32,96], index: 5, kind: input, shape index: {}]
  %s6 = inlined_call_operand.vmem [shape: f32[2,1,96], index: 6, kind: input, shape index: {}]
  %s7 = inlined_call_operand.vmem [shape: f32[2,32,32], index: 7, kind: input, shape index: {}]
  %s8 = inlined_call_operand.vmem [shape: f32[2,32,64], index: 8, kind: input, shape index: {}]
  %s9 = inlined_call_operand.vmem [shape: f32[2,64,32], index: 9, kind: input, shape index: {}]
  %s10 = inlined_call_operand.vmem [shape: f32[2,1,64], index: 10, kind: input, shape index: {}]
  %s11 = inlined_call_operand.vmem [shape: f32[2,8,32], index: 11, kind: input, shape index: {}]
  %s12 = inlined_call_operand.hbm [shape: f32[2,3], index: 12, kind: output, shape index: {0}]
  %s13 = inlined_call_operand.hbm [shape: f32[2,32], index: 13, kind: output, shape index: {1}]
  %14 = xla_tuple %s12, %s13
  %s15 = sld [smem:[#allocation0]]
  $region66: #{custom_protbert_forward.1} parent=0
    _
  %s17 = ssub.s32 1, %s15
  %s18 = scalar_select 0, %s17, %s15
  $region1: #{custom_protbert_forward.1} parent=0
    #allocation2 [shape = 'u8[1024]{0}', space=vmem, size = 0x400, scoped, tag = 'output window, operand 0, single buffered']
    #allocation3 [shape = 's32[1]{0}', space=sflag, size = 0x4, scoped, tag = 'scoped memory for custom_protbert_forward.1']
    #allocation4 [shape = 'u8[1024]{0}', space=vmem, size = 0x400, scoped, tag = 'output window, operand 1, single buffered']
    #allocation5 [shape = 's32[1]{0}', space=sflag, size = 0x4, scoped, tag = 'scoped memory for custom_protbert_forward.1']
    %19 = vsyncpa [#allocation3], 0
    %20 = vsyncpa [#allocation5], 0
    // Predicated region
    $region2: #{custom_protbert_forward.1} parent=1 // pred_check
      _
    $region3: #{custom_protbert_forward.1} parent=1 // pred_check_branch
      %22 = sbr.rel (0) target = $region5
    $region4: #{custom_protbert_forward.1} parent=1 // pred_region
      _
    $region5: #{custom_protbert_forward.1} parent=1 // pred_fallthru
      _
    // Predicated region
    $region6: #{custom_protbert_forward.1} parent=1 // pred_check
      _
    $region7: #{custom_protbert_forward.1} parent=1 // pred_check_branch
      %24 = sbr.rel (0) target = $region9
    $region8: #{custom_protbert_forward.1} parent=1 // pred_region
      _
    $region9: #{custom_protbert_forward.1} parent=1 // pred_fallthru
      _
    // Predicated region
    $region10: #{custom_protbert_forward.1} parent=1 // pred_check
      _
    $region11: #{custom_protbert_forward.1} parent=1 // pred_check_branch
      %26 = sbr.rel (0) target = $region13
    $region12: #{custom_protbert_forward.1} parent=1 // pred_region
      _
    $region13: #{custom_protbert_forward.1} parent=1 // pred_fallthru
      _
    // Predicated region
    $region14: #{custom_protbert_forward.1} parent=1 // pred_check
      _
    $region15: #{custom_protbert_forward.1} parent=1 // pred_check_branch
      %28 = sbr.rel (0) target = $region17
    $region16: #{custom_protbert_forward.1} parent=1 // pred_region
      _
    $region17: #{custom_protbert_forward.1} parent=1 // pred_fallthru
      _
    // Predicated region
    $region18: #{custom_protbert_forward.1} parent=1 // pred_check
      _
    $region19: #{custom_protbert_forward.1} parent=1 // pred_check_branch
      %30 = sbr.rel (0) target = $region21
    $region20: #{custom_protbert_forward.1} parent=1 // pred_region
      _
    $region21: #{custom_protbert_forward.1} parent=1 // pred_fallthru
      _
    // Predicated region
    $region22: #{custom_protbert_forward.1} parent=1 // pred_check
      _
    $region23: #{custom_protbert_forward.1} parent=1 // pred_check_branch
      %32 = sbr.rel (0) target = $region25
    $region24: #{custom_protbert_forward.1} parent=1 // pred_region
      _
    $region25: #{custom_protbert_forward.1} parent=1 // pred_fallthru
      _
    // Predicated region
    $region26: #{custom_protbert_forward.1} parent=1 // pred_check
      _
    $region27: #{custom_protbert_forward.1} parent=1 // pred_check_branch
      %34 = sbr.rel (0) target = $region29
    $region28: #{custom_protbert_forward.1} parent=1 // pred_region
      _
    $region29: #{custom_protbert_forward.1} parent=1 // pred_fallthru
      _
    // Predicated region
    $region30: #{custom_protbert_forward.1} parent=1 // pred_check
      _
    $region31: #{custom_protbert_forward.1} parent=1 // pred_check_branch
      %36 = sbr.rel (0) target = $region33
    $region32: #{custom_protbert_forward.1} parent=1 // pred_region
      _
    $region33: #{custom_protbert_forward.1} parent=1 // pred_fallthru
      _
    // Predicated region
    $region34: #{custom_protbert_forward.1} parent=1 // pred_check
      _
    $region35: #{custom_protbert_forward.1} parent=1 // pred_check_branch
      %38 = sbr.rel (0) target = $region37
    $region36: #{custom_protbert_forward.1} parent=1 // pred_region
      _
    $region37: #{custom_protbert_forward.1} parent=1 // pred_fallthru
      _
    // Predicated region
    $region38: #{custom_protbert_forward.1} parent=1 // pred_check
      _
    $region39: #{custom_protbert_forward.1} parent=1 // pred_check_branch
      %40 = sbr.rel (0) target = $region41
    $region40: #{custom_protbert_forward.1} parent=1 // pred_region
      _
    $region41: #{custom_protbert_forward.1} parent=1 // pred_fallthru
      _
    // Predicated region
    $region42: #{custom_protbert_forward.1} parent=1 // pred_check
      _
    $region43: #{custom_protbert_forward.1} parent=1 // pred_check_branch
      %42 = sbr.rel (0) target = $region45
    $region44: #{custom_protbert_forward.1} parent=1 // pred_region
      _
    $region45: #{custom_protbert_forward.1} parent=1 // pred_fallthru
      _
    // Predicated region
    $region46: #{custom_protbert_forward.1} parent=1 // pred_check
      _
    $region47: #{custom_protbert_forward.1} parent=1 // pred_check_branch
      %44 = sbr.rel (0) target = $region49
    $region48: #{custom_protbert_forward.1} parent=1 // pred_region
      _
    $region49: #{custom_protbert_forward.1} parent=1 // pred_fallthru
      _
    %v45 = vld [vmem:[%s0] sm:$0xff]
    %v46 = vld [vmem:[%s0 + $0x8] sm:$0xff]
    %v47 = vld [vmem:[%s1] sm:$0xff]
    %v48 = vld [vmem:[%s1 + $0x8] sm:$0xff]
    %v49 = vld [vmem:[%s11] sm:$0xff]
    %v50 = vld [vmem:[%s5] sm:$0xff]
    %v51 = vld [vmem:[%s5 + $0x8] sm:$0xff]
    %v52 = vld [vmem:[%s5 + $0x10] sm:$0xff]
    %v53 = vld [vmem:[%s5 + $0x18] sm:$0xff]
    %v54 = vld [vmem:[%s6] sm:$0x1]
    %v56 = vlaneseq
    %v57 = vshrl.u32 %v56, 7
    %v58 = vsub.s32 0, %v57
    %v59 = vrot.slane %v54, %v58
    %vm61 = vcmask 261120
    %v63 = vsel %vm61, %v45, 0
    %v66 = vsel %vm61, %v46, 0
    %68 = vmatprep.subr.mxu0 0.0
    %69 = vmatpush1.msra.mxu0 0.0
    %70 = vmatprep.subr.mxu0 0.0
    %71 = vmatpush1.msra.mxu0 0.0
    %72 = vmatprep.subr.mxu0 0.0
    %73 = vmatpush1.msra.mxu0 0.0
    %74 = vmatprep.subr.mxu0 0.0
    %75 = vmatpush1.msra.mxu0 0.0
    %76 = vmatprep.subr.mxu0 0.0
    %77 = vmatpush1.msra.mxu0 0.0
    %78 = vmatprep.subr.mxu0 0.0
    %79 = vmatpush1.msra.mxu0 0.0
    %80 = vmatprep.subr.mxu0 0.0
    %81 = vmatpush1.msra.mxu0 0.0
    %82 = vmatprep.subr.mxu0 0.0
    %83 = vmatpush1.msra.mxu0 0.0
    %84 = vmatprep.subr.mxu0 0.0
    %85 = vmatpush1.msra.mxu0 0.0
    %86 = vmatprep.subr.mxu0 0.0
    %87 = vmatpush1.msra.mxu0 0.0
    %88 = vmatprep.subr.mxu0 0.0
    %89 = vmatpush1.msra.mxu0 0.0
    %90 = vmatprep.subr.mxu0 0.0
    %91 = vmatpush1.msra.mxu0 0.0
    %92 = vmatprep.subr.mxu0 0.0
    %93 = vmatpush1.msra.mxu0 %v53
    %94 = vmatprep.subr.mxu0 0.0
    %95 = vmatpush1.msra.mxu0 %v52
    %96 = vmatprep.subr.mxu0 0.0
    %97 = vmatpush1.msra.mxu0 %v51
    %98 = vmatprep.subr.mxu0 0.0
    %99 = vmatpush1.msra.mxu0 %v50
    %100 = vmatprep.subr.mxu0 0.0
    %101 = vmatpush2.msra.mxu0 0.0
    %102 = vmatprep.subr.mxu0 0.0
    %103 = vmatpush2.msra.mxu0 0.0
    %104 = vmatprep.subr.mxu0 0.0
    %105 = vmatpush2.msra.mxu0 0.0
    %106 = vmatprep.subr.mxu0 0.0
    %107 = vmatpush2.msra.mxu0 0.0
    %108 = vmatprep.subr.mxu0 0.0
    %109 = vmatpush2.msra.mxu0 0.0
    %110 = vmatprep.subr.mxu0 0.0
    %111 = vmatpush2.msra.mxu0 0.0
    %112 = vmatprep.subr.mxu0 0.0
    %113 = vmatpush2.msra.mxu0 0.0
    %114 = vmatprep.subr.mxu0 0.0
    %115 = vmatpush2.msra.mxu0 0.0
    %116 = vmatprep.subr.mxu0 0.0
    %117 = vmatpush2.msra.mxu0 0.0
    %118 = vmatprep.subr.mxu0 0.0
    %119 = vmatpush2.msra.mxu0 0.0
    %120 = vmatprep.subr.mxu0 0.0
    %121 = vmatpush2.msra.mxu0 0.0
    %122 = vmatprep.subr.mxu0 0.0
    %123 = vmatpush2.msra.mxu0 0.0
    %124 = vmatprep.subr.mxu0 0.0
    %125 = vmatpush2.msra.mxu0 0.0
    %126 = vmatprep.subr.mxu0 0.0
    %127 = vmatpush2.msra.mxu0 0.0
    %128 = vmatprep.subr.mxu0 0.0
    %129 = vmatpush2.msra.mxu0 0.0
    %130 = vmatprep.subr.mxu0 0.0
    %131 = vmatpush2.msra.mxu0 0.0
    %132 = vmatprep.mubr.f32.mxu0 0.0
    %133 = vmatmul.mubr.f32.gmra.mxu0 %v63
    %v134 = vpop.f32.mrf.mxu0
    %v135 = vadd.f32 %v59, %v134
    %v136 = vpop.f32.mrf.mxu0
    %137 = vmatprep.mubr.f32.mxu0 0.0
    %138 = vmatmul.mubr.f32.gmra.mxu0 %v66
    %v139 = vpop.f32.mrf.mxu0
    %v140 = vadd.f32 %v59, %v139
    %v141 = vpop.f32.mrf.mxu0
    %142 = vdwg.mxu0
    %145 = vrot.lane.b32.xlu0 %v135, 96
    %v146 = vpop.permute.xlu0 %145
    %147 = vrot.lane.b32.xlu0 %v140, 96
    %v148 = vpop.permute.xlu0 %147
    %vm149 = vcmask 64512
    %v150 = vsel %vm149, %v135, 0
    %v152 = vsel %vm149, %v140, 0
    %v154 = vsel %vm149, %v146, 0
    %v156 = vsel %vm149, %v148, 0
    %158 = vmatprep.subr.mxu0 0.0
    %159 = vmatpush1.xpose.msra.mxu0 0.0
    %160 = vmatprep.subr.mxu0 0.0
    %161 = vmatpush1.xpose.msra.mxu0 0.0
    %162 = vmatprep.subr.mxu0 0.0
    %163 = vmatpush1.xpose.msra.mxu0 0.0
    %164 = vmatprep.subr.mxu0 0.0
    %165 = vmatpush1.xpose.msra.mxu0 0.0
    %166 = vmatprep.subr.mxu0 0.0
    %167 = vmatpush1.xpose.msra.mxu0 0.0
    %168 = vmatprep.subr.mxu0 0.0
    %169 = vmatpush1.xpose.msra.mxu0 0.0
    %170 = vmatprep.subr.mxu0 0.0
    %171 = vmatpush1.xpose.msra.mxu0 0.0
    %172 = vmatprep.subr.mxu0 0.0
    %173 = vmatpush1.xpose.msra.mxu0 0.0
    %174 = vmatprep.subr.mxu0 0.0
    %175 = vmatpush1.xpose.msra.mxu0 0.0
    %176 = vmatprep.subr.mxu0 0.0
    %177 = vmatpush1.xpose.msra.mxu0 0.0
    %178 = vmatprep.subr.mxu0 0.0
    %179 = vmatpush1.xpose.msra.mxu0 0.0
    %180 = vmatprep.subr.mxu0 0.0
    %181 = vmatpush1.xpose.msra.mxu0 0.0
    %182 = vmatprep.subr.mxu0 0.0
    %183 = vmatpush1.xpose.msra.mxu0 0.0
    %184 = vmatprep.subr.mxu0 0.0
    %185 = vmatpush1.xpose.msra.mxu0 0.0
    %186 = vmatprep.subr.mxu0 0.0
    %187 = vmatpush1.xpose.msra.mxu0 %v156
    %188 = vmatprep.subr.mxu0 0.0
    %189 = vmatpush1.xpose.msra.mxu0 %v154
    %190 = vmatprep.subr.mxu0 0.0
    %191 = vmatpush2.xpose.msra.mxu0 0.0
    %192 = vmatprep.subr.mxu0 0.0
    %193 = vmatpush2.xpose.msra.mxu0 0.0
    %194 = vmatprep.subr.mxu0 0.0
    %195 = vmatpush2.xpose.msra.mxu0 0.0
    %196 = vmatprep.subr.mxu0 0.0
    %197 = vmatpush2.xpose.msra.mxu0 0.0
    %198 = vmatprep.subr.mxu0 0.0
    %199 = vmatpush2.xpose.msra.mxu0 0.0
    %200 = vmatprep.subr.mxu0 0.0
    %201 = vmatpush2.xpose.msra.mxu0 0.0
    %202 = vmatprep.subr.mxu0 0.0
    %203 = vmatpush2.xpose.msra.mxu0 0.0
    %204 = vmatprep.subr.mxu0 0.0
    %205 = vmatpush2.xpose.msra.mxu0 0.0
    %206 = vmatprep.subr.mxu0 0.0
    %207 = vmatpush2.xpose.msra.mxu0 0.0
    %208 = vmatprep.subr.mxu0 0.0
    %209 = vmatpush2.xpose.msra.mxu0 0.0
    %210 = vmatprep.subr.mxu0 0.0
    %211 = vmatpush2.xpose.msra.mxu0 0.0
    %212 = vmatprep.subr.mxu0 0.0
    %213 = vmatpush2.xpose.msra.mxu0 0.0
    %214 = vmatprep.subr.mxu0 0.0
    %215 = vmatpush2.xpose.msra.mxu0 0.0
    %216 = vmatprep.subr.mxu0 0.0
    %217 = vmatpush2.xpose.msra.mxu0 0.0
    %218 = vmatprep.subr.mxu0 0.0
    %219 = vmatpush2.xpose.msra.mxu0 0.0
    %220 = vmatprep.subr.mxu0 0.0
    %221 = vmatpush2.xpose.msra.mxu0 0.0
    %222 = vmatprep.mubr.f32.mxu0 0.0
    %223 = vmatmul.mubr.f32.gmra.mxu0 %v150
    %v224 = vpop.f32.mrf.mxu0
    %v225 = vadd.f32 %v47, %v224
    %v226 = vpop.f32.mrf.mxu0
    %227 = vmatprep.mubr.f32.mxu0 0.0
    %228 = vmatmul.mubr.f32.gmra.mxu0 %v152
    %v229 = vpop.f32.mrf.mxu0
    %v230 = vadd.f32 %v48, %v229
    %v231 = vpop.f32.mrf.mxu0
    %232 = vdwg.mxu0
    %vm233 = vcmask 130048
    %v234 = vsel %vm233, %v225, -inf
    %235 = vmax.xlane.f32.xlu0 %v234
    %v236 = vpop.xlane.xlu0 %235
    %v237 = vsel %vm233, %v230, -inf
    %238 = vmax.xlane.f32.xlu0 %v237
    %v239 = vpop.xlane.xlu0 %238
    %v240 = vsub.f32 %v225, %v236
    %v241 = vsub.f32 %v230, %v239
    %v242 = vmul.f32 %v240, 1.442695
    %v243 = vpow.pop %v242
    %v244 = vmul.f32 %v241, 1.442695
    %v245 = vpow.pop %v244
    %v246 = vsel %vm233, %v243, 0.0
    %247 = vadd.xlane.f32.xlu0 %v246
    %v248 = vpop.xlane.xlu0 %247
    %v249 = vsel %vm233, %v245, 0.0
    %250 = vadd.xlane.f32.xlu0 %v249
    %v251 = vpop.xlane.xlu0 %250
    %v252 = vrcp.pop %v248
    %v253 = vrcp.pop %v251
    %v254 = vmul.f32 %v243, %v252
    %v255 = vmul.f32 %v245, %v253
    %256 = vrot.lane.b32.xlu0 %v135, 64
    %v257 = vpop.permute.xlu0 %256
    %258 = vrot.lane.b32.xlu0 %v140, 64
    %v259 = vpop.permute.xlu0 %258
    %v263 = vsel %vm233, %v254, 0
    %v266 = vsel %vm233, %v255, 0
    %268 = vmatprep.subr.mxu0 0.0
    %269 = vmatpush1.msra.mxu0 0.0
    %270 = vmatprep.subr.mxu0 0.0
    %271 = vmatpush1.msra.mxu0 0.0
    %272 = vmatprep.subr.mxu0 0.0
    %273 = vmatpush1.msra.mxu0 0.0
    %274 = vmatprep.subr.mxu0 0.0
    %275 = vmatpush1.msra.mxu0 0.0
    %276 = vmatprep.subr.mxu0 0.0
    %277 = vmatpush1.msra.mxu0 0.0
    %278 = vmatprep.subr.mxu0 0.0
    %279 = vmatpush1.msra.mxu0 0.0
    %280 = vmatprep.subr.mxu0 0.0
    %281 = vmatpush1.msra.mxu0 0.0
    %282 = vmatprep.subr.mxu0 0.0
    %283 = vmatpush1.msra.mxu0 0.0
    %284 = vmatprep.subr.mxu0 0.0
    %285 = vmatpush1.msra.mxu0 0.0
    %286 = vmatprep.subr.mxu0 0.0
    %287 = vmatpush1.msra.mxu0 0.0
    %288 = vmatprep.subr.mxu0 0.0
    %289 = vmatpush1.msra.mxu0 0.0
    %290 = vmatprep.subr.mxu0 0.0
    %291 = vmatpush1.msra.mxu0 0.0
    %292 = vmatprep.subr.mxu0 0.0
    %293 = vmatpush1.msra.mxu0 0.0
    %294 = vmatprep.subr.mxu0 0.0
    %295 = vmatpush1.msra.mxu0 0.0
    %296 = vmatprep.subr.mxu0 0.0
    %297 = vmatpush1.msra.mxu0 %v259
    %298 = vmatprep.subr.mxu0 0.0
    %299 = vmatpush1.msra.mxu0 %v257
    %300 = vmatprep.subr.mxu0 0.0
    %301 = vmatpush2.msra.mxu0 0.0
    %302 = vmatprep.subr.mxu0 0.0
    %303 = vmatpush2.msra.mxu0 0.0
    %304 = vmatprep.subr.mxu0 0.0
    %305 = vmatpush2.msra.mxu0 0.0
    %306 = vmatprep.subr.mxu0 0.0
    %307 = vmatpush2.msra.mxu0 0.0
    %308 = vmatprep.subr.mxu0 0.0
    %309 = vmatpush2.msra.mxu0 0.0
    %310 = vmatprep.subr.mxu0 0.0
    %311 = vmatpush2.msra.mxu0 0.0
    %312 = vmatprep.subr.mxu0 0.0
    %313 = vmatpush2.msra.mxu0 0.0
    %314 = vmatprep.subr.mxu0 0.0
    %315 = vmatpush2.msra.mxu0 0.0
    %316 = vmatprep.subr.mxu0 0.0
    %317 = vmatpush2.msra.mxu0 0.0
    %318 = vmatprep.subr.mxu0 0.0
    %319 = vmatpush2.msra.mxu0 0.0
    %320 = vmatprep.subr.mxu0 0.0
    %321 = vmatpush2.msra.mxu0 0.0
    %322 = vmatprep.subr.mxu0 0.0
    %323 = vmatpush2.msra.mxu0 0.0
    %324 = vmatprep.subr.mxu0 0.0
    %325 = vmatpush2.msra.mxu0 0.0
    %326 = vmatprep.subr.mxu0 0.0
    %327 = vmatpush2.msra.mxu0 0.0
    %328 = vmatprep.subr.mxu0 0.0
    %329 = vmatpush2.msra.mxu0 0.0
    %330 = vmatprep.subr.mxu0 0.0
    %331 = vmatpush2.msra.mxu0 0.0
    %332 = vmatprep.mubr.f32.mxu0 0.0
    %333 = vmatmul.mubr.f32.gmra.mxu0 %v263
    %v334 = vpop.f32.mrf.mxu0
    %v335 = vadd.f32 0.0, %v334
    %v336 = vpop.f32.mrf.mxu0
    %337 = vmatprep.mubr.f32.mxu0 0.0
    %338 = vmatmul.mubr.f32.gmra.mxu0 %v266
    %v339 = vpop.f32.mrf.mxu0
    %v340 = vadd.f32 0.0, %v339
    %v341 = vpop.f32.mrf.mxu0
    %342 = vdwg.mxu0
    %343 = vrot.lane.b32.xlu0 %v135, 120
    %v344 = vpop.permute.xlu0 %343
    %345 = vrot.lane.b32.xlu0 %v140, 120
    %v346 = vpop.permute.xlu0 %345
    %347 = vrot.lane.b32.xlu0 %v135, 88
    %v348 = vpop.permute.xlu0 %347
    %349 = vrot.lane.b32.xlu0 %v140, 88
    %v350 = vpop.permute.xlu0 %349
    %v351 = vsel %vm149, %v344, 0
    %v353 = vsel %vm149, %v346, 0
    %v355 = vsel %vm149, %v348, 0
    %v357 = vsel %vm149, %v350, 0
    %359 = vmatprep.subr.mxu0 0.0
    %360 = vmatpush1.xpose.msra.mxu0 0.0
    %361 = vmatprep.subr.mxu0 0.0
    %362 = vmatpush1.xpose.msra.mxu0 0.0
    %363 = vmatprep.subr.mxu0 0.0
    %364 = vmatpush1.xpose.msra.mxu0 0.0
    %365 = vmatprep.subr.mxu0 0.0
    %366 = vmatpush1.xpose.msra.mxu0 0.0
    %367 = vmatprep.subr.mxu0 0.0
    %368 = vmatpush1.xpose.msra.mxu0 0.0
    %369 = vmatprep.subr.mxu0 0.0
    %370 = vmatpush1.xpose.msra.mxu0 0.0
    %371 = vmatprep.subr.mxu0 0.0
    %372 = vmatpush1.xpose.msra.mxu0 0.0
    %373 = vmatprep.subr.mxu0 0.0
    %374 = vmatpush1.xpose.msra.mxu0 0.0
    %375 = vmatprep.subr.mxu0 0.0
    %376 = vmatpush1.xpose.msra.mxu0 0.0
    %377 = vmatprep.subr.mxu0 0.0
    %378 = vmatpush1.xpose.msra.mxu0 0.0
    %379 = vmatprep.subr.mxu0 0.0
    %380 = vmatpush1.xpose.msra.mxu0 0.0
    %381 = vmatprep.subr.mxu0 0.0
    %382 = vmatpush1.xpose.msra.mxu0 0.0
    %383 = vmatprep.subr.mxu0 0.0
    %384 = vmatpush1.xpose.msra.mxu0 0.0
    %385 = vmatprep.subr.mxu0 0.0
    %386 = vmatpush1.xpose.msra.mxu0 0.0
    %387 = vmatprep.subr.mxu0 0.0
    %388 = vmatpush1.xpose.msra.mxu0 %v357
    %389 = vmatprep.subr.mxu0 0.0
    %390 = vmatpush1.xpose.msra.mxu0 %v355
    %391 = vmatprep.subr.mxu0 0.0
    %392 = vmatpush2.xpose.msra.mxu0 0.0
    %393 = vmatprep.subr.mxu0 0.0
    %394 = vmatpush2.xpose.msra.mxu0 0.0
    %395 = vmatprep.subr.mxu0 0.0
    %396 = vmatpush2.xpose.msra.mxu0 0.0
    %397 = vmatprep.subr.mxu0 0.0
    %398 = vmatpush2.xpose.msra.mxu0 0.0
    %399 = vmatprep.subr.mxu0 0.0
    %400 = vmatpush2.xpose.msra.mxu0 0.0
    %401 = vmatprep.subr.mxu0 0.0
    %402 = vmatpush2.xpose.msra.mxu0 0.0
    %403 = vmatprep.subr.mxu0 0.0
    %404 = vmatpush2.xpose.msra.mxu0 0.0
    %405 = vmatprep.subr.mxu0 0.0
    %406 = vmatpush2.xpose.msra.mxu0 0.0
    %407 = vmatprep.subr.mxu0 0.0
    %408 = vmatpush2.xpose.msra.mxu0 0.0
    %409 = vmatprep.subr.mxu0 0.0
    %410 = vmatpush2.xpose.msra.mxu0 0.0
    %411 = vmatprep.subr.mxu0 0.0
    %412 = vmatpush2.xpose.msra.mxu0 0.0
    %413 = vmatprep.subr.mxu0 0.0
    %414 = vmatpush2.xpose.msra.mxu0 0.0
    %415 = vmatprep.subr.mxu0 0.0
    %416 = vmatpush2.xpose.msra.mxu0 0.0
    %417 = vmatprep.subr.mxu0 0.0
    %418 = vmatpush2.xpose.msra.mxu0 0.0
    %419 = vmatprep.subr.mxu0 0.0
    %420 = vmatpush2.xpose.msra.mxu0 0.0
    %421 = vmatprep.subr.mxu0 0.0
    %422 = vmatpush2.xpose.msra.mxu0 0.0
    %423 = vmatprep.mubr.f32.mxu0 0.0
    %424 = vmatmul.mubr.f32.gmra.mxu0 %v351
    %v425 = vpop.f32.mrf.mxu0
    %v426 = vadd.f32 %v47, %v425
    %v427 = vpop.f32.mrf.mxu0
    %428 = vmatprep.mubr.f32.mxu0 0.0
    %429 = vmatmul.mubr.f32.gmra.mxu0 %v353
    %v430 = vpop.f32.mrf.mxu0
    %v431 = vadd.f32 %v48, %v430
    %v432 = vpop.f32.mrf.mxu0
    %433 = vdwg.mxu0
    %v434 = vsel %vm233, %v426, -inf
    %435 = vmax.xlane.f32.xlu0 %v434
    %v436 = vpop.xlane.xlu0 %435
    %v437 = vsel %vm233, %v431, -inf
    %438 = vmax.xlane.f32.xlu0 %v437
    %v439 = vpop.xlane.xlu0 %438
    %v440 = vsub.f32 %v426, %v436
    %v441 = vsub.f32 %v431, %v439
    %v442 = vmul.f32 %v440, 1.442695
    %v443 = vpow.pop %v442
    %v444 = vmul.f32 %v441, 1.442695
    %v445 = vpow.pop %v444
    %v446 = vsel %vm233, %v443, 0.0
    %447 = vadd.xlane.f32.xlu0 %v446
    %v448 = vpop.xlane.xlu0 %447
    %v449 = vsel %vm233, %v445, 0.0
    %450 = vadd.xlane.f32.xlu0 %v449
    %v451 = vpop.xlane.xlu0 %450
    %v452 = vrcp.pop %v448
    %v453 = vrcp.pop %v451
    %v454 = vmul.f32 %v443, %v452
    %v455 = vmul.f32 %v445, %v453
    %456 = vrot.lane.b32.xlu0 %v135, 56
    %v457 = vpop.permute.xlu0 %456
    %458 = vrot.lane.b32.xlu0 %v140, 56
    %v459 = vpop.permute.xlu0 %458
    %v463 = vsel %vm233, %v454, 0
    %v466 = vsel %vm233, %v455, 0
    %468 = vmatprep.subr.mxu0 0.0
    %469 = vmatpush1.msra.mxu0 0.0
    %470 = vmatprep.subr.mxu0 0.0
    %471 = vmatpush1.msra.mxu0 0.0
    %472 = vmatprep.subr.mxu0 0.0
    %473 = vmatpush1.msra.mxu0 0.0
    %474 = vmatprep.subr.mxu0 0.0
    %475 = vmatpush1.msra.mxu0 0.0
    %476 = vmatprep.subr.mxu0 0.0
    %477 = vmatpush1.msra.mxu0 0.0
    %478 = vmatprep.subr.mxu0 0.0
    %479 = vmatpush1.msra.mxu0 0.0
    %480 = vmatprep.subr.mxu0 0.0
    %481 = vmatpush1.msra.mxu0 0.0
    %482 = vmatprep.subr.mxu0 0.0
    %483 = vmatpush1.msra.mxu0 0.0
    %484 = vmatprep.subr.mxu0 0.0
    %485 = vmatpush1.msra.mxu0 0.0
    %486 = vmatprep.subr.mxu0 0.0
    %487 = vmatpush1.msra.mxu0 0.0
    %488 = vmatprep.subr.mxu0 0.0
    %489 = vmatpush1.msra.mxu0 0.0
    %490 = vmatprep.subr.mxu0 0.0
    %491 = vmatpush1.msra.mxu0 0.0
    %492 = vmatprep.subr.mxu0 0.0
    %493 = vmatpush1.msra.mxu0 0.0
    %494 = vmatprep.subr.mxu0 0.0
    %495 = vmatpush1.msra.mxu0 0.0
    %496 = vmatprep.subr.mxu0 0.0
    %497 = vmatpush1.msra.mxu0 %v459
    %498 = vmatprep.subr.mxu0 0.0
    %499 = vmatpush1.msra.mxu0 %v457
    %500 = vmatprep.subr.mxu0 0.0
    %501 = vmatpush2.msra.mxu0 0.0
    %502 = vmatprep.subr.mxu0 0.0
    %503 = vmatpush2.msra.mxu0 0.0
    %504 = vmatprep.subr.mxu0 0.0
    %505 = vmatpush2.msra.mxu0 0.0
    %506 = vmatprep.subr.mxu0 0.0
    %507 = vmatpush2.msra.mxu0 0.0
    %508 = vmatprep.subr.mxu0 0.0
    %509 = vmatpush2.msra.mxu0 0.0
    %510 = vmatprep.subr.mxu0 0.0
    %511 = vmatpush2.msra.mxu0 0.0
    %512 = vmatprep.subr.mxu0 0.0
    %513 = vmatpush2.msra.mxu0 0.0
    %514 = vmatprep.subr.mxu0 0.0
    %515 = vmatpush2.msra.mxu0 0.0
    %516 = vmatprep.subr.mxu0 0.0
    %517 = vmatpush2.msra.mxu0 0.0
    %518 = vmatprep.subr.mxu0 0.0
    %519 = vmatpush2.msra.mxu0 0.0
    %520 = vmatprep.subr.mxu0 0.0
    %521 = vmatpush2.msra.mxu0 0.0
    %522 = vmatprep.subr.mxu0 0.0
    %523 = vmatpush2.msra.mxu0 0.0
    %524 = vmatprep.subr.mxu0 0.0
    %525 = vmatpush2.msra.mxu0 0.0
    %526 = vmatprep.subr.mxu0 0.0
    %527 = vmatpush2.msra.mxu0 0.0
    %528 = vmatprep.subr.mxu0 0.0
    %529 = vmatpush2.msra.mxu0 0.0
    %530 = vmatprep.subr.mxu0 0.0
    %531 = vmatpush2.msra.mxu0 0.0
    %532 = vmatprep.mubr.f32.mxu0 0.0
    %533 = vmatmul.mubr.f32.gmra.mxu0 %v463
    %v534 = vpop.f32.mrf.mxu0
    %v535 = vadd.f32 0.0, %v534
    %v536 = vpop.f32.mrf.mxu0
    %537 = vmatprep.mubr.f32.mxu0 0.0
    %538 = vmatmul.mubr.f32.gmra.mxu0 %v466
    %v539 = vpop.f32.mrf.mxu0
    %v540 = vadd.f32 0.0, %v539
    %v541 = vpop.f32.mrf.mxu0
    %542 = vdwg.mxu0
    %543 = vrot.lane.b32.xlu0 %v135, 112
    %v544 = vpop.permute.xlu0 %543
    %545 = vrot.lane.b32.xlu0 %v140, 112
    %v546 = vpop.permute.xlu0 %545
    %547 = vrot.lane.b32.xlu0 %v135, 80
    %v548 = vpop.permute.xlu0 %547
    %549 = vrot.lane.b32.xlu0 %v140, 80
    %v550 = vpop.permute.xlu0 %549
    %v551 = vsel %vm149, %v544, 0
    %v553 = vsel %vm149, %v546, 0
    %v555 = vsel %vm149, %v548, 0
    %v557 = vsel %vm149, %v550, 0
    %559 = vmatprep.subr.mxu0 0.0
    %560 = vmatpush1.xpose.msra.mxu0 0.0
    %561 = vmatprep.subr.mxu0 0.0
    %562 = vmatpush1.xpose.msra.mxu0 0.0
    %563 = vmatprep.subr.mxu0 0.0
    %564 = vmatpush1.xpose.msra.mxu0 0.0
    %565 = vmatprep.subr.mxu0 0.0
    %566 = vmatpush1.xpose.msra.mxu0 0.0
    %567 = vmatprep.subr.mxu0 0.0
    %568 = vmatpush1.xpose.msra.mxu0 0.0
    %569 = vmatprep.subr.mxu0 0.0
    %570 = vmatpush1.xpose.msra.mxu0 0.0
    %571 = vmatprep.subr.mxu0 0.0
    %572 = vmatpush1.xpose.msra.mxu0 0.0
    %573 = vmatprep.subr.mxu0 0.0
    %574 = vmatpush1.xpose.msra.mxu0 0.0
    %575 = vmatprep.subr.mxu0 0.0
    %576 = vmatpush1.xpose.msra.mxu0 0.0
    %577 = vmatprep.subr.mxu0 0.0
    %578 = vmatpush1.xpose.msra.mxu0 0.0
    %579 = vmatprep.subr.mxu0 0.0
    %580 = vmatpush1.xpose.msra.mxu0 0.0
    %581 = vmatprep.subr.mxu0 0.0
    %582 = vmatpush1.xpose.msra.mxu0 0.0
    %583 = vmatprep.subr.mxu0 0.0
    %584 = vmatpush1.xpose.msra.mxu0 0.0
    %585 = vmatprep.subr.mxu0 0.0
    %586 = vmatpush1.xpose.msra.mxu0 0.0
    %587 = vmatprep.subr.mxu0 0.0
    %588 = vmatpush1.xpose.msra.mxu0 %v557
    %589 = vmatprep.subr.mxu0 0.0
    %590 = vmatpush1.xpose.msra.mxu0 %v555
    %591 = vmatprep.subr.mxu0 0.0
    %592 = vmatpush2.xpose.msra.mxu0 0.0
    %593 = vmatprep.subr.mxu0 0.0
    %594 = vmatpush2.xpose.msra.mxu0 0.0
    %595 = vmatprep.subr.mxu0 0.0
    %596 = vmatpush2.xpose.msra.mxu0 0.0
    %597 = vmatprep.subr.mxu0 0.0
    %598 = vmatpush2.xpose.msra.mxu0 0.0
    %599 = vmatprep.subr.mxu0 0.0
    %600 = vmatpush2.xpose.msra.mxu0 0.0
    %601 = vmatprep.subr.mxu0 0.0
    %602 = vmatpush2.xpose.msra.mxu0 0.0
    %603 = vmatprep.subr.mxu0 0.0
    %604 = vmatpush2.xpose.msra.mxu0 0.0
    %605 = vmatprep.subr.mxu0 0.0
    %606 = vmatpush2.xpose.msra.mxu0 0.0
    %607 = vmatprep.subr.mxu0 0.0
    %608 = vmatpush2.xpose.msra.mxu0 0.0
    %609 = vmatprep.subr.mxu0 0.0
    %610 = vmatpush2.xpose.msra.mxu0 0.0
    %611 = vmatprep.subr.mxu0 0.0
    %612 = vmatpush2.xpose.msra.mxu0 0.0
    %613 = vmatprep.subr.mxu0 0.0
    %614 = vmatpush2.xpose.msra.mxu0 0.0
    %615 = vmatprep.subr.mxu0 0.0
    %616 = vmatpush2.xpose.msra.mxu0 0.0
    %617 = vmatprep.subr.mxu0 0.0
    %618 = vmatpush2.xpose.msra.mxu0 0.0
    %619 = vmatprep.subr.mxu0 0.0
    %620 = vmatpush2.xpose.msra.mxu0 0.0
    %621 = vmatprep.subr.mxu0 0.0
    %622 = vmatpush2.xpose.msra.mxu0 0.0
    %623 = vmatprep.mubr.f32.mxu0 0.0
    %624 = vmatmul.mubr.f32.gmra.mxu0 %v551
    %v625 = vpop.f32.mrf.mxu0
    %v626 = vadd.f32 %v47, %v625
    %v627 = vpop.f32.mrf.mxu0
    %628 = vmatprep.mubr.f32.mxu0 0.0
    %629 = vmatmul.mubr.f32.gmra.mxu0 %v553
    %v630 = vpop.f32.mrf.mxu0
    %v631 = vadd.f32 %v48, %v630
    %v632 = vpop.f32.mrf.mxu0
    %633 = vdwg.mxu0
    %v634 = vsel %vm233, %v626, -inf
    %635 = vmax.xlane.f32.xlu0 %v634
    %v636 = vpop.xlane.xlu0 %635
    %v637 = vsel %vm233, %v631, -inf
    %638 = vmax.xlane.f32.xlu0 %v637
    %v639 = vpop.xlane.xlu0 %638
    %v640 = vsub.f32 %v626, %v636
    %v641 = vsub.f32 %v631, %v639
    %v642 = vmul.f32 %v640, 1.442695
    %v643 = vpow.pop %v642
    %v644 = vmul.f32 %v641, 1.442695
    %v645 = vpow.pop %v644
    %v646 = vsel %vm233, %v643, 0.0
    %647 = vadd.xlane.f32.xlu0 %v646
    %v648 = vpop.xlane.xlu0 %647
    %v649 = vsel %vm233, %v645, 0.0
    %650 = vadd.xlane.f32.xlu0 %v649
    %v651 = vpop.xlane.xlu0 %650
    %v652 = vrcp.pop %v648
    %v653 = vrcp.pop %v651
    %v654 = vmul.f32 %v643, %v652
    %v655 = vmul.f32 %v645, %v653
    %656 = vrot.lane.b32.xlu0 %v135, 48
    %v657 = vpop.permute.xlu0 %656
    %658 = vrot.lane.b32.xlu0 %v140, 48
    %v659 = vpop.permute.xlu0 %658
    %v663 = vsel %vm233, %v654, 0
    %v666 = vsel %vm233, %v655, 0
    %668 = vmatprep.subr.mxu0 0.0
    %669 = vmatpush1.msra.mxu0 0.0
    %670 = vmatprep.subr.mxu0 0.0
    %671 = vmatpush1.msra.mxu0 0.0
    %672 = vmatprep.subr.mxu0 0.0
    %673 = vmatpush1.msra.mxu0 0.0
    %674 = vmatprep.subr.mxu0 0.0
    %675 = vmatpush1.msra.mxu0 0.0
    %676 = vmatprep.subr.mxu0 0.0
    %677 = vmatpush1.msra.mxu0 0.0
    %678 = vmatprep.subr.mxu0 0.0
    %679 = vmatpush1.msra.mxu0 0.0
    %680 = vmatprep.subr.mxu0 0.0
    %681 = vmatpush1.msra.mxu0 0.0
    %682 = vmatprep.subr.mxu0 0.0
    %683 = vmatpush1.msra.mxu0 0.0
    %684 = vmatprep.subr.mxu0 0.0
    %685 = vmatpush1.msra.mxu0 0.0
    %686 = vmatprep.subr.mxu0 0.0
    %687 = vmatpush1.msra.mxu0 0.0
    %688 = vmatprep.subr.mxu0 0.0
    %689 = vmatpush1.msra.mxu0 0.0
    %690 = vmatprep.subr.mxu0 0.0
    %691 = vmatpush1.msra.mxu0 0.0
    %692 = vmatprep.subr.mxu0 0.0
    %693 = vmatpush1.msra.mxu0 0.0
    %694 = vmatprep.subr.mxu0 0.0
    %695 = vmatpush1.msra.mxu0 0.0
    %696 = vmatprep.subr.mxu0 0.0
    %697 = vmatpush1.msra.mxu0 %v659
    %698 = vmatprep.subr.mxu0 0.0
    %699 = vmatpush1.msra.mxu0 %v657
    %700 = vmatprep.subr.mxu0 0.0
    %701 = vmatpush2.msra.mxu0 0.0
    %702 = vmatprep.subr.mxu0 0.0
    %703 = vmatpush2.msra.mxu0 0.0
    %704 = vmatprep.subr.mxu0 0.0
    %705 = vmatpush2.msra.mxu0 0.0
    %706 = vmatprep.subr.mxu0 0.0
    %707 = vmatpush2.msra.mxu0 0.0
    %708 = vmatprep.subr.mxu0 0.0
    %709 = vmatpush2.msra.mxu0 0.0
    %710 = vmatprep.subr.mxu0 0.0
    %711 = vmatpush2.msra.mxu0 0.0
    %712 = vmatprep.subr.mxu0 0.0
    %713 = vmatpush2.msra.mxu0 0.0
    %714 = vmatprep.subr.mxu0 0.0
    %715 = vmatpush2.msra.mxu0 0.0
    %716 = vmatprep.subr.mxu0 0.0
    %717 = vmatpush2.msra.mxu0 0.0
    %718 = vmatprep.subr.mxu0 0.0
    %719 = vmatpush2.msra.mxu0 0.0
    %720 = vmatprep.subr.mxu0 0.0
    %721 = vmatpush2.msra.mxu0 0.0
    %722 = vmatprep.subr.mxu0 0.0
    %723 = vmatpush2.msra.mxu0 0.0
    %724 = vmatprep.subr.mxu0 0.0
    %725 = vmatpush2.msra.mxu0 0.0
    %726 = vmatprep.subr.mxu0 0.0
    %727 = vmatpush2.msra.mxu0 0.0
    %728 = vmatprep.subr.mxu0 0.0
    %729 = vmatpush2.msra.mxu0 0.0
    %730 = vmatprep.subr.mxu0 0.0
    %731 = vmatpush2.msra.mxu0 0.0
    %732 = vmatprep.mubr.f32.mxu0 0.0
    %733 = vmatmul.mubr.f32.gmra.mxu0 %v663
    %v734 = vpop.f32.mrf.mxu0
    %v735 = vadd.f32 0.0, %v734
    %v736 = vpop.f32.mrf.mxu0
    %737 = vmatprep.mubr.f32.mxu0 0.0
    %738 = vmatmul.mubr.f32.gmra.mxu0 %v666
    %v739 = vpop.f32.mrf.mxu0
    %v740 = vadd.f32 0.0, %v739
    %v741 = vpop.f32.mrf.mxu0
    %742 = vdwg.mxu0
    %743 = vrot.lane.b32.xlu0 %v135, 104
    %v744 = vpop.permute.xlu0 %743
    %745 = vrot.lane.b32.xlu0 %v140, 104
    %v746 = vpop.permute.xlu0 %745
    %747 = vrot.lane.b32.xlu0 %v135, 72
    %v748 = vpop.permute.xlu0 %747
    %749 = vrot.lane.b32.xlu0 %v140, 72
    %v750 = vpop.permute.xlu0 %749
    %v751 = vsel %vm149, %v744, 0
    %v753 = vsel %vm149, %v746, 0
    %v755 = vsel %vm149, %v748, 0
    %v757 = vsel %vm149, %v750, 0
    %759 = vmatprep.subr.mxu0 0.0
    %760 = vmatpush1.xpose.msra.mxu0 0.0
    %761 = vmatprep.subr.mxu0 0.0
    %762 = vmatpush1.xpose.msra.mxu0 0.0
    %763 = vmatprep.subr.mxu0 0.0
    %764 = vmatpush1.xpose.msra.mxu0 0.0
    %765 = vmatprep.subr.mxu0 0.0
    %766 = vmatpush1.xpose.msra.mxu0 0.0
    %767 = vmatprep.subr.mxu0 0.0
    %768 = vmatpush1.xpose.msra.mxu0 0.0
    %769 = vmatprep.subr.mxu0 0.0
    %770 = vmatpush1.xpose.msra.mxu0 0.0
    %771 = vmatprep.subr.mxu0 0.0
    %772 = vmatpush1.xpose.msra.mxu0 0.0
    %773 = vmatprep.subr.mxu0 0.0
    %774 = vmatpush1.xpose.msra.mxu0 0.0
    %775 = vmatprep.subr.mxu0 0.0
    %776 = vmatpush1.xpose.msra.mxu0 0.0
    %777 = vmatprep.subr.mxu0 0.0
    %778 = vmatpush1.xpose.msra.mxu0 0.0
    %779 = vmatprep.subr.mxu0 0.0
    %780 = vmatpush1.xpose.msra.mxu0 0.0
    %781 = vmatprep.subr.mxu0 0.0
    %782 = vmatpush1.xpose.msra.mxu0 0.0
    %783 = vmatprep.subr.mxu0 0.0
    %784 = vmatpush1.xpose.msra.mxu0 0.0
    %785 = vmatprep.subr.mxu0 0.0
    %786 = vmatpush1.xpose.msra.mxu0 0.0
    %787 = vmatprep.subr.mxu0 0.0
    %788 = vmatpush1.xpose.msra.mxu0 %v757
    %789 = vmatprep.subr.mxu0 0.0
    %790 = vmatpush1.xpose.msra.mxu0 %v755
    %791 = vmatprep.subr.mxu0 0.0
    %792 = vmatpush2.xpose.msra.mxu0 0.0
    %793 = vmatprep.subr.mxu0 0.0
    %794 = vmatpush2.xpose.msra.mxu0 0.0
    %795 = vmatprep.subr.mxu0 0.0
    %796 = vmatpush2.xpose.msra.mxu0 0.0
    %797 = vmatprep.subr.mxu0 0.0
    %798 = vmatpush2.xpose.msra.mxu0 0.0
    %799 = vmatprep.subr.mxu0 0.0
    %800 = vmatpush2.xpose.msra.mxu0 0.0
    %801 = vmatprep.subr.mxu0 0.0
    %802 = vmatpush2.xpose.msra.mxu0 0.0
    %803 = vmatprep.subr.mxu0 0.0
    %804 = vmatpush2.xpose.msra.mxu0 0.0
    %805 = vmatprep.subr.mxu0 0.0
    %806 = vmatpush2.xpose.msra.mxu0 0.0
    %807 = vmatprep.subr.mxu0 0.0
    %808 = vmatpush2.xpose.msra.mxu0 0.0
    %809 = vmatprep.subr.mxu0 0.0
    %810 = vmatpush2.xpose.msra.mxu0 0.0
    %811 = vmatprep.subr.mxu0 0.0
    %812 = vmatpush2.xpose.msra.mxu0 0.0
    %813 = vmatprep.subr.mxu0 0.0
    %814 = vmatpush2.xpose.msra.mxu0 0.0
    %815 = vmatprep.subr.mxu0 0.0
    %816 = vmatpush2.xpose.msra.mxu0 0.0
    %817 = vmatprep.subr.mxu0 0.0
    %818 = vmatpush2.xpose.msra.mxu0 0.0
    %819 = vmatprep.subr.mxu0 0.0
    %820 = vmatpush2.xpose.msra.mxu0 0.0
    %821 = vmatprep.subr.mxu0 0.0
    %822 = vmatpush2.xpose.msra.mxu0 0.0
    %823 = vmatprep.mubr.f32.mxu0 0.0
    %824 = vmatmul.mubr.f32.gmra.mxu0 %v751
    %v825 = vpop.f32.mrf.mxu0
    %v826 = vadd.f32 %v47, %v825
    %v827 = vpop.f32.mrf.mxu0
    %828 = vmatprep.mubr.f32.mxu0 0.0
    %829 = vmatmul.mubr.f32.gmra.mxu0 %v753
    %v830 = vpop.f32.mrf.mxu0
    %v831 = vadd.f32 %v48, %v830
    %v832 = vpop.f32.mrf.mxu0
    %833 = vdwg.mxu0
    %v834 = vsel %vm233, %v826, -inf
    %835 = vmax.xlane.f32.xlu0 %v834
    %v836 = vpop.xlane.xlu0 %835
    %v837 = vsel %vm233, %v831, -inf
    %838 = vmax.xlane.f32.xlu0 %v837
    %v839 = vpop.xlane.xlu0 %838
    %v840 = vsub.f32 %v826, %v836
    %v841 = vsub.f32 %v831, %v839
    %v842 = vmul.f32 %v840, 1.442695
    %v843 = vpow.pop %v842
    %v844 = vmul.f32 %v841, 1.442695
    %v845 = vpow.pop %v844
    %v846 = vsel %vm233, %v843, 0.0
    %847 = vadd.xlane.f32.xlu0 %v846
    %v848 = vpop.xlane.xlu0 %847
    %v849 = vsel %vm233, %v845, 0.0
    %850 = vadd.xlane.f32.xlu0 %v849
    %v851 = vpop.xlane.xlu0 %850
    %v852 = vrcp.pop %v848
    %v853 = vrcp.pop %v851
    %v854 = vmul.f32 %v843, %v852
    %v855 = vmul.f32 %v845, %v853
    %856 = vrot.lane.b32.xlu0 %v135, 40
    %v857 = vpop.permute.xlu0 %856
    %858 = vrot.lane.b32.xlu0 %v140, 40
    %v859 = vpop.permute.xlu0 %858
    %v863 = vsel %vm233, %v854, 0
    %v866 = vsel %vm233, %v855, 0
    %868 = vmatprep.subr.mxu0 0.0
    %869 = vmatpush1.msra.mxu0 0.0
    %870 = vmatprep.subr.mxu0 0.0
    %871 = vmatpush1.msra.mxu0 0.0
    %872 = vmatprep.subr.mxu0 0.0
    %873 = vmatpush1.msra.mxu0 0.0
    %874 = vmatprep.subr.mxu0 0.0
    %875 = vmatpush1.msra.mxu0 0.0
    %876 = vmatprep.subr.mxu0 0.0
    %877 = vmatpush1.msra.mxu0 0.0
    %878 = vmatprep.subr.mxu0 0.0
    %879 = vmatpush1.msra.mxu0 0.0
    %880 = vmatprep.subr.mxu0 0.0
    %881 = vmatpush1.msra.mxu0 0.0
    %882 = vmatprep.subr.mxu0 0.0
    %883 = vmatpush1.msra.mxu0 0.0
    %884 = vmatprep.subr.mxu0 0.0
    %885 = vmatpush1.msra.mxu0 0.0
    %886 = vmatprep.subr.mxu0 0.0
    %887 = vmatpush1.msra.mxu0 0.0
    %888 = vmatprep.subr.mxu0 0.0
    %889 = vmatpush1.msra.mxu0 0.0
    %890 = vmatprep.subr.mxu0 0.0
    %891 = vmatpush1.msra.mxu0 0.0
    %892 = vmatprep.subr.mxu0 0.0
    %893 = vmatpush1.msra.mxu0 0.0
    %894 = vmatprep.subr.mxu0 0.0
    %895 = vmatpush1.msra.mxu0 0.0
    %896 = vmatprep.subr.mxu0 0.0
    %897 = vmatpush1.msra.mxu0 %v859
    %898 = vmatprep.subr.mxu0 0.0
    %899 = vmatpush1.msra.mxu0 %v857
    %900 = vmatprep.subr.mxu0 0.0
    %901 = vmatpush2.msra.mxu0 0.0
    %902 = vmatprep.subr.mxu0 0.0
    %903 = vmatpush2.msra.mxu0 0.0
    %904 = vmatprep.subr.mxu0 0.0
    %905 = vmatpush2.msra.mxu0 0.0
    %906 = vmatprep.subr.mxu0 0.0
    %907 = vmatpush2.msra.mxu0 0.0
    %908 = vmatprep.subr.mxu0 0.0
    %909 = vmatpush2.msra.mxu0 0.0
    %910 = vmatprep.subr.mxu0 0.0
    %911 = vmatpush2.msra.mxu0 0.0
    %912 = vmatprep.subr.mxu0 0.0
    %913 = vmatpush2.msra.mxu0 0.0
    %914 = vmatprep.subr.mxu0 0.0
    %915 = vmatpush2.msra.mxu0 0.0
    %916 = vmatprep.subr.mxu0 0.0
    %917 = vmatpush2.msra.mxu0 0.0
    %918 = vmatprep.subr.mxu0 0.0
    %919 = vmatpush2.msra.mxu0 0.0
    %920 = vmatprep.subr.mxu0 0.0
    %921 = vmatpush2.msra.mxu0 0.0
    %922 = vmatprep.subr.mxu0 0.0
    %923 = vmatpush2.msra.mxu0 0.0
    %924 = vmatprep.subr.mxu0 0.0
    %925 = vmatpush2.msra.mxu0 0.0
    %926 = vmatprep.subr.mxu0 0.0
    %927 = vmatpush2.msra.mxu0 0.0
    %928 = vmatprep.subr.mxu0 0.0
    %929 = vmatpush2.msra.mxu0 0.0
    %930 = vmatprep.subr.mxu0 0.0
    %931 = vmatpush2.msra.mxu0 0.0
    %932 = vmatprep.mubr.f32.mxu0 0.0
    %933 = vmatmul.mubr.f32.gmra.mxu0 %v863
    %v934 = vpop.f32.mrf.mxu0
    %v935 = vadd.f32 0.0, %v934
    %v936 = vpop.f32.mrf.mxu0
    %937 = vmatprep.mubr.f32.mxu0 0.0
    %938 = vmatmul.mubr.f32.gmra.mxu0 %v866
    %v939 = vpop.f32.mrf.mxu0
    %v940 = vadd.f32 0.0, %v939
    %v941 = vpop.f32.mrf.mxu0
    %942 = vdwg.mxu0
    %945 = vrot.lane.b32.xlu0 %v535, 8
    %v946 = vpop.permute.xlu0 %945
    %947 = vrot.lane.b32.xlu0 %v540, 8
    %v948 = vpop.permute.xlu0 %947
    %953 = vrot.lane.b32.xlu0 %v735, 16
    %v954 = vpop.permute.xlu0 %953
    %955 = vrot.lane.b32.xlu0 %v740, 16
    %v956 = vpop.permute.xlu0 %955
    %961 = vrot.lane.b32.xlu0 %v935, 24
    %v962 = vpop.permute.xlu0 %961
    %963 = vrot.lane.b32.xlu0 %v940, 24
    %v964 = vpop.permute.xlu0 %963
    %v967 = vsel %vm149, %v335, %v946
    %v968 = vsel %vm149, %v340, %v948
    %v969 = vsel %vm233, %v967, %v954
    %v970 = vsel %vm233, %v968, %v956
    %vm971 = vcmask 195584
    %v972 = vsel %vm971, %v969, %v962
    %v973 = vsel %vm971, %v970, %v964
    %v974 = vld [vmem:[%s7] sm:$0xff]
    %v975 = vld [vmem:[%s7 + $0x8] sm:$0xff]
    %v976 = vld [vmem:[%s7 + $0x10] sm:$0xff]
    %v977 = vld [vmem:[%s7 + $0x18] sm:$0xff]
    %v978 = vlaneseq
    %v979 = vshrl.u32 %v978, 7
    %v980 = vsub.s32 0, %v979
    %v981 = vrot.slane %v49, %v980
    %v983 = vsel %vm61, %v972, 0
    %v986 = vsel %vm61, %v973, 0
    %988 = vmatprep.subr.mxu0 0.0
    %989 = vmatpush1.msra.mxu0 0.0
    %990 = vmatprep.subr.mxu0 0.0
    %991 = vmatpush1.msra.mxu0 0.0
    %992 = vmatprep.subr.mxu0 0.0
    %993 = vmatpush1.msra.mxu0 0.0
    %994 = vmatprep.subr.mxu0 0.0
    %995 = vmatpush1.msra.mxu0 0.0
    %996 = vmatprep.subr.mxu0 0.0
    %997 = vmatpush1.msra.mxu0 0.0
    %998 = vmatprep.subr.mxu0 0.0
    %999 = vmatpush1.msra.mxu0 0.0
    %1000 = vmatprep.subr.mxu0 0.0
    %1001 = vmatpush1.msra.mxu0 0.0
    %1002 = vmatprep.subr.mxu0 0.0
    %1003 = vmatpush1.msra.mxu0 0.0
    %1004 = vmatprep.subr.mxu0 0.0
    %1005 = vmatpush1.msra.mxu0 0.0
    %1006 = vmatprep.subr.mxu0 0.0
    %1007 = vmatpush1.msra.mxu0 0.0
    %1008 = vmatprep.subr.mxu0 0.0
    %1009 = vmatpush1.msra.mxu0 0.0
    %1010 = vmatprep.subr.mxu0 0.0
    %1011 = vmatpush1.msra.mxu0 0.0
    %1012 = vmatprep.subr.mxu0 0.0
    %1013 = vmatpush1.msra.mxu0 %v977
    %1014 = vmatprep.subr.mxu0 0.0
    %1015 = vmatpush1.msra.mxu0 %v976
    %1016 = vmatprep.subr.mxu0 0.0
    %1017 = vmatpush1.msra.mxu0 %v975
    %1018 = vmatprep.subr.mxu0 0.0
    %1019 = vmatpush1.msra.mxu0 %v974
    %1020 = vmatprep.subr.mxu0 0.0
    %1021 = vmatpush2.msra.mxu0 0.0
    %1022 = vmatprep.subr.mxu0 0.0
    %1023 = vmatpush2.msra.mxu0 0.0
    %1024 = vmatprep.subr.mxu0 0.0
    %1025 = vmatpush2.msra.mxu0 0.0
    %1026 = vmatprep.subr.mxu0 0.0
    %1027 = vmatpush2.msra.mxu0 0.0
    %1028 = vmatprep.subr.mxu0 0.0
    %1029 = vmatpush2.msra.mxu0 0.0
    %1030 = vmatprep.subr.mxu0 0.0
    %1031 = vmatpush2.msra.mxu0 0.0
    %1032 = vmatprep.subr.mxu0 0.0
    %1033 = vmatpush2.msra.mxu0 0.0
    %1034 = vmatprep.subr.mxu0 0.0
    %1035 = vmatpush2.msra.mxu0 0.0
    %1036 = vmatprep.subr.mxu0 0.0
    %1037 = vmatpush2.msra.mxu0 0.0
    %1038 = vmatprep.subr.mxu0 0.0
    %1039 = vmatpush2.msra.mxu0 0.0
    %1040 = vmatprep.subr.mxu0 0.0
    %1041 = vmatpush2.msra.mxu0 0.0
    %1042 = vmatprep.subr.mxu0 0.0
    %1043 = vmatpush2.msra.mxu0 0.0
    %1044 = vmatprep.subr.mxu0 0.0
    %1045 = vmatpush2.msra.mxu0 0.0
    %1046 = vmatprep.subr.mxu0 0.0
    %1047 = vmatpush2.msra.mxu0 0.0
    %1048 = vmatprep.subr.mxu0 0.0
    %1049 = vmatpush2.msra.mxu0 0.0
    %1050 = vmatprep.subr.mxu0 0.0
    %1051 = vmatpush2.msra.mxu0 0.0
    %1052 = vmatprep.mubr.f32.mxu0 0.0
    %1053 = vmatmul.mubr.f32.gmra.mxu0 %v983
    %v1054 = vpop.f32.mrf.mxu0
    %v1055 = vadd.f32 %v981, %v1054
    %v1056 = vpop.f32.mrf.mxu0
    %1057 = vmatprep.mubr.f32.mxu0 0.0
    %1058 = vmatmul.mubr.f32.gmra.mxu0 %v986
    %v1059 = vpop.f32.mrf.mxu0
    %v1060 = vadd.f32 %v981, %v1059
    %v1061 = vpop.f32.mrf.mxu0
    %1062 = vdwg.mxu0
    %v1063 = vadd.f32 %v45, %v1055
    %v1064 = vadd.f32 %v46, %v1060
    %v1065 = vsel %vm61, %v1063, 0.0
    %1066 = vadd.xlane.f32.xlu0 %v1065
    %v1067 = vpop.xlane.xlu0 %1066
    %v1068 = vsel %vm61, %v1064, 0.0
    %1069 = vadd.xlane.f32.xlu0 %v1068
    %v1070 = vpop.xlane.xlu0 %1069
    %v1071 = vrcp.pop 32.0
    %v1072 = vmul.f32 %v1067, %v1071
    %v1073 = vmul.f32 %v1070, %v1071
    %v1074 = vsub.f32 %v1063, %v1072
    %v1075 = vsub.f32 %v1064, %v1073
    %v1076 = vmul.f32 %v1074, %v1074
    %v1077 = vmul.f32 %v1075, %v1075
    %v1078 = vsel %vm61, %v1076, 0.0
    %1079 = vadd.xlane.f32.xlu0 %v1078
    %v1080 = vpop.xlane.xlu0 %1079
    %v1081 = vsel %vm61, %v1077, 0.0
    %1082 = vadd.xlane.f32.xlu0 %v1081
    %v1083 = vpop.xlane.xlu0 %1082
    %v1084 = vmul.f32 %v1080, %v1071
    %v1085 = vmul.f32 %v1083, %v1071
    %v1086 = vadd.f32 %v1084, 1e-12
    %v1087 = vadd.f32 %v1085, 1e-12
    %v1088 = vrsqrt.pop %v1086
    %v1089 = vrsqrt.pop %v1087
    %v1090 = vmul.f32 %v1074, %v1088
    %v1091 = vmul.f32 %v1075, %v1089
    %v1092 = vlaneseq
    %v1093 = vshrl.u32 %v1092, 7
    %v1094 = vsub.s32 1, %v1093
    %v1095 = vrot.slane %v49, %v1094
    %v1096 = vmul.f32 %v1090, %v1095
    %v1097 = vmul.f32 %v1091, %v1095
    %v1098 = vlaneseq
    %v1099 = vshrl.u32 %v1098, 7
    %v1100 = vsub.s32 2, %v1099
    %v1101 = vrot.slane %v49, %v1100
    %v1102 = vadd.f32 %v1096, %v1101
    %v1103 = vadd.f32 %v1097, %v1101
    %v1104 = vld [vmem:[%s8] sm:$0xff]
    %v1105 = vld [vmem:[%s8 + $0x8] sm:$0xff]
    %v1106 = vld [vmem:[%s8 + $0x10] sm:$0xff]
    %v1107 = vld [vmem:[%s8 + $0x18] sm:$0xff]
    %v1108 = vld [vmem:[%s10] sm:$0x1]
    %v1110 = vlaneseq
    %v1111 = vshrl.u32 %v1110, 7
    %v1112 = vsub.s32 0, %v1111
    %v1113 = vrot.slane %v1108, %v1112
    %v1116 = vsel %vm61, %v1102, 0
    %v1119 = vsel %vm61, %v1103, 0
    %1121 = vmatprep.subr.mxu0 0.0
    %1122 = vmatpush1.msra.mxu0 0.0
    %1123 = vmatprep.subr.mxu0 0.0
    %1124 = vmatpush1.msra.mxu0 0.0
    %1125 = vmatprep.subr.mxu0 0.0
    %1126 = vmatpush1.msra.mxu0 0.0
    %1127 = vmatprep.subr.mxu0 0.0
    %1128 = vmatpush1.msra.mxu0 0.0
    %1129 = vmatprep.subr.mxu0 0.0
    %1130 = vmatpush1.msra.mxu0 0.0
    %1131 = vmatprep.subr.mxu0 0.0
    %1132 = vmatpush1.msra.mxu0 0.0
    %1133 = vmatprep.subr.mxu0 0.0
    %1134 = vmatpush1.msra.mxu0 0.0
    %1135 = vmatprep.subr.mxu0 0.0
    %1136 = vmatpush1.msra.mxu0 0.0
    %1137 = vmatprep.subr.mxu0 0.0
    %1138 = vmatpush1.msra.mxu0 0.0
    %1139 = vmatprep.subr.mxu0 0.0
    %1140 = vmatpush1.msra.mxu0 0.0
    %1141 = vmatprep.subr.mxu0 0.0
    %1142 = vmatpush1.msra.mxu0 0.0
    %1143 = vmatprep.subr.mxu0 0.0
    %1144 = vmatpush1.msra.mxu0 0.0
    %1145 = vmatprep.subr.mxu0 0.0
    %1146 = vmatpush1.msra.mxu0 %v1107
    %1147 = vmatprep.subr.mxu0 0.0
    %1148 = vmatpush1.msra.mxu0 %v1106
    %1149 = vmatprep.subr.mxu0 0.0
    %1150 = vmatpush1.msra.mxu0 %v1105
    %1151 = vmatprep.subr.mxu0 0.0
    %1152 = vmatpush1.msra.mxu0 %v1104
    %1153 = vmatprep.subr.mxu0 0.0
    %1154 = vmatpush2.msra.mxu0 0.0
    %1155 = vmatprep.subr.mxu0 0.0
    %1156 = vmatpush2.msra.mxu0 0.0
    %1157 = vmatprep.subr.mxu0 0.0
    %1158 = vmatpush2.msra.mxu0 0.0
    %1159 = vmatprep.subr.mxu0 0.0
    %1160 = vmatpush2.msra.mxu0 0.0
    %1161 = vmatprep.subr.mxu0 0.0
    %1162 = vmatpush2.msra.mxu0 0.0
    %1163 = vmatprep.subr.mxu0 0.0
    %1164 = vmatpush2.msra.mxu0 0.0
    %1165 = vmatprep.subr.mxu0 0.0
    %1166 = vmatpush2.msra.mxu0 0.0
    %1167 = vmatprep.subr.mxu0 0.0
    %1168 = vmatpush2.msra.mxu0 0.0
    %1169 = vmatprep.subr.mxu0 0.0
    %1170 = vmatpush2.msra.mxu0 0.0
    %1171 = vmatprep.subr.mxu0 0.0
    %1172 = vmatpush2.msra.mxu0 0.0
    %1173 = vmatprep.subr.mxu0 0.0
    %1174 = vmatpush2.msra.mxu0 0.0
    %1175 = vmatprep.subr.mxu0 0.0
    %1176 = vmatpush2.msra.mxu0 0.0
    %1177 = vmatprep.subr.mxu0 0.0
    %1178 = vmatpush2.msra.mxu0 0.0
    %1179 = vmatprep.subr.mxu0 0.0
    %1180 = vmatpush2.msra.mxu0 0.0
    %1181 = vmatprep.subr.mxu0 0.0
    %1182 = vmatpush2.msra.mxu0 0.0
    %1183 = vmatprep.subr.mxu0 0.0
    %1184 = vmatpush2.msra.mxu0 0.0
    %1185 = vmatprep.mubr.f32.mxu0 0.0
    %1186 = vmatmul.mubr.f32.gmra.mxu0 %v1116
    %v1187 = vpop.f32.mrf.mxu0
    %v1188 = vadd.f32 %v1113, %v1187
    %v1189 = vpop.f32.mrf.mxu0
    %1190 = vmatprep.mubr.f32.mxu0 0.0
    %1191 = vmatmul.mubr.f32.gmra.mxu0 %v1119
    %v1192 = vpop.f32.mrf.mxu0
    %v1193 = vadd.f32 %v1113, %v1192
    %v1194 = vpop.f32.mrf.mxu0
    %1195 = vdwg.mxu0
    %v1196 = vmul.f32 %v1188, 0.5
    %v1197 = vmul.f32 %v1193, 0.5
    %v1198 = vmul.f32 %v1188, 0.044715
    %v1199 = vmul.f32 %v1193, 0.044715
    %v1200 = vmul.f32 %v1198, %v1188
    %v1201 = vmul.f32 %v1199, %v1193
    %v1202 = vmul.f32 %v1200, %v1188
    %v1203 = vmul.f32 %v1201, %v1193
    %v1204 = vadd.f32 %v1188, %v1202
    %v1205 = vadd.f32 %v1193, %v1203
    %v1206 = vmul.f32 %v1204, 0.7978846
    %v1207 = vmul.f32 %v1205, 0.7978846
    %v1208 = vtanh.pop %v1206
    %v1209 = vtanh.pop %v1207
    %v1210 = vadd.f32 %v1208, 1.0
    %v1211 = vadd.f32 %v1209, 1.0
    %v1212 = vmul.f32 %v1196, %v1210
    %v1213 = vmul.f32 %v1197, %v1211
    %v1214 = vld [vmem:[%s9] sm:$0xff]
    %v1215 = vld [vmem:[%s9 + $0x8] sm:$0xff]
    %v1216 = vld [vmem:[%s9 + $0x10] sm:$0xff]
    %v1217 = vld [vmem:[%s9 + $0x18] sm:$0xff]
    %v1218 = vld [vmem:[%s9 + $0x20] sm:$0xff]
    %v1219 = vld [vmem:[%s9 + $0x28] sm:$0xff]
    %v1220 = vld [vmem:[%s9 + $0x30] sm:$0xff]
    %v1221 = vld [vmem:[%s9 + $0x38] sm:$0xff]
    %v1222 = vlaneseq
    %v1223 = vshrl.u32 %v1222, 7
    %v1224 = vsub.s32 3, %v1223
    %v1225 = vrot.slane %v49, %v1224
    %vm1226 = vcmask 523264
    %v1228 = vsel %vm1226, %v1212, 0
    %v1231 = vsel %vm1226, %v1213, 0
    %1233 = vmatprep.subr.mxu0 0.0
    %1234 = vmatpush1.msra.mxu0 0.0
    %1235 = vmatprep.subr.mxu0 0.0
    %1236 = vmatpush1.msra.mxu0 0.0
    %1237 = vmatprep.subr.mxu0 0.0
    %1238 = vmatpush1.msra.mxu0 0.0
    %1239 = vmatprep.subr.mxu0 0.0
    %1240 = vmatpush1.msra.mxu0 0.0
    %1241 = vmatprep.subr.mxu0 0.0
    %1242 = vmatpush1.msra.mxu0 0.0
    %1243 = vmatprep.subr.mxu0 0.0
    %1244 = vmatpush1.msra.mxu0 0.0
    %1245 = vmatprep.subr.mxu0 0.0
    %1246 = vmatpush1.msra.mxu0 0.0
    %1247 = vmatprep.subr.mxu0 0.0
    %1248 = vmatpush1.msra.mxu0 0.0
    %1249 = vmatprep.subr.mxu0 0.0
    %1250 = vmatpush1.msra.mxu0 %v1221
    %1251 = vmatprep.subr.mxu0 0.0
    %1252 = vmatpush1.msra.mxu0 %v1220
    %1253 = vmatprep.subr.mxu0 0.0
    %1254 = vmatpush1.msra.mxu0 %v1219
    %1255 = vmatprep.subr.mxu0 0.0
    %1256 = vmatpush1.msra.mxu0 %v1218
    %1257 = vmatprep.subr.mxu0 0.0
    %1258 = vmatpush1.msra.mxu0 %v1217
    %1259 = vmatprep.subr.mxu0 0.0
    %1260 = vmatpush1.msra.mxu0 %v1216
    %1261 = vmatprep.subr.mxu0 0.0
    %1262 = vmatpush1.msra.mxu0 %v1215
    %1263 = vmatprep.subr.mxu0 0.0
    %1264 = vmatpush1.msra.mxu0 %v1214
    %1265 = vmatprep.subr.mxu0 0.0
    %1266 = vmatpush2.msra.mxu0 0.0
    %1267 = vmatprep.subr.mxu0 0.0
    %1268 = vmatpush2.msra.mxu0 0.0
    %1269 = vmatprep.subr.mxu0 0.0
    %1270 = vmatpush2.msra.mxu0 0.0
    %1271 = vmatprep.subr.mxu0 0.0
    %1272 = vmatpush2.msra.mxu0 0.0
    %1273 = vmatprep.subr.mxu0 0.0
    %1274 = vmatpush2.msra.mxu0 0.0
    %1275 = vmatprep.subr.mxu0 0.0
    %1276 = vmatpush2.msra.mxu0 0.0
    %1277 = vmatprep.subr.mxu0 0.0
    %1278 = vmatpush2.msra.mxu0 0.0
    %1279 = vmatprep.subr.mxu0 0.0
    %1280 = vmatpush2.msra.mxu0 0.0
    %1281 = vmatprep.subr.mxu0 0.0
    %1282 = vmatpush2.msra.mxu0 0.0
    %1283 = vmatprep.subr.mxu0 0.0
    %1284 = vmatpush2.msra.mxu0 0.0
    %1285 = vmatprep.subr.mxu0 0.0
    %1286 = vmatpush2.msra.mxu0 0.0
    %1287 = vmatprep.subr.mxu0 0.0
    %1288 = vmatpush2.msra.mxu0 0.0
    %1289 = vmatprep.subr.mxu0 0.0
    %1290 = vmatpush2.msra.mxu0 0.0
    %1291 = vmatprep.subr.mxu0 0.0
    %1292 = vmatpush2.msra.mxu0 0.0
    %1293 = vmatprep.subr.mxu0 0.0
    %1294 = vmatpush2.msra.mxu0 0.0
    %1295 = vmatprep.subr.mxu0 0.0
    %1296 = vmatpush2.msra.mxu0 0.0
    %1297 = vmatprep.mubr.f32.mxu0 0.0
    %1298 = vmatmul.mubr.f32.gmra.mxu0 %v1228
    %v1299 = vpop.f32.mrf.mxu0
    %v1300 = vadd.f32 %v1225, %v1299
    %v1301 = vpop.f32.mrf.mxu0
    %1302 = vmatprep.mubr.f32.mxu0 0.0
    %1303 = vmatmul.mubr.f32.gmra.mxu0 %v1231
    %v1304 = vpop.f32.mrf.mxu0
    %v1305 = vadd.f32 %v1225, %v1304
    %v1306 = vpop.f32.mrf.mxu0
    %1307 = vdwg.mxu0
    %v1308 = vadd.f32 %v1102, %v1300
    %v1309 = vadd.f32 %v1103, %v1305
    %v1310 = vsel %vm61, %v1308, 0.0
    %1311 = vadd.xlane.f32.xlu0 %v1310
    %v1312 = vpop.xlane.xlu0 %1311
    %v1313 = vsel %vm61, %v1309, 0.0
    %1314 = vadd.xlane.f32.xlu0 %v1313
    %v1315 = vpop.xlane.xlu0 %1314
    %v1316 = vmul.f32 %v1312, %v1071
    %v1317 = vmul.f32 %v1315, %v1071
    %v1318 = vsub.f32 %v1308, %v1316
    %v1319 = vsub.f32 %v1309, %v1317
    %v1320 = vmul.f32 %v1318, %v1318
    %v1321 = vmul.f32 %v1319, %v1319
    %v1322 = vsel %vm61, %v1320, 0.0
    %1323 = vadd.xlane.f32.xlu0 %v1322
    %v1324 = vpop.xlane.xlu0 %1323
    %v1325 = vsel %vm61, %v1321, 0.0
    %1326 = vadd.xlane.f32.xlu0 %v1325
    %v1327 = vpop.xlane.xlu0 %1326
    %v1328 = vmul.f32 %v1324, %v1071
    %v1329 = vmul.f32 %v1327, %v1071
    %v1330 = vadd.f32 %v1328, 1e-12
    %v1331 = vadd.f32 %v1329, 1e-12
    %v1332 = vrsqrt.pop %v1330
    %v1333 = vrsqrt.pop %v1331
    %v1334 = vmul.f32 %v1318, %v1332
    %v1335 = vmul.f32 %v1319, %v1333
    %v1336 = vlaneseq
    %v1337 = vshrl.u32 %v1336, 7
    %v1338 = vsub.s32 4, %v1337
    %v1339 = vrot.slane %v49, %v1338
    %v1340 = vmul.f32 %v1334, %v1339
    %v1341 = vmul.f32 %v1335, %v1339
    %v1342 = vlaneseq
    %v1343 = vshrl.u32 %v1342, 7
    %v1344 = vsub.s32 5, %v1343
    %v1345 = vrot.slane %v49, %v1344
    %v1346 = vadd.f32 %v1340, %v1345
    %v1347 = vadd.f32 %v1341, %v1345
    %s1348 = scalar_lea.vmem %s11, 8
    %v1349 = vld [vmem:[%s1348] sm:$0xff]
    %s1350 = scalar_lea.vmem %s5, 32
    %v1351 = vld [vmem:[%s1350] sm:$0xff]
    %v1352 = vld [vmem:[%s1350 + $0x8] sm:$0xff]
    %v1353 = vld [vmem:[%s1350 + $0x10] sm:$0xff]
    %v1354 = vld [vmem:[%s1350 + $0x18] sm:$0xff]
    %s1355 = scalar_lea.vmem %s6, 1
    %v1356 = vld [vmem:[%s1355] sm:$0x1]
    %v1358 = vlaneseq
    %v1359 = vshrl.u32 %v1358, 7
    %v1360 = vsub.s32 0, %v1359
    %v1361 = vrot.slane %v1356, %v1360
    %v1364 = vsel %vm61, %v1346, 0
    %v1367 = vsel %vm61, %v1347, 0
    %1369 = vmatprep.subr.mxu0 0.0
    %1370 = vmatpush1.msra.mxu0 0.0
    %1371 = vmatprep.subr.mxu0 0.0
    %1372 = vmatpush1.msra.mxu0 0.0
    %1373 = vmatprep.subr.mxu0 0.0
    %1374 = vmatpush1.msra.mxu0 0.0
    %1375 = vmatprep.subr.mxu0 0.0
    %1376 = vmatpush1.msra.mxu0 0.0
    %1377 = vmatprep.subr.mxu0 0.0
    %1378 = vmatpush1.msra.mxu0 0.0
    %1379 = vmatprep.subr.mxu0 0.0
    %1380 = vmatpush1.msra.mxu0 0.0
    %1381 = vmatprep.subr.mxu0 0.0
    %1382 = vmatpush1.msra.mxu0 0.0
    %1383 = vmatprep.subr.mxu0 0.0
    %1384 = vmatpush1.msra.mxu0 0.0
    %1385 = vmatprep.subr.mxu0 0.0
    %1386 = vmatpush1.msra.mxu0 0.0
    %1387 = vmatprep.subr.mxu0 0.0
    %1388 = vmatpush1.msra.mxu0 0.0
    %1389 = vmatprep.subr.mxu0 0.0
    %1390 = vmatpush1.msra.mxu0 0.0
    %1391 = vmatprep.subr.mxu0 0.0
    %1392 = vmatpush1.msra.mxu0 0.0
    %1393 = vmatprep.subr.mxu0 0.0
    %1394 = vmatpush1.msra.mxu0 %v1354
    %1395 = vmatprep.subr.mxu0 0.0
    %1396 = vmatpush1.msra.mxu0 %v1353
    %1397 = vmatprep.subr.mxu0 0.0
    %1398 = vmatpush1.msra.mxu0 %v1352
    %1399 = vmatprep.subr.mxu0 0.0
    %1400 = vmatpush1.msra.mxu0 %v1351
    %1401 = vmatprep.subr.mxu0 0.0
    %1402 = vmatpush2.msra.mxu0 0.0
    %1403 = vmatprep.subr.mxu0 0.0
    %1404 = vmatpush2.msra.mxu0 0.0
    %1405 = vmatprep.subr.mxu0 0.0
    %1406 = vmatpush2.msra.mxu0 0.0
    %1407 = vmatprep.subr.mxu0 0.0
    %1408 = vmatpush2.msra.mxu0 0.0
    %1409 = vmatprep.subr.mxu0 0.0
    %1410 = vmatpush2.msra.mxu0 0.0
    %1411 = vmatprep.subr.mxu0 0.0
    %1412 = vmatpush2.msra.mxu0 0.0
    %1413 = vmatprep.subr.mxu0 0.0
    %1414 = vmatpush2.msra.mxu0 0.0
    %1415 = vmatprep.subr.mxu0 0.0
    %1416 = vmatpush2.msra.mxu0 0.0
    %1417 = vmatprep.subr.mxu0 0.0
    %1418 = vmatpush2.msra.mxu0 0.0
    %1419 = vmatprep.subr.mxu0 0.0
    %1420 = vmatpush2.msra.mxu0 0.0
    %1421 = vmatprep.subr.mxu0 0.0
    %1422 = vmatpush2.msra.mxu0 0.0
    %1423 = vmatprep.subr.mxu0 0.0
    %1424 = vmatpush2.msra.mxu0 0.0
    %1425 = vmatprep.subr.mxu0 0.0
    %1426 = vmatpush2.msra.mxu0 0.0
    %1427 = vmatprep.subr.mxu0 0.0
    %1428 = vmatpush2.msra.mxu0 0.0
    %1429 = vmatprep.subr.mxu0 0.0
    %1430 = vmatpush2.msra.mxu0 0.0
    %1431 = vmatprep.subr.mxu0 0.0
    %1432 = vmatpush2.msra.mxu0 0.0
    %1433 = vmatprep.mubr.f32.mxu0 0.0
    %1434 = vmatmul.mubr.f32.gmra.mxu0 %v1364
    %v1435 = vpop.f32.mrf.mxu0
    %v1436 = vadd.f32 %v1361, %v1435
    %v1437 = vpop.f32.mrf.mxu0
    %1438 = vmatprep.mubr.f32.mxu0 0.0
    %1439 = vmatmul.mubr.f32.gmra.mxu0 %v1367
    %v1440 = vpop.f32.mrf.mxu0
    %v1441 = vadd.f32 %v1361, %v1440
    %v1442 = vpop.f32.mrf.mxu0
    %1443 = vdwg.mxu0
    %1446 = vrot.lane.b32.xlu0 %v1436, 96
    %v1447 = vpop.permute.xlu0 %1446
    %1448 = vrot.lane.b32.xlu0 %v1441, 96
    %v1449 = vpop.permute.xlu0 %1448
    %v1450 = vsel %vm149, %v1436, 0
    %v1452 = vsel %vm149, %v1441, 0
    %v1454 = vsel %vm149, %v1447, 0
    %v1456 = vsel %vm149, %v1449, 0
    %1458 = vmatprep.subr.mxu0 0.0
    %1459 = vmatpush1.xpose.msra.mxu0 0.0
    %1460 = vmatprep.subr.mxu0 0.0
    %1461 = vmatpush1.xpose.msra.mxu0 0.0
    %1462 = vmatprep.subr.mxu0 0.0
    %1463 = vmatpush1.xpose.msra.mxu0 0.0
    %1464 = vmatprep.subr.mxu0 0.0
    %1465 = vmatpush1.xpose.msra.mxu0 0.0
    %1466 = vmatprep.subr.mxu0 0.0
    %1467 = vmatpush1.xpose.msra.mxu0 0.0
    %1468 = vmatprep.subr.mxu0 0.0
    %1469 = vmatpush1.xpose.msra.mxu0 0.0
    %1470 = vmatprep.subr.mxu0 0.0
    %1471 = vmatpush1.xpose.msra.mxu0 0.0
    %1472 = vmatprep.subr.mxu0 0.0
    %1473 = vmatpush1.xpose.msra.mxu0 0.0
    %1474 = vmatprep.subr.mxu0 0.0
    %1475 = vmatpush1.xpose.msra.mxu0 0.0
    %1476 = vmatprep.subr.mxu0 0.0
    %1477 = vmatpush1.xpose.msra.mxu0 0.0
    %1478 = vmatprep.subr.mxu0 0.0
    %1479 = vmatpush1.xpose.msra.mxu0 0.0
    %1480 = vmatprep.subr.mxu0 0.0
    %1481 = vmatpush1.xpose.msra.mxu0 0.0
    %1482 = vmatprep.subr.mxu0 0.0
    %1483 = vmatpush1.xpose.msra.mxu0 0.0
    %1484 = vmatprep.subr.mxu0 0.0
    %1485 = vmatpush1.xpose.msra.mxu0 0.0
    %1486 = vmatprep.subr.mxu0 0.0
    %1487 = vmatpush1.xpose.msra.mxu0 %v1456
    %1488 = vmatprep.subr.mxu0 0.0
    %1489 = vmatpush1.xpose.msra.mxu0 %v1454
    %1490 = vmatprep.subr.mxu0 0.0
    %1491 = vmatpush2.xpose.msra.mxu0 0.0
    %1492 = vmatprep.subr.mxu0 0.0
    %1493 = vmatpush2.xpose.msra.mxu0 0.0
    %1494 = vmatprep.subr.mxu0 0.0
    %1495 = vmatpush2.xpose.msra.mxu0 0.0
    %1496 = vmatprep.subr.mxu0 0.0
    %1497 = vmatpush2.xpose.msra.mxu0 0.0
    %1498 = vmatprep.subr.mxu0 0.0
    %1499 = vmatpush2.xpose.msra.mxu0 0.0
    %1500 = vmatprep.subr.mxu0 0.0
    %1501 = vmatpush2.xpose.msra.mxu0 0.0
    %1502 = vmatprep.subr.mxu0 0.0
    %1503 = vmatpush2.xpose.msra.mxu0 0.0
    %1504 = vmatprep.subr.mxu0 0.0
    %1505 = vmatpush2.xpose.msra.mxu0 0.0
    %1506 = vmatprep.subr.mxu0 0.0
    %1507 = vmatpush2.xpose.msra.mxu0 0.0
    %1508 = vmatprep.subr.mxu0 0.0
    %1509 = vmatpush2.xpose.msra.mxu0 0.0
    %1510 = vmatprep.subr.mxu0 0.0
    %1511 = vmatpush2.xpose.msra.mxu0 0.0
    %1512 = vmatprep.subr.mxu0 0.0
    %1513 = vmatpush2.xpose.msra.mxu0 0.0
    %1514 = vmatprep.subr.mxu0 0.0
    %1515 = vmatpush2.xpose.msra.mxu0 0.0
    %1516 = vmatprep.subr.mxu0 0.0
    %1517 = vmatpush2.xpose.msra.mxu0 0.0
    %1518 = vmatprep.subr.mxu0 0.0
    %1519 = vmatpush2.xpose.msra.mxu0 0.0
    %1520 = vmatprep.subr.mxu0 0.0
    %1521 = vmatpush2.xpose.msra.mxu0 0.0
    %1522 = vmatprep.mubr.f32.mxu0 0.0
    %1523 = vmatmul.mubr.f32.gmra.mxu0 %v1450
    %v1524 = vpop.f32.mrf.mxu0
    %v1525 = vadd.f32 %v47, %v1524
    %v1526 = vpop.f32.mrf.mxu0
    %1527 = vmatprep.mubr.f32.mxu0 0.0
    %1528 = vmatmul.mubr.f32.gmra.mxu0 %v1452
    %v1529 = vpop.f32.mrf.mxu0
    %v1530 = vadd.f32 %v48, %v1529
    %v1531 = vpop.f32.mrf.mxu0
    %1532 = vdwg.mxu0
    %v1533 = vsel %vm233, %v1525, -inf
    %1534 = vmax.xlane.f32.xlu0 %v1533
    %v1535 = vpop.xlane.xlu0 %1534
    %v1536 = vsel %vm233, %v1530, -inf
    %1537 = vmax.xlane.f32.xlu0 %v1536
    %v1538 = vpop.xlane.xlu0 %1537
    %v1539 = vsub.f32 %v1525, %v1535
    %v1540 = vsub.f32 %v1530, %v1538
    %v1541 = vmul.f32 %v1539, 1.442695
    %v1542 = vpow.pop %v1541
    %v1543 = vmul.f32 %v1540, 1.442695
    %v1544 = vpow.pop %v1543
    %v1545 = vsel %vm233, %v1542, 0.0
    %1546 = vadd.xlane.f32.xlu0 %v1545
    %v1547 = vpop.xlane.xlu0 %1546
    %v1548 = vsel %vm233, %v1544, 0.0
    %1549 = vadd.xlane.f32.xlu0 %v1548
    %v1550 = vpop.xlane.xlu0 %1549
    %v1551 = vrcp.pop %v1547
    %v1552 = vrcp.pop %v1550
    %v1553 = vmul.f32 %v1542, %v1551
    %v1554 = vmul.f32 %v1544, %v1552
    %1555 = vrot.lane.b32.xlu0 %v1436, 64
    %v1556 = vpop.permute.xlu0 %1555
    %1557 = vrot.lane.b32.xlu0 %v1441, 64
    %v1558 = vpop.permute.xlu0 %1557
    %v1562 = vsel %vm233, %v1553, 0
    %v1565 = vsel %vm233, %v1554, 0
    %1567 = vmatprep.subr.mxu0 0.0
    %1568 = vmatpush1.msra.mxu0 0.0
    %1569 = vmatprep.subr.mxu0 0.0
    %1570 = vmatpush1.msra.mxu0 0.0
    %1571 = vmatprep.subr.mxu0 0.0
    %1572 = vmatpush1.msra.mxu0 0.0
    %1573 = vmatprep.subr.mxu0 0.0
    %1574 = vmatpush1.msra.mxu0 0.0
    %1575 = vmatprep.subr.mxu0 0.0
    %1576 = vmatpush1.msra.mxu0 0.0
    %1577 = vmatprep.subr.mxu0 0.0
    %1578 = vmatpush1.msra.mxu0 0.0
    %1579 = vmatprep.subr.mxu0 0.0
    %1580 = vmatpush1.msra.mxu0 0.0
    %1581 = vmatprep.subr.mxu0 0.0
    %1582 = vmatpush1.msra.mxu0 0.0
    %1583 = vmatprep.subr.mxu0 0.0
    %1584 = vmatpush1.msra.mxu0 0.0
    %1585 = vmatprep.subr.mxu0 0.0
    %1586 = vmatpush1.msra.mxu0 0.0
    %1587 = vmatprep.subr.mxu0 0.0
    %1588 = vmatpush1.msra.mxu0 0.0
    %1589 = vmatprep.subr.mxu0 0.0
    %1590 = vmatpush1.msra.mxu0 0.0
    %1591 = vmatprep.subr.mxu0 0.0
    %1592 = vmatpush1.msra.mxu0 0.0
    %1593 = vmatprep.subr.mxu0 0.0
    %1594 = vmatpush1.msra.mxu0 0.0
    %1595 = vmatprep.subr.mxu0 0.0
    %1596 = vmatpush1.msra.mxu0 %v1558
    %1597 = vmatprep.subr.mxu0 0.0
    %1598 = vmatpush1.msra.mxu0 %v1556
    %1599 = vmatprep.subr.mxu0 0.0
    %1600 = vmatpush2.msra.mxu0 0.0
    %1601 = vmatprep.subr.mxu0 0.0
    %1602 = vmatpush2.msra.mxu0 0.0
    %1603 = vmatprep.subr.mxu0 0.0
    %1604 = vmatpush2.msra.mxu0 0.0
    %1605 = vmatprep.subr.mxu0 0.0
    %1606 = vmatpush2.msra.mxu0 0.0
    %1607 = vmatprep.subr.mxu0 0.0
    %1608 = vmatpush2.msra.mxu0 0.0
    %1609 = vmatprep.subr.mxu0 0.0
    %1610 = vmatpush2.msra.mxu0 0.0
    %1611 = vmatprep.subr.mxu0 0.0
    %1612 = vmatpush2.msra.mxu0 0.0
    %1613 = vmatprep.subr.mxu0 0.0
    %1614 = vmatpush2.msra.mxu0 0.0
    %1615 = vmatprep.subr.mxu0 0.0
    %1616 = vmatpush2.msra.mxu0 0.0
    %1617 = vmatprep.subr.mxu0 0.0
    %1618 = vmatpush2.msra.mxu0 0.0
    %1619 = vmatprep.subr.mxu0 0.0
    %1620 = vmatpush2.msra.mxu0 0.0
    %1621 = vmatprep.subr.mxu0 0.0
    %1622 = vmatpush2.msra.mxu0 0.0
    %1623 = vmatprep.subr.mxu0 0.0
    %1624 = vmatpush2.msra.mxu0 0.0
    %1625 = vmatprep.subr.mxu0 0.0
    %1626 = vmatpush2.msra.mxu0 0.0
    %1627 = vmatprep.subr.mxu0 0.0
    %1628 = vmatpush2.msra.mxu0 0.0
    %1629 = vmatprep.subr.mxu0 0.0
    %1630 = vmatpush2.msra.mxu0 0.0
    %1631 = vmatprep.mubr.f32.mxu0 0.0
    %1632 = vmatmul.mubr.f32.gmra.mxu0 %v1562
    %v1633 = vpop.f32.mrf.mxu0
    %v1634 = vadd.f32 0.0, %v1633
    %v1635 = vpop.f32.mrf.mxu0
    %1636 = vmatprep.mubr.f32.mxu0 0.0
    %1637 = vmatmul.mubr.f32.gmra.mxu0 %v1565
    %v1638 = vpop.f32.mrf.mxu0
    %v1639 = vadd.f32 0.0, %v1638
    %v1640 = vpop.f32.mrf.mxu0
    %1641 = vdwg.mxu0
    %1642 = vrot.lane.b32.xlu0 %v1436, 120
    %v1643 = vpop.permute.xlu0 %1642
    %1644 = vrot.lane.b32.xlu0 %v1441, 120
    %v1645 = vpop.permute.xlu0 %1644
    %1646 = vrot.lane.b32.xlu0 %v1436, 88
    %v1647 = vpop.permute.xlu0 %1646
    %1648 = vrot.lane.b32.xlu0 %v1441, 88
    %v1649 = vpop.permute.xlu0 %1648
    %v1650 = vsel %vm149, %v1643, 0
    %v1652 = vsel %vm149, %v1645, 0
    %v1654 = vsel %vm149, %v1647, 0
    %v1656 = vsel %vm149, %v1649, 0
    %1658 = vmatprep.subr.mxu0 0.0
    %1659 = vmatpush1.xpose.msra.mxu0 0.0
    %1660 = vmatprep.subr.mxu0 0.0
    %1661 = vmatpush1.xpose.msra.mxu0 0.0
    %1662 = vmatprep.subr.mxu0 0.0
    %1663 = vmatpush1.xpose.msra.mxu0 0.0
    %1664 = vmatprep.subr.mxu0 0.0
    %1665 = vmatpush1.xpose.msra.mxu0 0.0
    %1666 = vmatprep.subr.mxu0 0.0
    %1667 = vmatpush1.xpose.msra.mxu0 0.0
    %1668 = vmatprep.subr.mxu0 0.0
    %1669 = vmatpush1.xpose.msra.mxu0 0.0
    %1670 = vmatprep.subr.mxu0 0.0
    %1671 = vmatpush1.xpose.msra.mxu0 0.0
    %1672 = vmatprep.subr.mxu0 0.0
    %1673 = vmatpush1.xpose.msra.mxu0 0.0
    %1674 = vmatprep.subr.mxu0 0.0
    %1675 = vmatpush1.xpose.msra.mxu0 0.0
    %1676 = vmatprep.subr.mxu0 0.0
    %1677 = vmatpush1.xpose.msra.mxu0 0.0
    %1678 = vmatprep.subr.mxu0 0.0
    %1679 = vmatpush1.xpose.msra.mxu0 0.0
    %1680 = vmatprep.subr.mxu0 0.0
    %1681 = vmatpush1.xpose.msra.mxu0 0.0
    %1682 = vmatprep.subr.mxu0 0.0
    %1683 = vmatpush1.xpose.msra.mxu0 0.0
    %1684 = vmatprep.subr.mxu0 0.0
    %1685 = vmatpush1.xpose.msra.mxu0 0.0
    %1686 = vmatprep.subr.mxu0 0.0
    %1687 = vmatpush1.xpose.msra.mxu0 %v1656
    %1688 = vmatprep.subr.mxu0 0.0
    %1689 = vmatpush1.xpose.msra.mxu0 %v1654
    %1690 = vmatprep.subr.mxu0 0.0
    %1691 = vmatpush2.xpose.msra.mxu0 0.0
    %1692 = vmatprep.subr.mxu0 0.0
    %1693 = vmatpush2.xpose.msra.mxu0 0.0
    %1694 = vmatprep.subr.mxu0 0.0
    %1695 = vmatpush2.xpose.msra.mxu0 0.0
    %1696 = vmatprep.subr.mxu0 0.0
    %1697 = vmatpush2.xpose.msra.mxu0 0.0
    %1698 = vmatprep.subr.mxu0 0.0
    %1699 = vmatpush2.xpose.msra.mxu0 0.0
    %1700 = vmatprep.subr.mxu0 0.0
    %1701 = vmatpush2.xpose.msra.mxu0 0.0
    %1702 = vmatprep.subr.mxu0 0.0
    %1703 = vmatpush2.xpose.msra.mxu0 0.0
    %1704 = vmatprep.subr.mxu0 0.0
    %1705 = vmatpush2.xpose.msra.mxu0 0.0
    %1706 = vmatprep.subr.mxu0 0.0
    %1707 = vmatpush2.xpose.msra.mxu0 0.0
    %1708 = vmatprep.subr.mxu0 0.0
    %1709 = vmatpush2.xpose.msra.mxu0 0.0
    %1710 = vmatprep.subr.mxu0 0.0
    %1711 = vmatpush2.xpose.msra.mxu0 0.0
    %1712 = vmatprep.subr.mxu0 0.0
    %1713 = vmatpush2.xpose.msra.mxu0 0.0
    %1714 = vmatprep.subr.mxu0 0.0
    %1715 = vmatpush2.xpose.msra.mxu0 0.0
    %1716 = vmatprep.subr.mxu0 0.0
    %1717 = vmatpush2.xpose.msra.mxu0 0.0
    %1718 = vmatprep.subr.mxu0 0.0
    %1719 = vmatpush2.xpose.msra.mxu0 0.0
    %1720 = vmatprep.subr.mxu0 0.0
    %1721 = vmatpush2.xpose.msra.mxu0 0.0
    %1722 = vmatprep.mubr.f32.mxu0 0.0
    %1723 = vmatmul.mubr.f32.gmra.mxu0 %v1650
    %v1724 = vpop.f32.mrf.mxu0
    %v1725 = vadd.f32 %v47, %v1724
    %v1726 = vpop.f32.mrf.mxu0
    %1727 = vmatprep.mubr.f32.mxu0 0.0
    %1728 = vmatmul.mubr.f32.gmra.mxu0 %v1652
    %v1729 = vpop.f32.mrf.mxu0
    %v1730 = vadd.f32 %v48, %v1729
    %v1731 = vpop.f32.mrf.mxu0
    %1732 = vdwg.mxu0
    %v1733 = vsel %vm233, %v1725, -inf
    %1734 = vmax.xlane.f32.xlu0 %v1733
    %v1735 = vpop.xlane.xlu0 %1734
    %v1736 = vsel %vm233, %v1730, -inf
    %1737 = vmax.xlane.f32.xlu0 %v1736
    %v1738 = vpop.xlane.xlu0 %1737
    %v1739 = vsub.f32 %v1725, %v1735
    %v1740 = vsub.f32 %v1730, %v1738
    %v1741 = vmul.f32 %v1739, 1.442695
    %v1742 = vpow.pop %v1741
    %v1743 = vmul.f32 %v1740, 1.442695
    %v1744 = vpow.pop %v1743
    %v1745 = vsel %vm233, %v1742, 0.0
    %1746 = vadd.xlane.f32.xlu0 %v1745
    %v1747 = vpop.xlane.xlu0 %1746
    %v1748 = vsel %vm233, %v1744, 0.0
    %1749 = vadd.xlane.f32.xlu0 %v1748
    %v1750 = vpop.xlane.xlu0 %1749
    %v1751 = vrcp.pop %v1747
    %v1752 = vrcp.pop %v1750
    %v1753 = vmul.f32 %v1742, %v1751
    %v1754 = vmul.f32 %v1744, %v1752
    %1755 = vrot.lane.b32.xlu0 %v1436, 56
    %v1756 = vpop.permute.xlu0 %1755
    %1757 = vrot.lane.b32.xlu0 %v1441, 56
    %v1758 = vpop.permute.xlu0 %1757
    %v1762 = vsel %vm233, %v1753, 0
    %v1765 = vsel %vm233, %v1754, 0
    %1767 = vmatprep.subr.mxu0 0.0
    %1768 = vmatpush1.msra.mxu0 0.0
    %1769 = vmatprep.subr.mxu0 0.0
    %1770 = vmatpush1.msra.mxu0 0.0
    %1771 = vmatprep.subr.mxu0 0.0
    %1772 = vmatpush1.msra.mxu0 0.0
    %1773 = vmatprep.subr.mxu0 0.0
    %1774 = vmatpush1.msra.mxu0 0.0
    %1775 = vmatprep.subr.mxu0 0.0
    %1776 = vmatpush1.msra.mxu0 0.0
    %1777 = vmatprep.subr.mxu0 0.0
    %1778 = vmatpush1.msra.mxu0 0.0
    %1779 = vmatprep.subr.mxu0 0.0
    %1780 = vmatpush1.msra.mxu0 0.0
    %1781 = vmatprep.subr.mxu0 0.0
    %1782 = vmatpush1.msra.mxu0 0.0
    %1783 = vmatprep.subr.mxu0 0.0
    %1784 = vmatpush1.msra.mxu0 0.0
    %1785 = vmatprep.subr.mxu0 0.0
    %1786 = vmatpush1.msra.mxu0 0.0
    %1787 = vmatprep.subr.mxu0 0.0
    %1788 = vmatpush1.msra.mxu0 0.0
    %1789 = vmatprep.subr.mxu0 0.0
    %1790 = vmatpush1.msra.mxu0 0.0
    %1791 = vmatprep.subr.mxu0 0.0
    %1792 = vmatpush1.msra.mxu0 0.0
    %1793 = vmatprep.subr.mxu0 0.0
    %1794 = vmatpush1.msra.mxu0 0.0
    %1795 = vmatprep.subr.mxu0 0.0
    %1796 = vmatpush1.msra.mxu0 %v1758
    %1797 = vmatprep.subr.mxu0 0.0
    %1798 = vmatpush1.msra.mxu0 %v1756
    %1799 = vmatprep.subr.mxu0 0.0
    %1800 = vmatpush2.msra.mxu0 0.0
    %1801 = vmatprep.subr.mxu0 0.0
    %1802 = vmatpush2.msra.mxu0 0.0
    %1803 = vmatprep.subr.mxu0 0.0
    %1804 = vmatpush2.msra.mxu0 0.0
    %1805 = vmatprep.subr.mxu0 0.0
    %1806 = vmatpush2.msra.mxu0 0.0
    %1807 = vmatprep.subr.mxu0 0.0
    %1808 = vmatpush2.msra.mxu0 0.0
    %1809 = vmatprep.subr.mxu0 0.0
    %1810 = vmatpush2.msra.mxu0 0.0
    %1811 = vmatprep.subr.mxu0 0.0
    %1812 = vmatpush2.msra.mxu0 0.0
    %1813 = vmatprep.subr.mxu0 0.0
    %1814 = vmatpush2.msra.mxu0 0.0
    %1815 = vmatprep.subr.mxu0 0.0
    %1816 = vmatpush2.msra.mxu0 0.0
    %1817 = vmatprep.subr.mxu0 0.0
    %1818 = vmatpush2.msra.mxu0 0.0
    %1819 = vmatprep.subr.mxu0 0.0
    %1820 = vmatpush2.msra.mxu0 0.0
    %1821 = vmatprep.subr.mxu0 0.0
    %1822 = vmatpush2.msra.mxu0 0.0
    %1823 = vmatprep.subr.mxu0 0.0
    %1824 = vmatpush2.msra.mxu0 0.0
    %1825 = vmatprep.subr.mxu0 0.0
    %1826 = vmatpush2.msra.mxu0 0.0
    %1827 = vmatprep.subr.mxu0 0.0
    %1828 = vmatpush2.msra.mxu0 0.0
    %1829 = vmatprep.subr.mxu0 0.0
    %1830 = vmatpush2.msra.mxu0 0.0
    %1831 = vmatprep.mubr.f32.mxu0 0.0
    %1832 = vmatmul.mubr.f32.gmra.mxu0 %v1762
    %v1833 = vpop.f32.mrf.mxu0
    %v1834 = vadd.f32 0.0, %v1833
    %v1835 = vpop.f32.mrf.mxu0
    %1836 = vmatprep.mubr.f32.mxu0 0.0
    %1837 = vmatmul.mubr.f32.gmra.mxu0 %v1765
    %v1838 = vpop.f32.mrf.mxu0
    %v1839 = vadd.f32 0.0, %v1838
    %v1840 = vpop.f32.mrf.mxu0
    %1841 = vdwg.mxu0
    %1842 = vrot.lane.b32.xlu0 %v1436, 112
    %v1843 = vpop.permute.xlu0 %1842
    %1844 = vrot.lane.b32.xlu0 %v1441, 112
    %v1845 = vpop.permute.xlu0 %1844
    %1846 = vrot.lane.b32.xlu0 %v1436, 80
    %v1847 = vpop.permute.xlu0 %1846
    %1848 = vrot.lane.b32.xlu0 %v1441, 80
    %v1849 = vpop.permute.xlu0 %1848
    %v1850 = vsel %vm149, %v1843, 0
    %v1852 = vsel %vm149, %v1845, 0
    %v1854 = vsel %vm149, %v1847, 0
    %v1856 = vsel %vm149, %v1849, 0
    %1858 = vmatprep.subr.mxu0 0.0
    %1859 = vmatpush1.xpose.msra.mxu0 0.0
    %1860 = vmatprep.subr.mxu0 0.0
    %1861 = vmatpush1.xpose.msra.mxu0 0.0
    %1862 = vmatprep.subr.mxu0 0.0
    %1863 = vmatpush1.xpose.msra.mxu0 0.0
    %1864 = vmatprep.subr.mxu0 0.0
    %1865 = vmatpush1.xpose.msra.mxu0 0.0
    %1866 = vmatprep.subr.mxu0 0.0
    %1867 = vmatpush1.xpose.msra.mxu0 0.0
    %1868 = vmatprep.subr.mxu0 0.0
    %1869 = vmatpush1.xpose.msra.mxu0 0.0
    %1870 = vmatprep.subr.mxu0 0.0
    %1871 = vmatpush1.xpose.msra.mxu0 0.0
    %1872 = vmatprep.subr.mxu0 0.0
    %1873 = vmatpush1.xpose.msra.mxu0 0.0
    %1874 = vmatprep.subr.mxu0 0.0
    %1875 = vmatpush1.xpose.msra.mxu0 0.0
    %1876 = vmatprep.subr.mxu0 0.0
    %1877 = vmatpush1.xpose.msra.mxu0 0.0
    %1878 = vmatprep.subr.mxu0 0.0
    %1879 = vmatpush1.xpose.msra.mxu0 0.0
    %1880 = vmatprep.subr.mxu0 0.0
    %1881 = vmatpush1.xpose.msra.mxu0 0.0
    %1882 = vmatprep.subr.mxu0 0.0
    %1883 = vmatpush1.xpose.msra.mxu0 0.0
    %1884 = vmatprep.subr.mxu0 0.0
    %1885 = vmatpush1.xpose.msra.mxu0 0.0
    %1886 = vmatprep.subr.mxu0 0.0
    %1887 = vmatpush1.xpose.msra.mxu0 %v1856
    %1888 = vmatprep.subr.mxu0 0.0
    %1889 = vmatpush1.xpose.msra.mxu0 %v1854
    %1890 = vmatprep.subr.mxu0 0.0
    %1891 = vmatpush2.xpose.msra.mxu0 0.0
    %1892 = vmatprep.subr.mxu0 0.0
    %1893 = vmatpush2.xpose.msra.mxu0 0.0
    %1894 = vmatprep.subr.mxu0 0.0
    %1895 = vmatpush2.xpose.msra.mxu0 0.0
    %1896 = vmatprep.subr.mxu0 0.0
    %1897 = vmatpush2.xpose.msra.mxu0 0.0
    %1898 = vmatprep.subr.mxu0 0.0
    %1899 = vmatpush2.xpose.msra.mxu0 0.0
    %1900 = vmatprep.subr.mxu0 0.0
    %1901 = vmatpush2.xpose.msra.mxu0 0.0
    %1902 = vmatprep.subr.mxu0 0.0
    %1903 = vmatpush2.xpose.msra.mxu0 0.0
    %1904 = vmatprep.subr.mxu0 0.0
    %1905 = vmatpush2.xpose.msra.mxu0 0.0
    %1906 = vmatprep.subr.mxu0 0.0
    %1907 = vmatpush2.xpose.msra.mxu0 0.0
    %1908 = vmatprep.subr.mxu0 0.0
    %1909 = vmatpush2.xpose.msra.mxu0 0.0
    %1910 = vmatprep.subr.mxu0 0.0
    %1911 = vmatpush2.xpose.msra.mxu0 0.0
    %1912 = vmatprep.subr.mxu0 0.0
    %1913 = vmatpush2.xpose.msra.mxu0 0.0
    %1914 = vmatprep.subr.mxu0 0.0
    %1915 = vmatpush2.xpose.msra.mxu0 0.0
    %1916 = vmatprep.subr.mxu0 0.0
    %1917 = vmatpush2.xpose.msra.mxu0 0.0
    %1918 = vmatprep.subr.mxu0 0.0
    %1919 = vmatpush2.xpose.msra.mxu0 0.0
    %1920 = vmatprep.subr.mxu0 0.0
    %1921 = vmatpush2.xpose.msra.mxu0 0.0
    %1922 = vmatprep.mubr.f32.mxu0 0.0
    %1923 = vmatmul.mubr.f32.gmra.mxu0 %v1850
    %v1924 = vpop.f32.mrf.mxu0
    %v1925 = vadd.f32 %v47, %v1924
    %v1926 = vpop.f32.mrf.mxu0
    %1927 = vmatprep.mubr.f32.mxu0 0.0
    %1928 = vmatmul.mubr.f32.gmra.mxu0 %v1852
    %v1929 = vpop.f32.mrf.mxu0
    %v1930 = vadd.f32 %v48, %v1929
    %v1931 = vpop.f32.mrf.mxu0
    %1932 = vdwg.mxu0
    %v1933 = vsel %vm233, %v1925, -inf
    %1934 = vmax.xlane.f32.xlu0 %v1933
    %v1935 = vpop.xlane.xlu0 %1934
    %v1936 = vsel %vm233, %v1930, -inf
    %1937 = vmax.xlane.f32.xlu0 %v1936
    %v1938 = vpop.xlane.xlu0 %1937
    %v1939 = vsub.f32 %v1925, %v1935
    %v1940 = vsub.f32 %v1930, %v1938
    %v1941 = vmul.f32 %v1939, 1.442695
    %v1942 = vpow.pop %v1941
    %v1943 = vmul.f32 %v1940, 1.442695
    %v1944 = vpow.pop %v1943
    %v1945 = vsel %vm233, %v1942, 0.0
    %1946 = vadd.xlane.f32.xlu0 %v1945
    %v1947 = vpop.xlane.xlu0 %1946
    %v1948 = vsel %vm233, %v1944, 0.0
    %1949 = vadd.xlane.f32.xlu0 %v1948
    %v1950 = vpop.xlane.xlu0 %1949
    %v1951 = vrcp.pop %v1947
    %v1952 = vrcp.pop %v1950
    %v1953 = vmul.f32 %v1942, %v1951
    %v1954 = vmul.f32 %v1944, %v1952
    %1955 = vrot.lane.b32.xlu0 %v1436, 48
    %v1956 = vpop.permute.xlu0 %1955
    %1957 = vrot.lane.b32.xlu0 %v1441, 48
    %v1958 = vpop.permute.xlu0 %1957
    %v1962 = vsel %vm233, %v1953, 0
    %v1965 = vsel %vm233, %v1954, 0
    %1967 = vmatprep.subr.mxu0 0.0
    %1968 = vmatpush1.msra.mxu0 0.0
    %1969 = vmatprep.subr.mxu0 0.0
    %1970 = vmatpush1.msra.mxu0 0.0
    %1971 = vmatprep.subr.mxu0 0.0
    %1972 = vmatpush1.msra.mxu0 0.0
    %1973 = vmatprep.subr.mxu0 0.0
    %1974 = vmatpush1.msra.mxu0 0.0
    %1975 = vmatprep.subr.mxu0 0.0
    %1976 = vmatpush1.msra.mxu0 0.0
    %1977 = vmatprep.subr.mxu0 0.0
    %1978 = vmatpush1.msra.mxu0 0.0
    %1979 = vmatprep.subr.mxu0 0.0
    %1980 = vmatpush1.msra.mxu0 0.0
    %1981 = vmatprep.subr.mxu0 0.0
    %1982 = vmatpush1.msra.mxu0 0.0
    %1983 = vmatprep.subr.mxu0 0.0
    %1984 = vmatpush1.msra.mxu0 0.0
    %1985 = vmatprep.subr.mxu0 0.0
    %1986 = vmatpush1.msra.mxu0 0.0
    %1987 = vmatprep.subr.mxu0 0.0
    %1988 = vmatpush1.msra.mxu0 0.0
    %1989 = vmatprep.subr.mxu0 0.0
    %1990 = vmatpush1.msra.mxu0 0.0
    %1991 = vmatprep.subr.mxu0 0.0
    %1992 = vmatpush1.msra.mxu0 0.0
    %1993 = vmatprep.subr.mxu0 0.0
    %1994 = vmatpush1.msra.mxu0 0.0
    %1995 = vmatprep.subr.mxu0 0.0
    %1996 = vmatpush1.msra.mxu0 %v1958
    %1997 = vmatprep.subr.mxu0 0.0
    %1998 = vmatpush1.msra.mxu0 %v1956
    %1999 = vmatprep.subr.mxu0 0.0
    %2000 = vmatpush2.msra.mxu0 0.0
    %2001 = vmatprep.subr.mxu0 0.0
    %2002 = vmatpush2.msra.mxu0 0.0
    %2003 = vmatprep.subr.mxu0 0.0
    %2004 = vmatpush2.msra.mxu0 0.0
    %2005 = vmatprep.subr.mxu0 0.0
    %2006 = vmatpush2.msra.mxu0 0.0
    %2007 = vmatprep.subr.mxu0 0.0
    %2008 = vmatpush2.msra.mxu0 0.0
    %2009 = vmatprep.subr.mxu0 0.0
    %2010 = vmatpush2.msra.mxu0 0.0
    %2011 = vmatprep.subr.mxu0 0.0
    %2012 = vmatpush2.msra.mxu0 0.0
    %2013 = vmatprep.subr.mxu0 0.0
    %2014 = vmatpush2.msra.mxu0 0.0
    %2015 = vmatprep.subr.mxu0 0.0
    %2016 = vmatpush2.msra.mxu0 0.0
    %2017 = vmatprep.subr.mxu0 0.0
    %2018 = vmatpush2.msra.mxu0 0.0
    %2019 = vmatprep.subr.mxu0 0.0
    %2020 = vmatpush2.msra.mxu0 0.0
    %2021 = vmatprep.subr.mxu0 0.0
    %2022 = vmatpush2.msra.mxu0 0.0
    %2023 = vmatprep.subr.mxu0 0.0
    %2024 = vmatpush2.msra.mxu0 0.0
    %2025 = vmatprep.subr.mxu0 0.0
    %2026 = vmatpush2.msra.mxu0 0.0
    %2027 = vmatprep.subr.mxu0 0.0
    %2028 = vmatpush2.msra.mxu0 0.0
    %2029 = vmatprep.subr.mxu0 0.0
    %2030 = vmatpush2.msra.mxu0 0.0
    %2031 = vmatprep.mubr.f32.mxu0 0.0
    %2032 = vmatmul.mubr.f32.gmra.mxu0 %v1962
    %v2033 = vpop.f32.mrf.mxu0
    %v2034 = vadd.f32 0.0, %v2033
    %v2035 = vpop.f32.mrf.mxu0
    %2036 = vmatprep.mubr.f32.mxu0 0.0
    %2037 = vmatmul.mubr.f32.gmra.mxu0 %v1965
    %v2038 = vpop.f32.mrf.mxu0
    %v2039 = vadd.f32 0.0, %v2038
    %v2040 = vpop.f32.mrf.mxu0
    %2041 = vdwg.mxu0
    %2042 = vrot.lane.b32.xlu0 %v1436, 104
    %v2043 = vpop.permute.xlu0 %2042
    %2044 = vrot.lane.b32.xlu0 %v1441, 104
    %v2045 = vpop.permute.xlu0 %2044
    %2046 = vrot.lane.b32.xlu0 %v1436, 72
    %v2047 = vpop.permute.xlu0 %2046
    %2048 = vrot.lane.b32.xlu0 %v1441, 72
    %v2049 = vpop.permute.xlu0 %2048
    %v2050 = vsel %vm149, %v2043, 0
    %v2052 = vsel %vm149, %v2045, 0
    %v2054 = vsel %vm149, %v2047, 0
    %v2056 = vsel %vm149, %v2049, 0
    %2058 = vmatprep.subr.mxu0 0.0
    %2059 = vmatpush1.xpose.msra.mxu0 0.0
    %2060 = vmatprep.subr.mxu0 0.0
    %2061 = vmatpush1.xpose.msra.mxu0 0.0
    %2062 = vmatprep.subr.mxu0 0.0
    %2063 = vmatpush1.xpose.msra.mxu0 0.0
    %2064 = vmatprep.subr.mxu0 0.0
    %2065 = vmatpush1.xpose.msra.mxu0 0.0
    %2066 = vmatprep.subr.mxu0 0.0
    %2067 = vmatpush1.xpose.msra.mxu0 0.0
    %2068 = vmatprep.subr.mxu0 0.0
    %2069 = vmatpush1.xpose.msra.mxu0 0.0
    %2070 = vmatprep.subr.mxu0 0.0
    %2071 = vmatpush1.xpose.msra.mxu0 0.0
    %2072 = vmatprep.subr.mxu0 0.0
    %2073 = vmatpush1.xpose.msra.mxu0 0.0
    %2074 = vmatprep.subr.mxu0 0.0
    %2075 = vmatpush1.xpose.msra.mxu0 0.0
    %2076 = vmatprep.subr.mxu0 0.0
    %2077 = vmatpush1.xpose.msra.mxu0 0.0
    %2078 = vmatprep.subr.mxu0 0.0
    %2079 = vmatpush1.xpose.msra.mxu0 0.0
    %2080 = vmatprep.subr.mxu0 0.0
    %2081 = vmatpush1.xpose.msra.mxu0 0.0
    %2082 = vmatprep.subr.mxu0 0.0
    %2083 = vmatpush1.xpose.msra.mxu0 0.0
    %2084 = vmatprep.subr.mxu0 0.0
    %2085 = vmatpush1.xpose.msra.mxu0 0.0
    %2086 = vmatprep.subr.mxu0 0.0
    %2087 = vmatpush1.xpose.msra.mxu0 %v2056
    %2088 = vmatprep.subr.mxu0 0.0
    %2089 = vmatpush1.xpose.msra.mxu0 %v2054
    %2090 = vmatprep.subr.mxu0 0.0
    %2091 = vmatpush2.xpose.msra.mxu0 0.0
    %2092 = vmatprep.subr.mxu0 0.0
    %2093 = vmatpush2.xpose.msra.mxu0 0.0
    %2094 = vmatprep.subr.mxu0 0.0
    %2095 = vmatpush2.xpose.msra.mxu0 0.0
    %2096 = vmatprep.subr.mxu0 0.0
    %2097 = vmatpush2.xpose.msra.mxu0 0.0
    %2098 = vmatprep.subr.mxu0 0.0
    %2099 = vmatpush2.xpose.msra.mxu0 0.0
    %2100 = vmatprep.subr.mxu0 0.0
    %2101 = vmatpush2.xpose.msra.mxu0 0.0
    %2102 = vmatprep.subr.mxu0 0.0
    %2103 = vmatpush2.xpose.msra.mxu0 0.0
    %2104 = vmatprep.subr.mxu0 0.0
    %2105 = vmatpush2.xpose.msra.mxu0 0.0
    %2106 = vmatprep.subr.mxu0 0.0
    %2107 = vmatpush2.xpose.msra.mxu0 0.0
    %2108 = vmatprep.subr.mxu0 0.0
    %2109 = vmatpush2.xpose.msra.mxu0 0.0
    %2110 = vmatprep.subr.mxu0 0.0
    %2111 = vmatpush2.xpose.msra.mxu0 0.0
    %2112 = vmatprep.subr.mxu0 0.0
    %2113 = vmatpush2.xpose.msra.mxu0 0.0
    %2114 = vmatprep.subr.mxu0 0.0
    %2115 = vmatpush2.xpose.msra.mxu0 0.0
    %2116 = vmatprep.subr.mxu0 0.0
    %2117 = vmatpush2.xpose.msra.mxu0 0.0
    %2118 = vmatprep.subr.mxu0 0.0
    %2119 = vmatpush2.xpose.msra.mxu0 0.0
    %2120 = vmatprep.subr.mxu0 0.0
    %2121 = vmatpush2.xpose.msra.mxu0 0.0
    %2122 = vmatprep.mubr.f32.mxu0 0.0
    %2123 = vmatmul.mubr.f32.gmra.mxu0 %v2050
    %v2124 = vpop.f32.mrf.mxu0
    %v2125 = vadd.f32 %v47, %v2124
    %v2126 = vpop.f32.mrf.mxu0
    %2127 = vmatprep.mubr.f32.mxu0 0.0
    %2128 = vmatmul.mubr.f32.gmra.mxu0 %v2052
    %v2129 = vpop.f32.mrf.mxu0
    %v2130 = vadd.f32 %v48, %v2129
    %v2131 = vpop.f32.mrf.mxu0
    %2132 = vdwg.mxu0
    %v2133 = vsel %vm233, %v2125, -inf
    %2134 = vmax.xlane.f32.xlu0 %v2133
    %v2135 = vpop.xlane.xlu0 %2134
    %v2136 = vsel %vm233, %v2130, -inf
    %2137 = vmax.xlane.f32.xlu0 %v2136
    %v2138 = vpop.xlane.xlu0 %2137
    %v2139 = vsub.f32 %v2125, %v2135
    %v2140 = vsub.f32 %v2130, %v2138
    %v2141 = vmul.f32 %v2139, 1.442695
    %v2142 = vpow.pop %v2141
    %v2143 = vmul.f32 %v2140, 1.442695
    %v2144 = vpow.pop %v2143
    %v2145 = vsel %vm233, %v2142, 0.0
    %2146 = vadd.xlane.f32.xlu0 %v2145
    %v2147 = vpop.xlane.xlu0 %2146
    %v2148 = vsel %vm233, %v2144, 0.0
    %2149 = vadd.xlane.f32.xlu0 %v2148
    %v2150 = vpop.xlane.xlu0 %2149
    %v2151 = vrcp.pop %v2147
    %v2152 = vrcp.pop %v2150
    %v2153 = vmul.f32 %v2142, %v2151
    %v2154 = vmul.f32 %v2144, %v2152
    %2155 = vrot.lane.b32.xlu0 %v1436, 40
    %v2156 = vpop.permute.xlu0 %2155
    %2157 = vrot.lane.b32.xlu0 %v1441, 40
    %v2158 = vpop.permute.xlu0 %2157
    %v2162 = vsel %vm233, %v2153, 0
    %v2165 = vsel %vm233, %v2154, 0
    %2167 = vmatprep.subr.mxu0 0.0
    %2168 = vmatpush1.msra.mxu0 0.0
    %2169 = vmatprep.subr.mxu0 0.0
    %2170 = vmatpush1.msra.mxu0 0.0
    %2171 = vmatprep.subr.mxu0 0.0
    %2172 = vmatpush1.msra.mxu0 0.0
    %2173 = vmatprep.subr.mxu0 0.0
    %2174 = vmatpush1.msra.mxu0 0.0
    %2175 = vmatprep.subr.mxu0 0.0
    %2176 = vmatpush1.msra.mxu0 0.0
    %2177 = vmatprep.subr.mxu0 0.0
    %2178 = vmatpush1.msra.mxu0 0.0
    %2179 = vmatprep.subr.mxu0 0.0
    %2180 = vmatpush1.msra.mxu0 0.0
    %2181 = vmatprep.subr.mxu0 0.0
    %2182 = vmatpush1.msra.mxu0 0.0
    %2183 = vmatprep.subr.mxu0 0.0
    %2184 = vmatpush1.msra.mxu0 0.0
    %2185 = vmatprep.subr.mxu0 0.0
    %2186 = vmatpush1.msra.mxu0 0.0
    %2187 = vmatprep.subr.mxu0 0.0
    %2188 = vmatpush1.msra.mxu0 0.0
    %2189 = vmatprep.subr.mxu0 0.0
    %2190 = vmatpush1.msra.mxu0 0.0
    %2191 = vmatprep.subr.mxu0 0.0
    %2192 = vmatpush1.msra.mxu0 0.0
    %2193 = vmatprep.subr.mxu0 0.0
    %2194 = vmatpush1.msra.mxu0 0.0
    %2195 = vmatprep.subr.mxu0 0.0
    %2196 = vmatpush1.msra.mxu0 %v2158
    %2197 = vmatprep.subr.mxu0 0.0
    %2198 = vmatpush1.msra.mxu0 %v2156
    %2199 = vmatprep.subr.mxu0 0.0
    %2200 = vmatpush2.msra.mxu0 0.0
    %2201 = vmatprep.subr.mxu0 0.0
    %2202 = vmatpush2.msra.mxu0 0.0
    %2203 = vmatprep.subr.mxu0 0.0
    %2204 = vmatpush2.msra.mxu0 0.0
    %2205 = vmatprep.subr.mxu0 0.0
    %2206 = vmatpush2.msra.mxu0 0.0
    %2207 = vmatprep.subr.mxu0 0.0
    %2208 = vmatpush2.msra.mxu0 0.0
    %2209 = vmatprep.subr.mxu0 0.0
    %2210 = vmatpush2.msra.mxu0 0.0
    %2211 = vmatprep.subr.mxu0 0.0
    %2212 = vmatpush2.msra.mxu0 0.0
    %2213 = vmatprep.subr.mxu0 0.0
    %2214 = vmatpush2.msra.mxu0 0.0
    %2215 = vmatprep.subr.mxu0 0.0
    %2216 = vmatpush2.msra.mxu0 0.0
    %2217 = vmatprep.subr.mxu0 0.0
    %2218 = vmatpush2.msra.mxu0 0.0
    %2219 = vmatprep.subr.mxu0 0.0
    %2220 = vmatpush2.msra.mxu0 0.0
    %2221 = vmatprep.subr.mxu0 0.0
    %2222 = vmatpush2.msra.mxu0 0.0
    %2223 = vmatprep.subr.mxu0 0.0
    %2224 = vmatpush2.msra.mxu0 0.0
    %2225 = vmatprep.subr.mxu0 0.0
    %2226 = vmatpush2.msra.mxu0 0.0
    %2227 = vmatprep.subr.mxu0 0.0
    %2228 = vmatpush2.msra.mxu0 0.0
    %2229 = vmatprep.subr.mxu0 0.0
    %2230 = vmatpush2.msra.mxu0 0.0
    %2231 = vmatprep.mubr.f32.mxu0 0.0
    %2232 = vmatmul.mubr.f32.gmra.mxu0 %v2162
    %v2233 = vpop.f32.mrf.mxu0
    %v2234 = vadd.f32 0.0, %v2233
    %v2235 = vpop.f32.mrf.mxu0
    %2236 = vmatprep.mubr.f32.mxu0 0.0
    %2237 = vmatmul.mubr.f32.gmra.mxu0 %v2165
    %v2238 = vpop.f32.mrf.mxu0
    %v2239 = vadd.f32 0.0, %v2238
    %v2240 = vpop.f32.mrf.mxu0
    %2241 = vdwg.mxu0
    %2244 = vrot.lane.b32.xlu0 %v1834, 8
    %v2245 = vpop.permute.xlu0 %2244
    %2246 = vrot.lane.b32.xlu0 %v1839, 8
    %v2247 = vpop.permute.xlu0 %2246
    %2252 = vrot.lane.b32.xlu0 %v2034, 16
    %v2253 = vpop.permute.xlu0 %2252
    %2254 = vrot.lane.b32.xlu0 %v2039, 16
    %v2255 = vpop.permute.xlu0 %2254
    %2260 = vrot.lane.b32.xlu0 %v2234, 24
    %v2261 = vpop.permute.xlu0 %2260
    %2262 = vrot.lane.b32.xlu0 %v2239, 24
    %v2263 = vpop.permute.xlu0 %2262
    %v2266 = vsel %vm149, %v1634, %v2245
    %v2267 = vsel %vm149, %v1639, %v2247
    %v2268 = vsel %vm233, %v2266, %v2253
    %v2269 = vsel %vm233, %v2267, %v2255
    %v2270 = vsel %vm971, %v2268, %v2261
    %v2271 = vsel %vm971, %v2269, %v2263
    %s2272 = scalar_lea.vmem %s7, 32
    %v2273 = vld [vmem:[%s2272] sm:$0xff]
    %v2274 = vld [vmem:[%s2272 + $0x8] sm:$0xff]
    %v2275 = vld [vmem:[%s2272 + $0x10] sm:$0xff]
    %v2276 = vld [vmem:[%s2272 + $0x18] sm:$0xff]
    %v2277 = vlaneseq
    %v2278 = vshrl.u32 %v2277, 7
    %v2279 = vsub.s32 0, %v2278
    %v2280 = vrot.slane %v1349, %v2279
    %v2282 = vsel %vm61, %v2270, 0
    %v2285 = vsel %vm61, %v2271, 0
    %2287 = vmatprep.subr.mxu0 0.0
    %2288 = vmatpush1.msra.mxu0 0.0
    %2289 = vmatprep.subr.mxu0 0.0
    %2290 = vmatpush1.msra.mxu0 0.0
    %2291 = vmatprep.subr.mxu0 0.0
    %2292 = vmatpush1.msra.mxu0 0.0
    %2293 = vmatprep.subr.mxu0 0.0
    %2294 = vmatpush1.msra.mxu0 0.0
    %2295 = vmatprep.subr.mxu0 0.0
    %2296 = vmatpush1.msra.mxu0 0.0
    %2297 = vmatprep.subr.mxu0 0.0
    %2298 = vmatpush1.msra.mxu0 0.0
    %2299 = vmatprep.subr.mxu0 0.0
    %2300 = vmatpush1.msra.mxu0 0.0
    %2301 = vmatprep.subr.mxu0 0.0
    %2302 = vmatpush1.msra.mxu0 0.0
    %2303 = vmatprep.subr.mxu0 0.0
    %2304 = vmatpush1.msra.mxu0 0.0
    %2305 = vmatprep.subr.mxu0 0.0
    %2306 = vmatpush1.msra.mxu0 0.0
    %2307 = vmatprep.subr.mxu0 0.0
    %2308 = vmatpush1.msra.mxu0 0.0
    %2309 = vmatprep.subr.mxu0 0.0
    %2310 = vmatpush1.msra.mxu0 0.0
    %2311 = vmatprep.subr.mxu0 0.0
    %2312 = vmatpush1.msra.mxu0 %v2276
    %2313 = vmatprep.subr.mxu0 0.0
    %2314 = vmatpush1.msra.mxu0 %v2275
    %2315 = vmatprep.subr.mxu0 0.0
    %2316 = vmatpush1.msra.mxu0 %v2274
    %2317 = vmatprep.subr.mxu0 0.0
    %2318 = vmatpush1.msra.mxu0 %v2273
    %2319 = vmatprep.subr.mxu0 0.0
    %2320 = vmatpush2.msra.mxu0 0.0
    %2321 = vmatprep.subr.mxu0 0.0
    %2322 = vmatpush2.msra.mxu0 0.0
    %2323 = vmatprep.subr.mxu0 0.0
    %2324 = vmatpush2.msra.mxu0 0.0
    %2325 = vmatprep.subr.mxu0 0.0
    %2326 = vmatpush2.msra.mxu0 0.0
    %2327 = vmatprep.subr.mxu0 0.0
    %2328 = vmatpush2.msra.mxu0 0.0
    %2329 = vmatprep.subr.mxu0 0.0
    %2330 = vmatpush2.msra.mxu0 0.0
    %2331 = vmatprep.subr.mxu0 0.0
    %2332 = vmatpush2.msra.mxu0 0.0
    %2333 = vmatprep.subr.mxu0 0.0
    %2334 = vmatpush2.msra.mxu0 0.0
    %2335 = vmatprep.subr.mxu0 0.0
    %2336 = vmatpush2.msra.mxu0 0.0
    %2337 = vmatprep.subr.mxu0 0.0
    %2338 = vmatpush2.msra.mxu0 0.0
    %2339 = vmatprep.subr.mxu0 0.0
    %2340 = vmatpush2.msra.mxu0 0.0
    %2341 = vmatprep.subr.mxu0 0.0
    %2342 = vmatpush2.msra.mxu0 0.0
    %2343 = vmatprep.subr.mxu0 0.0
    %2344 = vmatpush2.msra.mxu0 0.0
    %2345 = vmatprep.subr.mxu0 0.0
    %2346 = vmatpush2.msra.mxu0 0.0
    %2347 = vmatprep.subr.mxu0 0.0
    %2348 = vmatpush2.msra.mxu0 0.0
    %2349 = vmatprep.subr.mxu0 0.0
    %2350 = vmatpush2.msra.mxu0 0.0
    %2351 = vmatprep.mubr.f32.mxu0 0.0
    %2352 = vmatmul.mubr.f32.gmra.mxu0 %v2282
    %v2353 = vpop.f32.mrf.mxu0
    %v2354 = vadd.f32 %v2280, %v2353
    %v2355 = vpop.f32.mrf.mxu0
    %2356 = vmatprep.mubr.f32.mxu0 0.0
    %2357 = vmatmul.mubr.f32.gmra.mxu0 %v2285
    %v2358 = vpop.f32.mrf.mxu0
    %v2359 = vadd.f32 %v2280, %v2358
    %v2360 = vpop.f32.mrf.mxu0
    %2361 = vdwg.mxu0
    %v2362 = vadd.f32 %v1346, %v2354
    %v2363 = vadd.f32 %v1347, %v2359
    %v2364 = vsel %vm61, %v2362, 0.0
    %2365 = vadd.xlane.f32.xlu0 %v2364
    %v2366 = vpop.xlane.xlu0 %2365
    %v2367 = vsel %vm61, %v2363, 0.0
    %2368 = vadd.xlane.f32.xlu0 %v2367
    %v2369 = vpop.xlane.xlu0 %2368
    %v2370 = vmul.f32 %v2366, %v1071
    %v2371 = vmul.f32 %v2369, %v1071
    %v2372 = vsub.f32 %v2362, %v2370
    %v2373 = vsub.f32 %v2363, %v2371
    %v2374 = vmul.f32 %v2372, %v2372
    %v2375 = vmul.f32 %v2373, %v2373
    %v2376 = vsel %vm61, %v2374, 0.0
    %2377 = vadd.xlane.f32.xlu0 %v2376
    %v2378 = vpop.xlane.xlu0 %2377
    %v2379 = vsel %vm61, %v2375, 0.0
    %2380 = vadd.xlane.f32.xlu0 %v2379
    %v2381 = vpop.xlane.xlu0 %2380
    %v2382 = vmul.f32 %v2378, %v1071
    %v2383 = vmul.f32 %v2381, %v1071
    %v2384 = vadd.f32 %v2382, 1e-12
    %v2385 = vadd.f32 %v2383, 1e-12
    %v2386 = vrsqrt.pop %v2384
    %v2387 = vrsqrt.pop %v2385
    %v2388 = vmul.f32 %v2372, %v2386
    %v2389 = vmul.f32 %v2373, %v2387
    %v2390 = vlaneseq
    %v2391 = vshrl.u32 %v2390, 7
    %v2392 = vsub.s32 1, %v2391
    %v2393 = vrot.slane %v1349, %v2392
    %v2394 = vmul.f32 %v2388, %v2393
    %v2395 = vmul.f32 %v2389, %v2393
    %v2396 = vlaneseq
    %v2397 = vshrl.u32 %v2396, 7
    %v2398 = vsub.s32 2, %v2397
    %v2399 = vrot.slane %v1349, %v2398
    %v2400 = vadd.f32 %v2394, %v2399
    %v2401 = vadd.f32 %v2395, %v2399
    %s2402 = scalar_lea.vmem %s8, 32
    %v2403 = vld [vmem:[%s2402] sm:$0xff]
    %v2404 = vld [vmem:[%s2402 + $0x8] sm:$0xff]
    %v2405 = vld [vmem:[%s2402 + $0x10] sm:$0xff]
    %v2406 = vld [vmem:[%s2402 + $0x18] sm:$0xff]
    %s2407 = scalar_lea.vmem %s10, 1
    %v2408 = vld [vmem:[%s2407] sm:$0x1]
    %v2410 = vlaneseq
    %v2411 = vshrl.u32 %v2410, 7
    %v2412 = vsub.s32 0, %v2411
    %v2413 = vrot.slane %v2408, %v2412
    %v2416 = vsel %vm61, %v2400, 0
    %v2419 = vsel %vm61, %v2401, 0
    %2421 = vmatprep.subr.mxu0 0.0
    %2422 = vmatpush1.msra.mxu0 0.0
    %2423 = vmatprep.subr.mxu0 0.0
    %2424 = vmatpush1.msra.mxu0 0.0
    %2425 = vmatprep.subr.mxu0 0.0
    %2426 = vmatpush1.msra.mxu0 0.0
    %2427 = vmatprep.subr.mxu0 0.0
    %2428 = vmatpush1.msra.mxu0 0.0
    %2429 = vmatprep.subr.mxu0 0.0
    %2430 = vmatpush1.msra.mxu0 0.0
    %2431 = vmatprep.subr.mxu0 0.0
    %2432 = vmatpush1.msra.mxu0 0.0
    %2433 = vmatprep.subr.mxu0 0.0
    %2434 = vmatpush1.msra.mxu0 0.0
    %2435 = vmatprep.subr.mxu0 0.0
    %2436 = vmatpush1.msra.mxu0 0.0
    %2437 = vmatprep.subr.mxu0 0.0
    %2438 = vmatpush1.msra.mxu0 0.0
    %2439 = vmatprep.subr.mxu0 0.0
    %2440 = vmatpush1.msra.mxu0 0.0
    %2441 = vmatprep.subr.mxu0 0.0
    %2442 = vmatpush1.msra.mxu0 0.0
    %2443 = vmatprep.subr.mxu0 0.0
    %2444 = vmatpush1.msra.mxu0 0.0
    %2445 = vmatprep.subr.mxu0 0.0
    %2446 = vmatpush1.msra.mxu0 %v2406
    %2447 = vmatprep.subr.mxu0 0.0
    %2448 = vmatpush1.msra.mxu0 %v2405
    %2449 = vmatprep.subr.mxu0 0.0
    %2450 = vmatpush1.msra.mxu0 %v2404
    %2451 = vmatprep.subr.mxu0 0.0
    %2452 = vmatpush1.msra.mxu0 %v2403
    %2453 = vmatprep.subr.mxu0 0.0
    %2454 = vmatpush2.msra.mxu0 0.0
    %2455 = vmatprep.subr.mxu0 0.0
    %2456 = vmatpush2.msra.mxu0 0.0
    %2457 = vmatprep.subr.mxu0 0.0
    %2458 = vmatpush2.msra.mxu0 0.0
    %2459 = vmatprep.subr.mxu0 0.0
    %2460 = vmatpush2.msra.mxu0 0.0
    %2461 = vmatprep.subr.mxu0 0.0
    %2462 = vmatpush2.msra.mxu0 0.0
    %2463 = vmatprep.subr.mxu0 0.0
    %2464 = vmatpush2.msra.mxu0 0.0
    %2465 = vmatprep.subr.mxu0 0.0
    %2466 = vmatpush2.msra.mxu0 0.0
    %2467 = vmatprep.subr.mxu0 0.0
    %2468 = vmatpush2.msra.mxu0 0.0
    %2469 = vmatprep.subr.mxu0 0.0
    %2470 = vmatpush2.msra.mxu0 0.0
    %2471 = vmatprep.subr.mxu0 0.0
    %2472 = vmatpush2.msra.mxu0 0.0
    %2473 = vmatprep.subr.mxu0 0.0
    %2474 = vmatpush2.msra.mxu0 0.0
    %2475 = vmatprep.subr.mxu0 0.0
    %2476 = vmatpush2.msra.mxu0 0.0
    %2477 = vmatprep.subr.mxu0 0.0
    %2478 = vmatpush2.msra.mxu0 0.0
    %2479 = vmatprep.subr.mxu0 0.0
    %2480 = vmatpush2.msra.mxu0 0.0
    %2481 = vmatprep.subr.mxu0 0.0
    %2482 = vmatpush2.msra.mxu0 0.0
    %2483 = vmatprep.subr.mxu0 0.0
    %2484 = vmatpush2.msra.mxu0 0.0
    %2485 = vmatprep.mubr.f32.mxu0 0.0
    %2486 = vmatmul.mubr.f32.gmra.mxu0 %v2416
    %v2487 = vpop.f32.mrf.mxu0
    %v2488 = vadd.f32 %v2413, %v2487
    %v2489 = vpop.f32.mrf.mxu0
    %2490 = vmatprep.mubr.f32.mxu0 0.0
    %2491 = vmatmul.mubr.f32.gmra.mxu0 %v2419
    %v2492 = vpop.f32.mrf.mxu0
    %v2493 = vadd.f32 %v2413, %v2492
    %v2494 = vpop.f32.mrf.mxu0
    %2495 = vdwg.mxu0
    %v2496 = vmul.f32 %v2488, 0.5
    %v2497 = vmul.f32 %v2493, 0.5
    %v2498 = vmul.f32 %v2488, 0.044715
    %v2499 = vmul.f32 %v2493, 0.044715
    %v2500 = vmul.f32 %v2498, %v2488
    %v2501 = vmul.f32 %v2499, %v2493
    %v2502 = vmul.f32 %v2500, %v2488
    %v2503 = vmul.f32 %v2501, %v2493
    %v2504 = vadd.f32 %v2488, %v2502
    %v2505 = vadd.f32 %v2493, %v2503
    %v2506 = vmul.f32 %v2504, 0.7978846
    %v2507 = vmul.f32 %v2505, 0.7978846
    %v2508 = vtanh.pop %v2506
    %v2509 = vtanh.pop %v2507
    %v2510 = vadd.f32 %v2508, 1.0
    %v2511 = vadd.f32 %v2509, 1.0
    %v2512 = vmul.f32 %v2496, %v2510
    %v2513 = vmul.f32 %v2497, %v2511
    %s2514 = scalar_lea.vmem %s9, 64
    %v2515 = vld [vmem:[%s2514] sm:$0xff]
    %v2516 = vld [vmem:[%s2514 + $0x8] sm:$0xff]
    %v2517 = vld [vmem:[%s2514 + $0x10] sm:$0xff]
    %v2518 = vld [vmem:[%s2514 + $0x18] sm:$0xff]
    %v2519 = vld [vmem:[%s2514 + $0x20] sm:$0xff]
    %v2520 = vld [vmem:[%s2514 + $0x28] sm:$0xff]
    %v2521 = vld [vmem:[%s2514 + $0x30] sm:$0xff]
    %v2522 = vld [vmem:[%s2514 + $0x38] sm:$0xff]
    %v2523 = vlaneseq
    %v2524 = vshrl.u32 %v2523, 7
    %v2525 = vsub.s32 3, %v2524
    %v2526 = vrot.slane %v1349, %v2525
    %v2528 = vsel %vm1226, %v2512, 0
    %v2531 = vsel %vm1226, %v2513, 0
    %2533 = vmatprep.subr.mxu0 0.0
    %2534 = vmatpush1.msra.mxu0 0.0
    %2535 = vmatprep.subr.mxu0 0.0
    %2536 = vmatpush1.msra.mxu0 0.0
    %2537 = vmatprep.subr.mxu0 0.0
    %2538 = vmatpush1.msra.mxu0 0.0
    %2539 = vmatprep.subr.mxu0 0.0
    %2540 = vmatpush1.msra.mxu0 0.0
    %2541 = vmatprep.subr.mxu0 0.0
    %2542 = vmatpush1.msra.mxu0 0.0
    %2543 = vmatprep.subr.mxu0 0.0
    %2544 = vmatpush1.msra.mxu0 0.0
    %2545 = vmatprep.subr.mxu0 0.0
    %2546 = vmatpush1.msra.mxu0 0.0
    %2547 = vmatprep.subr.mxu0 0.0
    %2548 = vmatpush1.msra.mxu0 0.0
    %2549 = vmatprep.subr.mxu0 0.0
    %2550 = vmatpush1.msra.mxu0 %v2522
    %2551 = vmatprep.subr.mxu0 0.0
    %2552 = vmatpush1.msra.mxu0 %v2521
    %2553 = vmatprep.subr.mxu0 0.0
    %2554 = vmatpush1.msra.mxu0 %v2520
    %2555 = vmatprep.subr.mxu0 0.0
    %2556 = vmatpush1.msra.mxu0 %v2519
    %2557 = vmatprep.subr.mxu0 0.0
    %2558 = vmatpush1.msra.mxu0 %v2518
    %2559 = vmatprep.subr.mxu0 0.0
    %2560 = vmatpush1.msra.mxu0 %v2517
    %2561 = vmatprep.subr.mxu0 0.0
    %2562 = vmatpush1.msra.mxu0 %v2516
    %2563 = vmatprep.subr.mxu0 0.0
    %2564 = vmatpush1.msra.mxu0 %v2515
    %2565 = vmatprep.subr.mxu0 0.0
    %2566 = vmatpush2.msra.mxu0 0.0
    %2567 = vmatprep.subr.mxu0 0.0
    %2568 = vmatpush2.msra.mxu0 0.0
    %2569 = vmatprep.subr.mxu0 0.0
    %2570 = vmatpush2.msra.mxu0 0.0
    %2571 = vmatprep.subr.mxu0 0.0
    %2572 = vmatpush2.msra.mxu0 0.0
    %2573 = vmatprep.subr.mxu0 0.0
    %2574 = vmatpush2.msra.mxu0 0.0
    %2575 = vmatprep.subr.mxu0 0.0
    %2576 = vmatpush2.msra.mxu0 0.0
    %2577 = vmatprep.subr.mxu0 0.0
    %2578 = vmatpush2.msra.mxu0 0.0
    %2579 = vmatprep.subr.mxu0 0.0
    %2580 = vmatpush2.msra.mxu0 0.0
    %2581 = vmatprep.subr.mxu0 0.0
    %2582 = vmatpush2.msra.mxu0 0.0
    %2583 = vmatprep.subr.mxu0 0.0
    %2584 = vmatpush2.msra.mxu0 0.0
    %2585 = vmatprep.subr.mxu0 0.0
    %2586 = vmatpush2.msra.mxu0 0.0
    %2587 = vmatprep.subr.mxu0 0.0
    %2588 = vmatpush2.msra.mxu0 0.0
    %2589 = vmatprep.subr.mxu0 0.0
    %2590 = vmatpush2.msra.mxu0 0.0
    %2591 = vmatprep.subr.mxu0 0.0
    %2592 = vmatpush2.msra.mxu0 0.0
    %2593 = vmatprep.subr.mxu0 0.0
    %2594 = vmatpush2.msra.mxu0 0.0
    %2595 = vmatprep.subr.mxu0 0.0
    %2596 = vmatpush2.msra.mxu0 0.0
    %2597 = vmatprep.mubr.f32.mxu0 0.0
    %2598 = vmatmul.mubr.f32.gmra.mxu0 %v2528
    %v2599 = vpop.f32.mrf.mxu0
    %v2600 = vadd.f32 %v2526, %v2599
    %v2601 = vpop.f32.mrf.mxu0
    %2602 = vmatprep.mubr.f32.mxu0 0.0
    %2603 = vmatmul.mubr.f32.gmra.mxu0 %v2531
    %v2604 = vpop.f32.mrf.mxu0
    %v2605 = vadd.f32 %v2526, %v2604
    %v2606 = vpop.f32.mrf.mxu0
    %2607 = vdwg.mxu0
    %v2608 = vadd.f32 %v2400, %v2600
    %v2609 = vadd.f32 %v2401, %v2605
    %v2610 = vsel %vm61, %v2608, 0.0
    %2611 = vadd.xlane.f32.xlu0 %v2610
    %v2612 = vpop.xlane.xlu0 %2611
    %v2613 = vsel %vm61, %v2609, 0.0
    %2614 = vadd.xlane.f32.xlu0 %v2613
    %v2615 = vpop.xlane.xlu0 %2614
    %v2616 = vmul.f32 %v2612, %v1071
    %v2617 = vmul.f32 %v2615, %v1071
    %v2618 = vsub.f32 %v2608, %v2616
    %v2619 = vsub.f32 %v2609, %v2617
    %v2620 = vmul.f32 %v2618, %v2618
    %v2621 = vmul.f32 %v2619, %v2619
    %v2622 = vsel %vm61, %v2620, 0.0
    %2623 = vadd.xlane.f32.xlu0 %v2622
    %v2624 = vpop.xlane.xlu0 %2623
    %v2625 = vsel %vm61, %v2621, 0.0
    %2626 = vadd.xlane.f32.xlu0 %v2625
    %v2627 = vpop.xlane.xlu0 %2626
    %v2628 = vmul.f32 %v2624, %v1071
    %v2629 = vmul.f32 %v2627, %v1071
    %v2630 = vadd.f32 %v2628, 1e-12
    %v2631 = vadd.f32 %v2629, 1e-12
    %v2632 = vrsqrt.pop %v2630
    %v2633 = vrsqrt.pop %v2631
    %v2634 = vmul.f32 %v2618, %v2632
    %v2635 = vmul.f32 %v2619, %v2633
    %v2636 = vlaneseq
    %v2637 = vshrl.u32 %v2636, 7
    %v2638 = vsub.s32 4, %v2637
    %v2639 = vrot.slane %v1349, %v2638
    %v2640 = vmul.f32 %v2634, %v2639
    %v2641 = vmul.f32 %v2635, %v2639
    %v2642 = vlaneseq
    %v2643 = vshrl.u32 %v2642, 7
    %v2644 = vsub.s32 5, %v2643
    %v2645 = vrot.slane %v1349, %v2644
    %v2646 = vadd.f32 %v2640, %v2645
    %v2647 = vadd.f32 %v2641, %v2645
    %v2648 = vld [vmem:[%s2] sm:$0x3]
    %v2650 = vsel %vm233, %v2648, 0
    %2652 = vmatprep.subr.mxu0 0.0
    %2653 = vmatpush1.msra.mxu0 0.0
    %2654 = vmatprep.subr.mxu0 0.0
    %2655 = vmatpush1.msra.mxu0 0.0
    %2656 = vmatprep.subr.mxu0 0.0
    %2657 = vmatpush1.msra.mxu0 0.0
    %2658 = vmatprep.subr.mxu0 0.0
    %2659 = vmatpush1.msra.mxu0 0.0
    %2660 = vmatprep.subr.mxu0 0.0
    %2661 = vmatpush1.msra.mxu0 0.0
    %2662 = vmatprep.subr.mxu0 0.0
    %2663 = vmatpush1.msra.mxu0 0.0
    %2664 = vmatprep.subr.mxu0 0.0
    %2665 = vmatpush1.msra.mxu0 0.0
    %2666 = vmatprep.subr.mxu0 0.0
    %2667 = vmatpush1.msra.mxu0 0.0
    %2668 = vmatprep.subr.mxu0 0.0
    %2669 = vmatpush1.msra.mxu0 0.0
    %2670 = vmatprep.subr.mxu0 0.0
    %2671 = vmatpush1.msra.mxu0 0.0
    %2672 = vmatprep.subr.mxu0 0.0
    %2673 = vmatpush1.msra.mxu0 0.0
    %2674 = vmatprep.subr.mxu0 0.0
    %2675 = vmatpush1.msra.mxu0 0.0
    %2676 = vmatprep.subr.mxu0 0.0
    %2677 = vmatpush1.msra.mxu0 0.0
    %2678 = vmatprep.subr.mxu0 0.0
    %2679 = vmatpush1.msra.mxu0 0.0
    %2680 = vmatprep.subr.mxu0 0.0
    %2681 = vmatpush1.msra.mxu0 %v2647
    %2682 = vmatprep.subr.mxu0 0.0
    %2683 = vmatpush1.msra.mxu0 %v2646
    %2684 = vmatprep.subr.mxu0 0.0
    %2685 = vmatpush2.msra.mxu0 0.0
    %2686 = vmatprep.subr.mxu0 0.0
    %2687 = vmatpush2.msra.mxu0 0.0
    %2688 = vmatprep.subr.mxu0 0.0
    %2689 = vmatpush2.msra.mxu0 0.0
    %2690 = vmatprep.subr.mxu0 0.0
    %2691 = vmatpush2.msra.mxu0 0.0
    %2692 = vmatprep.subr.mxu0 0.0
    %2693 = vmatpush2.msra.mxu0 0.0
    %2694 = vmatprep.subr.mxu0 0.0
    %2695 = vmatpush2.msra.mxu0 0.0
    %2696 = vmatprep.subr.mxu0 0.0
    %2697 = vmatpush2.msra.mxu0 0.0
    %2698 = vmatprep.subr.mxu0 0.0
    %2699 = vmatpush2.msra.mxu0 0.0
    %2700 = vmatprep.subr.mxu0 0.0
    %2701 = vmatpush2.msra.mxu0 0.0
    %2702 = vmatprep.subr.mxu0 0.0
    %2703 = vmatpush2.msra.mxu0 0.0
    %2704 = vmatprep.subr.mxu0 0.0
    %2705 = vmatpush2.msra.mxu0 0.0
    %2706 = vmatprep.subr.mxu0 0.0
    %2707 = vmatpush2.msra.mxu0 0.0
    %2708 = vmatprep.subr.mxu0 0.0
    %2709 = vmatpush2.msra.mxu0 0.0
    %2710 = vmatprep.subr.mxu0 0.0
    %2711 = vmatpush2.msra.mxu0 0.0
    %2712 = vmatprep.subr.mxu0 0.0
    %2713 = vmatpush2.msra.mxu0 0.0
    %2714 = vmatprep.subr.mxu0 0.0
    %2715 = vmatpush2.msra.mxu0 0.0
    %2716 = vmatprep.mubr.f32.mxu0 0.0
    %2717 = vmatmul.mubr.f32.gmra.mxu0 %v2650
    %v2718 = vpop.f32.mrf.mxu0
    %v2719 = vadd.f32 0.0, %v2718
    %v2720 = vpop.f32.mrf.mxu0
    %2721 = vdwg.mxu0
    %v2722 = vld [vmem:[%s3] sm:$0xff]
    %v2723 = vld [vmem:[%s3 + $0x8] sm:$0xff]
    %v2724 = vld [vmem:[%s3 + $0x10] sm:$0xff]
    %v2725 = vld [vmem:[%s3 + $0x18] sm:$0xff]
    %v2726 = vld [vmem:[%s4] sm:$0x1]
    %v2728 = vlaneseq
    %v2729 = vshrl.u32 %v2728, 7
    %v2730 = vsub.s32 0, %v2729
    %v2731 = vrot.slane %v2726, %v2730
    %v2734 = vsel %vm61, %v2719, 0
    %2736 = vmatprep.subr.mxu0 0.0
    %2737 = vmatpush1.msra.mxu0 0.0
    %2738 = vmatprep.subr.mxu0 0.0
    %2739 = vmatpush1.msra.mxu0 0.0
    %2740 = vmatprep.subr.mxu0 0.0
    %2741 = vmatpush1.msra.mxu0 0.0
    %2742 = vmatprep.subr.mxu0 0.0
    %2743 = vmatpush1.msra.mxu0 0.0
    %2744 = vmatprep.subr.mxu0 0.0
    %2745 = vmatpush1.msra.mxu0 0.0
    %2746 = vmatprep.subr.mxu0 0.0
    %2747 = vmatpush1.msra.mxu0 0.0
    %2748 = vmatprep.subr.mxu0 0.0
    %2749 = vmatpush1.msra.mxu0 0.0
    %2750 = vmatprep.subr.mxu0 0.0
    %2751 = vmatpush1.msra.mxu0 0.0
    %2752 = vmatprep.subr.mxu0 0.0
    %2753 = vmatpush1.msra.mxu0 0.0
    %2754 = vmatprep.subr.mxu0 0.0
    %2755 = vmatpush1.msra.mxu0 0.0
    %2756 = vmatprep.subr.mxu0 0.0
    %2757 = vmatpush1.msra.mxu0 0.0
    %2758 = vmatprep.subr.mxu0 0.0
    %2759 = vmatpush1.msra.mxu0 0.0
    %2760 = vmatprep.subr.mxu0 0.0
    %2761 = vmatpush1.msra.mxu0 %v2725
    %2762 = vmatprep.subr.mxu0 0.0
    %2763 = vmatpush1.msra.mxu0 %v2724
    %2764 = vmatprep.subr.mxu0 0.0
    %2765 = vmatpush1.msra.mxu0 %v2723
    %2766 = vmatprep.subr.mxu0 0.0
    %2767 = vmatpush1.msra.mxu0 %v2722
    %2768 = vmatprep.subr.mxu0 0.0
    %2769 = vmatpush2.msra.mxu0 0.0
    %2770 = vmatprep.subr.mxu0 0.0
    %2771 = vmatpush2.msra.mxu0 0.0
    %2772 = vmatprep.subr.mxu0 0.0
    %2773 = vmatpush2.msra.mxu0 0.0
    %2774 = vmatprep.subr.mxu0 0.0
    %2775 = vmatpush2.msra.mxu0 0.0
    %2776 = vmatprep.subr.mxu0 0.0
    %2777 = vmatpush2.msra.mxu0 0.0
    %2778 = vmatprep.subr.mxu0 0.0
    %2779 = vmatpush2.msra.mxu0 0.0
    %2780 = vmatprep.subr.mxu0 0.0
    %2781 = vmatpush2.msra.mxu0 0.0
    %2782 = vmatprep.subr.mxu0 0.0
    %2783 = vmatpush2.msra.mxu0 0.0
    %2784 = vmatprep.subr.mxu0 0.0
    %2785 = vmatpush2.msra.mxu0 0.0
    %2786 = vmatprep.subr.mxu0 0.0
    %2787 = vmatpush2.msra.mxu0 0.0
    %2788 = vmatprep.subr.mxu0 0.0
    %2789 = vmatpush2.msra.mxu0 0.0
    %2790 = vmatprep.subr.mxu0 0.0
    %2791 = vmatpush2.msra.mxu0 0.0
    %2792 = vmatprep.subr.mxu0 0.0
    %2793 = vmatpush2.msra.mxu0 0.0
    %2794 = vmatprep.subr.mxu0 0.0
    %2795 = vmatpush2.msra.mxu0 0.0
    %2796 = vmatprep.subr.mxu0 0.0
    %2797 = vmatpush2.msra.mxu0 0.0
    %2798 = vmatprep.subr.mxu0 0.0
    %2799 = vmatpush2.msra.mxu0 0.0
    %2800 = vmatprep.mubr.f32.mxu0 0.0
    %2801 = vmatmul.mubr.f32.gmra.mxu0 %v2734
    %v2802 = vpop.f32.mrf.mxu0
    %v2803 = vadd.f32 %v2731, %v2802
    %v2804 = vpop.f32.mrf.mxu0
    %2805 = vdwg.mxu0
    %vm2806 = vcmask 17408
    %v2807 = vsel %vm2806, %v2803, -inf
    %2808 = vmax.xlane.f32.xlu0 %v2807
    %v2809 = vpop.xlane.xlu0 %2808
    %v2810 = vsub.f32 %v2803, %v2809
    %v2811 = vmul.f32 %v2810, 1.442695
    %v2812 = vpow.pop %v2811
    %v2813 = vsel %vm2806, %v2812, 0.0
    %2814 = vadd.xlane.f32.xlu0 %v2813
    %v2815 = vpop.xlane.xlu0 %2814
    %v2816 = vrcp.pop %v2815
    %v2817 = vmul.f32 %v2812, %v2816
    %2818 = vst.msk [vmem:[#allocation2] sm:$0x3] %vm2806, %v2817
    %vm2819 = vcmask 254976
    %2820 = vst.msk [vmem:[#allocation4] sm:$0x3] %vm2819, %v2719
    // Predicated region
    $region50: #{custom_protbert_forward.1} parent=1 // pred_check
      _
    $region51: #{custom_protbert_forward.1} parent=1 // pred_check_branch
      %2822 = sbr.rel (0) target = $region53
    $region52: #{custom_protbert_forward.1} parent=1 // pred_region
      %s2824 = ssub.s32 32, 32
      %2825 = vsyncadd [#allocation3], %s2824
      %s2827 = sshll.u32 [#allocation2], 4
      %s2828 = int_to_ptr.vmem [resolvable:$true] %s2827
      %2830 = dma.vmem_to_hbm [thread:$0]  %s2828, 32, %s12, [#allocation3]
    $region53: #{custom_protbert_forward.1} parent=1 // pred_fallthru
      _
    // Predicated region
    $region54: #{custom_protbert_forward.1} parent=1 // pred_check
      _
    $region55: #{custom_protbert_forward.1} parent=1 // pred_check_branch
      %2832 = sbr.rel (0) target = $region57
    $region56: #{custom_protbert_forward.1} parent=1 // pred_region
      %s2834 = ssub.s32 32, 32
      %2835 = vsyncadd [#allocation5], %s2834
      %s2837 = sshll.u32 [#allocation4], 4
      %s2838 = int_to_ptr.vmem [resolvable:$true] %s2837
      %2840 = dma.vmem_to_hbm [thread:$0]  %s2838, 32, %s13, [#allocation5]
    $region57: #{custom_protbert_forward.1} parent=1 // pred_fallthru
      _
    // Predicated region
    $region58: #{custom_protbert_forward.1} parent=1 // pred_check
      _
    $region59: #{custom_protbert_forward.1} parent=1 // pred_check_branch
      %2842 = sbr.rel (0) target = $region61
    $region60: #{custom_protbert_forward.1} parent=1 // pred_region
      %2843 = dma.done [#allocation3], 32
    $region61: #{custom_protbert_forward.1} parent=1 // pred_fallthru
      _
    // Predicated region
    $region62: #{custom_protbert_forward.1} parent=1 // pred_check
      _
    $region63: #{custom_protbert_forward.1} parent=1 // pred_check_branch
      %2845 = sbr.rel (0) target = $region65
    $region64: #{custom_protbert_forward.1} parent=1 // pred_region
      %2846 = dma.done [#allocation5], 32
    $region65: #{custom_protbert_forward.1} parent=1 // pred_fallthru
      _
    %2847 = vsyncpa [#allocation3], 1
    %2848 = vsyncpa [#allocation5], 1

</llo_original>
